<compile_context>
chip_gen: v5e
topology: v5e:2x2
jax: 0.10.0
libtpu: 0.0.40
codegen_flags: <defaults>
</compile_context>

<pallas_src>
import math
import functools

import numpy as np
import jax
import jax.numpy as jnp
from jax.experimental import pallas as pl
from jax.experimental.pallas import tpu as pltpu


# ----------------------------- The single fused kernel -----------------------------

def _fused_forward_kernel(x_ref, be_ref, wqkv_ref, bqkv_ref, wfc_ref, bfc_ref,
                          lng_ref, lnb_ref, mask_ref, wout_ref, bout_ref,
                          rmask_ref, rsum_ref, out_ref,
                          *, B, S, E, H, Dh, C, L, eps):
    M = B * S                      # number of (batch, position) rows
    scale = Dh ** (-0.5)

    # ---- positional encoding (dropout = identity); be broadcast over B in-kernel ----
    be = be_ref[...]                                     # [S, E]
    be_tiled = jnp.concatenate([be] * B, axis=0)         # [M, E]
    x = x_ref[...] * math.sqrt(E) + be_tiled             # [M, E]

    mask_add = mask_ref[...]                             # [M*H, M*H]  (0 / -1e30)
    bfc = bfc_ref[...]                                   # [1, E]
    lng = lng_ref[...]                                   # [1, E]
    lnb = lnb_ref[...]                                   # [1, E]

    # ---- encoder layers (shared weights; FeadForward.forward is a no-op) ----
    for _layer in range(L):
        # Per-head Q/K/V projections, produced directly in the head-major stacked layout
        # [H*M, Dh] (row p = h*M + m) via pre-sliced per-head weights -> no lane reshapes.
        def heads(t):
            return jnp.concatenate(
                [jnp.dot(x, wqkv_ref[t * H + h], preferred_element_type=jnp.float32)
                 + bqkv_ref[t * H + h]
                 for h in range(H)],
                axis=0)

        qs = heads(0)                                    # [H*M, Dh]
        ks = heads(1)
        vs = heads(2)

        # Flat masked attention: one scores matmul + one PV matmul on the MXU.
        s = jnp.einsum("pd,qd->pq", qs, ks,
                       preferred_element_type=jnp.float32) + mask_add      # [H*M, H*M]
        mx = jnp.max(s, axis=-1, keepdims=True)
        e = jnp.exp(s - mx)
        denom = jnp.sum(e, axis=-1, keepdims=True)
        # softmax first, then * scale (as in the torch code), folded into the normalizer.
        of = jnp.dot(e, vs, preferred_element_type=jnp.float32) * (scale / denom)  # [H*M, Dh]

        # Head merge fused with fc:  attn2d @ Wfc == sum_h of[h*M:(h+1)*M] @ Wfc_h.
        fc_pre = bfc
        for h in range(H):
            fc_pre = fc_pre + jnp.dot(of[h * M:(h + 1) * M, :], wfc_ref[h],
                                      preferred_element_type=jnp.float32)

        y = jnp.maximum(fc_pre, 0.0) + x                 # ReLU + residual
        mu = jnp.mean(y, axis=-1, keepdims=True)
        var = jnp.mean((y - mu) ** 2, axis=-1, keepdims=True)
        x = (y - mu) * jax.lax.rsqrt(var + eps) * lng + lnb

    # ---- classifier: logits == x.view(B, S*E) @ w_out + b_out ----
    # U[m] = x[m] @ w_out[(m % S)*E : (m % S + 1)*E]   (row-masked partial matmuls)
    # logits = Rsum @ U + b_out                          (constant row-sum matmul)
    u = jnp.zeros((M, C), jnp.float32)
    for s_idx in range(S):
        u = u + rmask_ref[s_idx] * jnp.dot(x, wout_ref[s_idx],
                                           preferred_element_type=jnp.float32)
    out_ref[...] = jnp.dot(rsum_ref[...], u,
                           preferred_element_type=jnp.float32) + bout_ref[...]


# ----------------------------- Model forward (one pallas_call) -----------------------------

def model_forward(ids, p, cfg):
    B, S = ids.shape
    E, H = cfg["embed"], cfg["num_head"]
    Dh = E // H
    C = cfg["num_classes"]
    L = cfg["num_encoder"]
    M = B * S
    GM = M * H

    # Embedding lookup is a data-dependent gather -> one XLA op feeding the kernel.
    x_emb = p["emb"][ids].reshape(M, E).astype(jnp.float32)

    # ---- trace-time weight re-packing (tiny, free vs. kernel launches) ----
    def per_head_w(w):                 # [E, E] -> [H, E, Dh]  (columns h*Dh:(h+1)*Dh)
        return w.reshape(E, H, Dh).transpose(1, 0, 2)

    def per_head_b(b):                 # [E] -> [H, 1, Dh]
        return b.reshape(H, 1, Dh)

    wqkv_h = jnp.concatenate([per_head_w(p["wq"]), per_head_w(p["wk"]),
                              per_head_w(p["wv"])], axis=0)          # [3H, E, Dh]
    bqkv_h = jnp.concatenate([per_head_b(p["bq"]), per_head_b(p["bk"]),
                              per_head_b(p["bv"])], axis=0)          # [3H, 1, Dh]
    wfc_h = p["wfc"].reshape(H, Dh, E)                                # [H, Dh, E]
    wout3 = p["w_out"].reshape(S, E, C)                               # [S, E, C]

    # ---- static (config-only) constants: attention group mask + classifier masks ----
    pidx = np.arange(GM)
    grp = ((pidx % M) * H + pidx // M) // S          # raw-view group of stacked row p = h*M+m
    mask_add = np.where(grp[:, None] == grp[None, :], 0.0, -1e30).astype(np.float32)
    midx = np.arange(M)
    rmask = (midx[None, :] % S == np.arange(S)[:, None]).astype(np.float32)[:, :, None]  # [S,M,1]
    rsum = (midx[None, :] // S == np.arange(B)[:, None]).astype(np.float32)              # [B,M]

    kernel = functools.partial(_fused_forward_kernel,
                               B=B, S=S, E=E, H=H, Dh=Dh, C=C, L=L, eps=1e-5)

    def full(shape):
        return pl.BlockSpec(shape, lambda i, _s=shape: (0,) * len(_s))

    in_arrays = [
        x_emb,                                  # [M, E]
        p["be"],                                # [S, E]
        wqkv_h,                                 # [3H, E, Dh]
        bqkv_h,                                 # [3H, 1, Dh]
        wfc_h,                                  # [H, Dh, E]
        p["bfc"].reshape(1, E),
        p["ln_g"].reshape(1, E),
        p["ln_b"].reshape(1, E),
        jnp.asarray(mask_add),                  # [GM, GM]
        wout3,                                  # [S, E, C]
        p["b_out"].reshape(1, C),
        jnp.asarray(rmask),                     # [S, M, 1]
        jnp.asarray(rsum),                      # [B, M]
    ]

    return pl.pallas_call(
        kernel,
        out_shape=jax.ShapeDtypeStruct((B, C), jnp.float32),
        grid=(1,),
        in_specs=[full(tuple(a.shape)) for a in in_arrays],
        out_specs=full((B, C)),
        compiler_params=pltpu.CompilerParams(dimension_semantics=("arbitrary",)),
    )(*in_arrays)


# ----------------------------- Pure-JAX reference -----------------------------

def reference_forward(ids, p, cfg):
    B, S = ids.shape
    E, H = cfg["embed"], cfg["num_head"]
    Dh = E // H
    x = p["emb"][ids]
    x = x * math.sqrt(E) + p["be"][None]
    for _ in range(cfg["num_encoder"]):
        x2 = x.reshape(B * S, E)
        q = (x2 @ p["wq"] + p["bq"]).reshape(B * H, S, Dh)
        k = (x2 @ p["wk"] + p["bk"]).reshape(B * H, S, Dh)
        v = (x2 @ p["wv"] + p["bv"]).reshape(B * H, S, Dh)
        att = jax.nn.softmax(jnp.einsum("gsd,gtd->gst", q, k), axis=-1)
        o = jnp.einsum("gst,gtd->gsd", att * (Dh ** -0.5), v).reshape(B * S, E)
        h = jnp.maximum(o @ p["wfc"] + p["bfc"], 0.0) + x2
        mu = h.mean(-1, keepdims=True)
        var = ((h - mu) ** 2).mean(-1, keepdims=True)
        x = (((h - mu) / jnp.sqrt(var + 1e-5)) * p["ln_g"] + p["ln_b"]).reshape(B, S, E)
    return x.reshape(B, S * E) @ p["w_out"] + p["b_out"]


# ----------------------------- Setup & run -----------------------------

def make_positional_table(S, E):
    pos = jnp.arange(S, dtype=jnp.float32)[:, None]
    i = jnp.arange(E, dtype=jnp.float32)[None, :]
    ang = pos / jnp.power(10000.0, 2.0 * i / E)     # note: 2*i/E for every i (as in reference)
    even = (jnp.arange(E)[None, :] % 2) == 0
    return jnp.where(even, jnp.sin(ang), jnp.cos(ang)).astype(jnp.float32)


if __name__ == "__main__":
    cfg = dict(vocab=50, sequence_length=8, embed=32, num_head=4,
               batch_size=2, num_encoder=2, num_classes=5,
               hidden=64, last_hidden=32)   # hidden/last_hidden unused: FeadForward is a no-op
    V, S, E, C = cfg["vocab"], cfg["sequence_length"], cfg["embed"], cfg["num_classes"]

    key = jax.random.PRNGKey(0)
    ks = jax.random.split(key, 16)

    def rnd(k, shape, scale=0.1):
        return (jax.random.normal(k, shape, jnp.float32) * scale).astype(jnp.float32)

    params = {
        "emb":   rnd(ks[0], (V, E), 0.2),
        "be":    make_positional_table(S, E),
        "wq":    rnd(ks[1], (E, E)),  "bq": rnd(ks[2], (E,)),
        "wk":    rnd(ks[3], (E, E)),  "bk": rnd(ks[4], (E,)),
        "wv":    rnd(ks[5], (E, E)),  "bv": rnd(ks[6], (E,)),
        "wfc":   rnd(ks[7], (E, E)),  "bfc": rnd(ks[8], (E,)),
        "ln_g":  1.0 + rnd(ks[9], (E,), 0.05),
        "ln_b":  rnd(ks[10], (E,), 0.05),
        "w_out": rnd(ks[11], (E * S, C)),
        "b_out": rnd(ks[12], (C,)),
    }

    ids = jax.random.randint(ks[13], (cfg["batch_size"], S), 0, V, dtype=jnp.int32)

    fwd = jax.jit(lambda ids_, p_: model_forward(ids_, p_, cfg))
    out = jax.block_until_ready(fwd(ids, params))

    ref = reference_forward(ids, params, cfg)
    assert out.shape == (cfg["batch_size"], C), out.shape
    assert jnp.allclose(out, ref, atol=1e-4, rtol=1e-4), (out, ref)

    print("KERNEL_OK")
</pallas_src>

<mosaic_0001>
module attributes {stable_mosaic.version = 11 : i64} {
  func.func @_fused_forward_kernel(%arg0: i32, %arg1: memref<16x32xf32, #tpu.memory_space<vmem>>, %arg2: memref<8x32xf32, #tpu.memory_space<vmem>>, %arg3: memref<12x32x8xf32, #tpu.memory_space<vmem>>, %arg4: memref<12x1x8xf32, #tpu.memory_space<vmem>>, %arg5: memref<4x8x32xf32, #tpu.memory_space<vmem>>, %arg6: memref<1x32xf32, #tpu.memory_space<vmem>>, %arg7: memref<1x32xf32, #tpu.memory_space<vmem>>, %arg8: memref<1x32xf32, #tpu.memory_space<vmem>>, %arg9: memref<64x64xf32, #tpu.memory_space<vmem>>, %arg10: memref<8x32x5xf32, #tpu.memory_space<vmem>>, %arg11: memref<1x5xf32, #tpu.memory_space<vmem>>, %arg12: memref<8x16x1xf32, #tpu.memory_space<vmem>>, %arg13: memref<2x16xf32, #tpu.memory_space<vmem>>, %arg14: memref<2x5xf32, #tpu.memory_space<vmem>>) attributes {dimension_semantics = [#tpu.dimension_semantics<arbitrary>], iteration_bounds = array<i64: 1>, scalar_prefetch = 0 : i64, scratch_operands = 0 : i64, tpu.core_type = #tpu.core_type<tc>, window_params = [{pipeline_mode = #tpu.pipeline_mode<synchronous>, transform_indices = @transform_0, window_bounds = array<i64: 16, 32>}, {pipeline_mode = #tpu.pipeline_mode<synchronous>, transform_indices = @transform_1, window_bounds = array<i64: 8, 32>}, {pipeline_mode = #tpu.pipeline_mode<synchronous>, transform_indices = @transform_2, window_bounds = array<i64: 12, 32, 8>}, {pipeline_mode = #tpu.pipeline_mode<synchronous>, transform_indices = @transform_3, window_bounds = array<i64: 12, 1, 8>}, {pipeline_mode = #tpu.pipeline_mode<synchronous>, transform_indices = @transform_4, window_bounds = array<i64: 4, 8, 32>}, {pipeline_mode = #tpu.pipeline_mode<synchronous>, transform_indices = @transform_5, window_bounds = array<i64: 1, 32>}, {pipeline_mode = #tpu.pipeline_mode<synchronous>, transform_indices = @transform_6, window_bounds = array<i64: 1, 32>}, {pipeline_mode = #tpu.pipeline_mode<synchronous>, transform_indices = @transform_7, window_bounds = array<i64: 1, 32>}, {pipeline_mode = #tpu.pipeline_mode<synchronous>, transform_indices = @transform_8, window_bounds = array<i64: 64, 64>}, {pipeline_mode = #tpu.pipeline_mode<synchronous>, transform_indices = @transform_9, window_bounds = array<i64: 8, 32, 5>}, {pipeline_mode = #tpu.pipeline_mode<synchronous>, transform_indices = @transform_10, window_bounds = array<i64: 1, 5>}, {pipeline_mode = #tpu.pipeline_mode<synchronous>, transform_indices = @transform_11, window_bounds = array<i64: 8, 16, 1>}, {pipeline_mode = #tpu.pipeline_mode<synchronous>, transform_indices = @transform_12, window_bounds = array<i64: 2, 16>}, {pipeline_mode = #tpu.pipeline_mode<synchronous>, transform_indices = @transform_13, window_bounds = array<i64: 2, 5>}]} {
    %c0 = arith.constant 0 : index
    %c0_0 = arith.constant 0 : index
    %0 = vector.load %arg2[%c0, %c0_0] : memref<8x32xf32, #tpu.memory_space<vmem>>, vector<8x32xf32>
    %1 = tpu.concatenate %0, %0 in 0 : vector<8x32xf32>, vector<8x32xf32> -> vector<16x32xf32>
    %c0_1 = arith.constant 0 : index
    %c0_2 = arith.constant 0 : index
    %2 = vector.load %arg1[%c0_1, %c0_2] : memref<16x32xf32, #tpu.memory_space<vmem>>, vector<16x32xf32>
    %cst = arith.constant 5.65685415 : f32
    %3 = vector.broadcast %cst : f32 to vector<16x32xf32>
    %4 = arith.mulf %2, %3 : vector<16x32xf32>
    %5 = arith.addf %4, %1 : vector<16x32xf32>
    %c0_3 = arith.constant 0 : index
    %c0_4 = arith.constant 0 : index
    %6 = vector.load %arg9[%c0_3, %c0_4] : memref<64x64xf32, #tpu.memory_space<vmem>>, vector<64x64xf32>
    %c0_5 = arith.constant 0 : index
    %c0_6 = arith.constant 0 : index
    %7 = vector.load %arg6[%c0_5, %c0_6] : memref<1x32xf32, #tpu.memory_space<vmem>>, vector<1x32xf32>
    %c0_7 = arith.constant 0 : index
    %c0_8 = arith.constant 0 : index
    %8 = vector.load %arg7[%c0_7, %c0_8] : memref<1x32xf32, #tpu.memory_space<vmem>>, vector<1x32xf32>
    %c0_9 = arith.constant 0 : index
    %c0_10 = arith.constant 0 : index
    %9 = vector.load %arg8[%c0_9, %c0_10] : memref<1x32xf32, #tpu.memory_space<vmem>>, vector<1x32xf32>
    %c0_11 = arith.constant 0 : index
    %c0_12 = arith.constant 0 : index
    %c0_13 = arith.constant 0 : index
    %10 = vector.load %arg3[%c0_11, %c0_12, %c0_13] : memref<12x32x8xf32, #tpu.memory_space<vmem>>, vector<1x32x8xf32>
    %11 = vector.shape_cast %10 : vector<1x32x8xf32> to vector<32x8xf32>
    %cst_14 = arith.constant dense<0.000000e+00> : vector<16x8xf32>
    %12 = tpu.matmul %5, %11, %cst_14 {dimension_numbers = #tpu.dot_dimension_numbers<[1], [0], [0], [1], [0, 0, 1, 1], [], []>} : vector<16x32xf32>, vector<32x8xf32>, vector<16x8xf32> -> vector<16x8xf32>
    %c0_15 = arith.constant 0 : index
    %c0_16 = arith.constant 0 : index
    %c0_17 = arith.constant 0 : index
    %13 = vector.load %arg4[%c0_15, %c0_16, %c0_17] : memref<12x1x8xf32, #tpu.memory_space<vmem>>, vector<1x1x8xf32>
    %14 = vector.shape_cast %13 : vector<1x1x8xf32> to vector<1x8xf32>
    %15 = vector.broadcast %14 : vector<1x8xf32> to vector<16x8xf32>
    %16 = arith.addf %12, %15 : vector<16x8xf32>
    %c1 = arith.constant 1 : index
    %c0_18 = arith.constant 0 : index
    %c0_19 = arith.constant 0 : index
    %17 = vector.load %arg3[%c1, %c0_18, %c0_19] : memref<12x32x8xf32, #tpu.memory_space<vmem>>, vector<1x32x8xf32>
    %18 = vector.shape_cast %17 : vector<1x32x8xf32> to vector<32x8xf32>
    %cst_20 = arith.constant dense<0.000000e+00> : vector<16x8xf32>
    %19 = tpu.matmul %5, %18, %cst_20 {dimension_numbers = #tpu.dot_dimension_numbers<[1], [0], [0], [1], [0, 0, 1, 1], [], []>} : vector<16x32xf32>, vector<32x8xf32>, vector<16x8xf32> -> vector<16x8xf32>
    %c1_21 = arith.constant 1 : index
    %c0_22 = arith.constant 0 : index
    %c0_23 = arith.constant 0 : index
    %20 = vector.load %arg4[%c1_21, %c0_22, %c0_23] : memref<12x1x8xf32, #tpu.memory_space<vmem>>, vector<1x1x8xf32>
    %21 = vector.shape_cast %20 : vector<1x1x8xf32> to vector<1x8xf32>
    %22 = vector.broadcast %21 : vector<1x8xf32> to vector<16x8xf32>
    %23 = arith.addf %19, %22 : vector<16x8xf32>
    %c2 = arith.constant 2 : index
    %c0_24 = arith.constant 0 : index
    %c0_25 = arith.constant 0 : index
    %24 = vector.load %arg3[%c2, %c0_24, %c0_25] : memref<12x32x8xf32, #tpu.memory_space<vmem>>, vector<1x32x8xf32>
    %25 = vector.shape_cast %24 : vector<1x32x8xf32> to vector<32x8xf32>
    %cst_26 = arith.constant dense<0.000000e+00> : vector<16x8xf32>
    %26 = tpu.matmul %5, %25, %cst_26 {dimension_numbers = #tpu.dot_dimension_numbers<[1], [0], [0], [1], [0, 0, 1, 1], [], []>} : vector<16x32xf32>, vector<32x8xf32>, vector<16x8xf32> -> vector<16x8xf32>
    %c2_27 = arith.constant 2 : index
    %c0_28 = arith.constant 0 : index
    %c0_29 = arith.constant 0 : index
    %27 = vector.load %arg4[%c2_27, %c0_28, %c0_29] : memref<12x1x8xf32, #tpu.memory_space<vmem>>, vector<1x1x8xf32>
    %28 = vector.shape_cast %27 : vector<1x1x8xf32> to vector<1x8xf32>
    %29 = vector.broadcast %28 : vector<1x8xf32> to vector<16x8xf32>
    %30 = arith.addf %26, %29 : vector<16x8xf32>
    %c3 = arith.constant 3 : index
    %c0_30 = arith.constant 0 : index
    %c0_31 = arith.constant 0 : index
    %31 = vector.load %arg3[%c3, %c0_30, %c0_31] : memref<12x32x8xf32, #tpu.memory_space<vmem>>, vector<1x32x8xf32>
    %32 = vector.shape_cast %31 : vector<1x32x8xf32> to vector<32x8xf32>
    %cst_32 = arith.constant dense<0.000000e+00> : vector<16x8xf32>
    %33 = tpu.matmul %5, %32, %cst_32 {dimension_numbers = #tpu.dot_dimension_numbers<[1], [0], [0], [1], [0, 0, 1, 1], [], []>} : vector<16x32xf32>, vector<32x8xf32>, vector<16x8xf32> -> vector<16x8xf32>
    %c3_33 = arith.constant 3 : index
    %c0_34 = arith.constant 0 : index
    %c0_35 = arith.constant 0 : index
    %34 = vector.load %arg4[%c3_33, %c0_34, %c0_35] : memref<12x1x8xf32, #tpu.memory_space<vmem>>, vector<1x1x8xf32>
    %35 = vector.shape_cast %34 : vector<1x1x8xf32> to vector<1x8xf32>
    %36 = vector.broadcast %35 : vector<1x8xf32> to vector<16x8xf32>
    %37 = arith.addf %33, %36 : vector<16x8xf32>
    %38 = tpu.concatenate %16, %23, %30, %37 in 0 : vector<16x8xf32>, vector<16x8xf32>, vector<16x8xf32>, vector<16x8xf32> -> vector<64x8xf32>
    %c4 = arith.constant 4 : index
    %c0_36 = arith.constant 0 : index
    %c0_37 = arith.constant 0 : index
    %39 = vector.load %arg3[%c4, %c0_36, %c0_37] : memref<12x32x8xf32, #tpu.memory_space<vmem>>, vector<1x32x8xf32>
    %40 = vector.shape_cast %39 : vector<1x32x8xf32> to vector<32x8xf32>
    %cst_38 = arith.constant dense<0.000000e+00> : vector<16x8xf32>
    %41 = tpu.matmul %5, %40, %cst_38 {dimension_numbers = #tpu.dot_dimension_numbers<[1], [0], [0], [1], [0, 0, 1, 1], [], []>} : vector<16x32xf32>, vector<32x8xf32>, vector<16x8xf32> -> vector<16x8xf32>
    %c4_39 = arith.constant 4 : index
    %c0_40 = arith.constant 0 : index
    %c0_41 = arith.constant 0 : index
    %42 = vector.load %arg4[%c4_39, %c0_40, %c0_41] : memref<12x1x8xf32, #tpu.memory_space<vmem>>, vector<1x1x8xf32>
    %43 = vector.shape_cast %42 : vector<1x1x8xf32> to vector<1x8xf32>
    %44 = vector.broadcast %43 : vector<1x8xf32> to vector<16x8xf32>
    %45 = arith.addf %41, %44 : vector<16x8xf32>
    %c5 = arith.constant 5 : index
    %c0_42 = arith.constant 0 : index
    %c0_43 = arith.constant 0 : index
    %46 = vector.load %arg3[%c5, %c0_42, %c0_43] : memref<12x32x8xf32, #tpu.memory_space<vmem>>, vector<1x32x8xf32>
    %47 = vector.shape_cast %46 : vector<1x32x8xf32> to vector<32x8xf32>
    %cst_44 = arith.constant dense<0.000000e+00> : vector<16x8xf32>
    %48 = tpu.matmul %5, %47, %cst_44 {dimension_numbers = #tpu.dot_dimension_numbers<[1], [0], [0], [1], [0, 0, 1, 1], [], []>} : vector<16x32xf32>, vector<32x8xf32>, vector<16x8xf32> -> vector<16x8xf32>
    %c5_45 = arith.constant 5 : index
    %c0_46 = arith.constant 0 : index
    %c0_47 = arith.constant 0 : index
    %49 = vector.load %arg4[%c5_45, %c0_46, %c0_47] : memref<12x1x8xf32, #tpu.memory_space<vmem>>, vector<1x1x8xf32>
    %50 = vector.shape_cast %49 : vector<1x1x8xf32> to vector<1x8xf32>
    %51 = vector.broadcast %50 : vector<1x8xf32> to vector<16x8xf32>
    %52 = arith.addf %48, %51 : vector<16x8xf32>
    %c6 = arith.constant 6 : index
    %c0_48 = arith.constant 0 : index
    %c0_49 = arith.constant 0 : index
    %53 = vector.load %arg3[%c6, %c0_48, %c0_49] : memref<12x32x8xf32, #tpu.memory_space<vmem>>, vector<1x32x8xf32>
    %54 = vector.shape_cast %53 : vector<1x32x8xf32> to vector<32x8xf32>
    %cst_50 = arith.constant dense<0.000000e+00> : vector<16x8xf32>
    %55 = tpu.matmul %5, %54, %cst_50 {dimension_numbers = #tpu.dot_dimension_numbers<[1], [0], [0], [1], [0, 0, 1, 1], [], []>} : vector<16x32xf32>, vector<32x8xf32>, vector<16x8xf32> -> vector<16x8xf32>
    %c6_51 = arith.constant 6 : index
    %c0_52 = arith.constant 0 : index
    %c0_53 = arith.constant 0 : index
    %56 = vector.load %arg4[%c6_51, %c0_52, %c0_53] : memref<12x1x8xf32, #tpu.memory_space<vmem>>, vector<1x1x8xf32>
    %57 = vector.shape_cast %56 : vector<1x1x8xf32> to vector<1x8xf32>
    %58 = vector.broadcast %57 : vector<1x8xf32> to vector<16x8xf32>
    %59 = arith.addf %55, %58 : vector<16x8xf32>
    %c7 = arith.constant 7 : index
    %c0_54 = arith.constant 0 : index
    %c0_55 = arith.constant 0 : index
    %60 = vector.load %arg3[%c7, %c0_54, %c0_55] : memref<12x32x8xf32, #tpu.memory_space<vmem>>, vector<1x32x8xf32>
    %61 = vector.shape_cast %60 : vector<1x32x8xf32> to vector<32x8xf32>
    %cst_56 = arith.constant dense<0.000000e+00> : vector<16x8xf32>
    %62 = tpu.matmul %5, %61, %cst_56 {dimension_numbers = #tpu.dot_dimension_numbers<[1], [0], [0], [1], [0, 0, 1, 1], [], []>} : vector<16x32xf32>, vector<32x8xf32>, vector<16x8xf32> -> vector<16x8xf32>
    %c7_57 = arith.constant 7 : index
    %c0_58 = arith.constant 0 : index
    %c0_59 = arith.constant 0 : index
    %63 = vector.load %arg4[%c7_57, %c0_58, %c0_59] : memref<12x1x8xf32, #tpu.memory_space<vmem>>, vector<1x1x8xf32>
    %64 = vector.shape_cast %63 : vector<1x1x8xf32> to vector<1x8xf32>
    %65 = vector.broadcast %64 : vector<1x8xf32> to vector<16x8xf32>
    %66 = arith.addf %62, %65 : vector<16x8xf32>
    %67 = tpu.concatenate %45, %52, %59, %66 in 0 : vector<16x8xf32>, vector<16x8xf32>, vector<16x8xf32>, vector<16x8xf32> -> vector<64x8xf32>
    %c8 = arith.constant 8 : index
    %c0_60 = arith.constant 0 : index
    %c0_61 = arith.constant 0 : index
    %68 = vector.load %arg3[%c8, %c0_60, %c0_61] : memref<12x32x8xf32, #tpu.memory_space<vmem>>, vector<1x32x8xf32>
    %69 = vector.shape_cast %68 : vector<1x32x8xf32> to vector<32x8xf32>
    %cst_62 = arith.constant dense<0.000000e+00> : vector<16x8xf32>
    %70 = tpu.matmul %5, %69, %cst_62 {dimension_numbers = #tpu.dot_dimension_numbers<[1], [0], [0], [1], [0, 0, 1, 1], [], []>} : vector<16x32xf32>, vector<32x8xf32>, vector<16x8xf32> -> vector<16x8xf32>
    %c8_63 = arith.constant 8 : index
    %c0_64 = arith.constant 0 : index
    %c0_65 = arith.constant 0 : index
    %71 = vector.load %arg4[%c8_63, %c0_64, %c0_65] : memref<12x1x8xf32, #tpu.memory_space<vmem>>, vector<1x1x8xf32>
    %72 = vector.shape_cast %71 : vector<1x1x8xf32> to vector<1x8xf32>
    %73 = vector.broadcast %72 : vector<1x8xf32> to vector<16x8xf32>
    %74 = arith.addf %70, %73 : vector<16x8xf32>
    %c9 = arith.constant 9 : index
    %c0_66 = arith.constant 0 : index
    %c0_67 = arith.constant 0 : index
    %75 = vector.load %arg3[%c9, %c0_66, %c0_67] : memref<12x32x8xf32, #tpu.memory_space<vmem>>, vector<1x32x8xf32>
    %76 = vector.shape_cast %75 : vector<1x32x8xf32> to vector<32x8xf32>
    %cst_68 = arith.constant dense<0.000000e+00> : vector<16x8xf32>
    %77 = tpu.matmul %5, %76, %cst_68 {dimension_numbers = #tpu.dot_dimension_numbers<[1], [0], [0], [1], [0, 0, 1, 1], [], []>} : vector<16x32xf32>, vector<32x8xf32>, vector<16x8xf32> -> vector<16x8xf32>
    %c9_69 = arith.constant 9 : index
    %c0_70 = arith.constant 0 : index
    %c0_71 = arith.constant 0 : index
    %78 = vector.load %arg4[%c9_69, %c0_70, %c0_71] : memref<12x1x8xf32, #tpu.memory_space<vmem>>, vector<1x1x8xf32>
    %79 = vector.shape_cast %78 : vector<1x1x8xf32> to vector<1x8xf32>
    %80 = vector.broadcast %79 : vector<1x8xf32> to vector<16x8xf32>
    %81 = arith.addf %77, %80 : vector<16x8xf32>
    %c10 = arith.constant 10 : index
    %c0_72 = arith.constant 0 : index
    %c0_73 = arith.constant 0 : index
    %82 = vector.load %arg3[%c10, %c0_72, %c0_73] : memref<12x32x8xf32, #tpu.memory_space<vmem>>, vector<1x32x8xf32>
    %83 = vector.shape_cast %82 : vector<1x32x8xf32> to vector<32x8xf32>
    %cst_74 = arith.constant dense<0.000000e+00> : vector<16x8xf32>
    %84 = tpu.matmul %5, %83, %cst_74 {dimension_numbers = #tpu.dot_dimension_numbers<[1], [0], [0], [1], [0, 0, 1, 1], [], []>} : vector<16x32xf32>, vector<32x8xf32>, vector<16x8xf32> -> vector<16x8xf32>
    %c10_75 = arith.constant 10 : index
    %c0_76 = arith.constant 0 : index
    %c0_77 = arith.constant 0 : index
    %85 = vector.load %arg4[%c10_75, %c0_76, %c0_77] : memref<12x1x8xf32, #tpu.memory_space<vmem>>, vector<1x1x8xf32>
    %86 = vector.shape_cast %85 : vector<1x1x8xf32> to vector<1x8xf32>
    %87 = vector.broadcast %86 : vector<1x8xf32> to vector<16x8xf32>
    %88 = arith.addf %84, %87 : vector<16x8xf32>
    %c11 = arith.constant 11 : index
    %c0_78 = arith.constant 0 : index
    %c0_79 = arith.constant 0 : index
    %89 = vector.load %arg3[%c11, %c0_78, %c0_79] : memref<12x32x8xf32, #tpu.memory_space<vmem>>, vector<1x32x8xf32>
    %90 = vector.shape_cast %89 : vector<1x32x8xf32> to vector<32x8xf32>
    %cst_80 = arith.constant dense<0.000000e+00> : vector<16x8xf32>
    %91 = tpu.matmul %5, %90, %cst_80 {dimension_numbers = #tpu.dot_dimension_numbers<[1], [0], [0], [1], [0, 0, 1, 1], [], []>} : vector<16x32xf32>, vector<32x8xf32>, vector<16x8xf32> -> vector<16x8xf32>
    %c11_81 = arith.constant 11 : index
    %c0_82 = arith.constant 0 : index
    %c0_83 = arith.constant 0 : index
    %92 = vector.load %arg4[%c11_81, %c0_82, %c0_83] : memref<12x1x8xf32, #tpu.memory_space<vmem>>, vector<1x1x8xf32>
    %93 = vector.shape_cast %92 : vector<1x1x8xf32> to vector<1x8xf32>
    %94 = vector.broadcast %93 : vector<1x8xf32> to vector<16x8xf32>
    %95 = arith.addf %91, %94 : vector<16x8xf32>
    %96 = tpu.concatenate %74, %81, %88, %95 in 0 : vector<16x8xf32>, vector<16x8xf32>, vector<16x8xf32>, vector<16x8xf32> -> vector<64x8xf32>
    "tpu.trace_start"() <{level = 10 : i32, message = "pd,qd->pq"}> : () -> ()
    %cst_84 = arith.constant dense<0.000000e+00> : vector<64x64xf32>
    %97 = tpu.matmul %38, %67, %cst_84 {dimension_numbers = #tpu.dot_dimension_numbers<[1], [1], [0], [0], [0, 0, 1, 0], [], []>} : vector<64x8xf32>, vector<64x8xf32>, vector<64x64xf32> -> vector<64x64xf32>
    "tpu.trace_stop"() : () -> ()
    %98 = arith.addf %97, %6 : vector<64x64xf32>
    %cst_85 = arith.constant dense<0xFF800000> : vector<64xf32>
    %99 = vector.multi_reduction <maximumf>, %98, %cst_85 [1] : vector<64x64xf32> to vector<64xf32>
    %100 = vector.shape_cast %99 : vector<64xf32> to vector<64x1xf32>
    %101 = vector.broadcast %100 : vector<64x1xf32> to vector<64x64xf32>
    %102 = arith.subf %98, %101 : vector<64x64xf32>
    %103 = math.exp %102 : vector<64x64xf32>
    %cst_86 = arith.constant dense<0.000000e+00> : vector<64xf32>
    %104 = vector.multi_reduction <add>, %103, %cst_86 [1] : vector<64x64xf32> to vector<64xf32>
    %105 = vector.shape_cast %104 : vector<64xf32> to vector<64x1xf32>
    %cst_87 = arith.constant dense<0.000000e+00> : vector<64x8xf32>
    %106 = tpu.matmul %103, %96, %cst_87 {dimension_numbers = #tpu.dot_dimension_numbers<[1], [0], [0], [1], [0, 0, 1, 1], [], []>} : vector<64x64xf32>, vector<64x8xf32>, vector<64x8xf32> -> vector<64x8xf32>
    %cst_88 = arith.constant 0.353553385 : f32
    %107 = vector.broadcast %cst_88 : f32 to vector<64x1xf32>
    %108 = arith.divf %107, %105 : vector<64x1xf32>
    %109 = vector.broadcast %108 : vector<64x1xf32> to vector<64x8xf32>
    %110 = arith.mulf %106, %109 : vector<64x8xf32>
    %111 = vector.extract_strided_slice %110 {offsets = [0, 0], sizes = [16, 8], strides = [1, 1]} : vector<64x8xf32> to vector<16x8xf32>
    %c0_89 = arith.constant 0 : index
    %c0_90 = arith.constant 0 : index
    %c0_91 = arith.constant 0 : index
    %112 = vector.load %arg5[%c0_89, %c0_90, %c0_91] : memref<4x8x32xf32, #tpu.memory_space<vmem>>, vector<1x8x32xf32>
    %113 = vector.shape_cast %112 : vector<1x8x32xf32> to vector<8x32xf32>
    %cst_92 = arith.constant dense<0.000000e+00> : vector<16x32xf32>
    %114 = tpu.matmul %111, %113, %cst_92 {dimension_numbers = #tpu.dot_dimension_numbers<[1], [0], [0], [1], [0, 0, 1, 1], [], []>} : vector<16x8xf32>, vector<8x32xf32>, vector<16x32xf32> -> vector<16x32xf32>
    %115 = vector.broadcast %7 : vector<1x32xf32> to vector<16x32xf32>
    %116 = arith.addf %115, %114 : vector<16x32xf32>
    %117 = vector.extract_strided_slice %110 {offsets = [16, 0], sizes = [16, 8], strides = [1, 1]} : vector<64x8xf32> to vector<16x8xf32>
    %c1_93 = arith.constant 1 : index
    %c0_94 = arith.constant 0 : index
    %c0_95 = arith.constant 0 : index
    %118 = vector.load %arg5[%c1_93, %c0_94, %c0_95] : memref<4x8x32xf32, #tpu.memory_space<vmem>>, vector<1x8x32xf32>
    %119 = vector.shape_cast %118 : vector<1x8x32xf32> to vector<8x32xf32>
    %cst_96 = arith.constant dense<0.000000e+00> : vector<16x32xf32>
    %120 = tpu.matmul %117, %119, %cst_96 {dimension_numbers = #tpu.dot_dimension_numbers<[1], [0], [0], [1], [0, 0, 1, 1], [], []>} : vector<16x8xf32>, vector<8x32xf32>, vector<16x32xf32> -> vector<16x32xf32>
    %121 = arith.addf %116, %120 : vector<16x32xf32>
    %122 = vector.extract_strided_slice %110 {offsets = [32, 0], sizes = [16, 8], strides = [1, 1]} : vector<64x8xf32> to vector<16x8xf32>
    %c2_97 = arith.constant 2 : index
    %c0_98 = arith.constant 0 : index
    %c0_99 = arith.constant 0 : index
    %123 = vector.load %arg5[%c2_97, %c0_98, %c0_99] : memref<4x8x32xf32, #tpu.memory_space<vmem>>, vector<1x8x32xf32>
    %124 = vector.shape_cast %123 : vector<1x8x32xf32> to vector<8x32xf32>
    %cst_100 = arith.constant dense<0.000000e+00> : vector<16x32xf32>
    %125 = tpu.matmul %122, %124, %cst_100 {dimension_numbers = #tpu.dot_dimension_numbers<[1], [0], [0], [1], [0, 0, 1, 1], [], []>} : vector<16x8xf32>, vector<8x32xf32>, vector<16x32xf32> -> vector<16x32xf32>
    %126 = arith.addf %121, %125 : vector<16x32xf32>
    %127 = vector.extract_strided_slice %110 {offsets = [48, 0], sizes = [16, 8], strides = [1, 1]} : vector<64x8xf32> to vector<16x8xf32>
    %c3_101 = arith.constant 3 : index
    %c0_102 = arith.constant 0 : index
    %c0_103 = arith.constant 0 : index
    %128 = vector.load %arg5[%c3_101, %c0_102, %c0_103] : memref<4x8x32xf32, #tpu.memory_space<vmem>>, vector<1x8x32xf32>
    %129 = vector.shape_cast %128 : vector<1x8x32xf32> to vector<8x32xf32>
    %cst_104 = arith.constant dense<0.000000e+00> : vector<16x32xf32>
    %130 = tpu.matmul %127, %129, %cst_104 {dimension_numbers = #tpu.dot_dimension_numbers<[1], [0], [0], [1], [0, 0, 1, 1], [], []>} : vector<16x8xf32>, vector<8x32xf32>, vector<16x32xf32> -> vector<16x32xf32>
    %131 = arith.addf %126, %130 : vector<16x32xf32>
    %cst_105 = arith.constant 0.000000e+00 : f32
    %132 = vector.broadcast %cst_105 : f32 to vector<16x32xf32>
    %133 = arith.maximumf %131, %132 : vector<16x32xf32>
    %134 = arith.addf %133, %5 : vector<16x32xf32>
    %cst_106 = arith.constant dense<0.000000e+00> : vector<16xf32>
    %135 = vector.multi_reduction <add>, %134, %cst_106 [1] : vector<16x32xf32> to vector<16xf32>
    %136 = vector.shape_cast %135 : vector<16xf32> to vector<16x1xf32>
    %cst_107 = arith.constant 3.200000e+01 : f32
    %137 = vector.broadcast %cst_107 : f32 to vector<16x1xf32>
    %138 = arith.divf %136, %137 : vector<16x1xf32>
    %139 = vector.broadcast %138 : vector<16x1xf32> to vector<16x32xf32>
    %140 = arith.subf %134, %139 : vector<16x32xf32>
    %141 = arith.mulf %140, %140 : vector<16x32xf32>
    %cst_108 = arith.constant dense<0.000000e+00> : vector<16xf32>
    %142 = vector.multi_reduction <add>, %141, %cst_108 [1] : vector<16x32xf32> to vector<16xf32>
    %143 = vector.shape_cast %142 : vector<16xf32> to vector<16x1xf32>
    %cst_109 = arith.constant 3.200000e+01 : f32
    %144 = vector.broadcast %cst_109 : f32 to vector<16x1xf32>
    %145 = arith.divf %143, %144 : vector<16x1xf32>
    %146 = vector.broadcast %138 : vector<16x1xf32> to vector<16x32xf32>
    %147 = arith.subf %134, %146 : vector<16x32xf32>
    %cst_110 = arith.constant 9.99999974E-6 : f32
    %148 = vector.broadcast %cst_110 : f32 to vector<16x1xf32>
    %149 = arith.addf %145, %148 : vector<16x1xf32>
    %150 = math.rsqrt %149 : vector<16x1xf32>
    %151 = vector.broadcast %150 : vector<16x1xf32> to vector<16x32xf32>
    %152 = arith.mulf %147, %151 : vector<16x32xf32>
    %153 = vector.broadcast %8 : vector<1x32xf32> to vector<16x32xf32>
    %154 = arith.mulf %152, %153 : vector<16x32xf32>
    %155 = vector.broadcast %9 : vector<1x32xf32> to vector<16x32xf32>
    %156 = arith.addf %154, %155 : vector<16x32xf32>
    %c0_111 = arith.constant 0 : index
    %c0_112 = arith.constant 0 : index
    %c0_113 = arith.constant 0 : index
    %157 = vector.load %arg3[%c0_111, %c0_112, %c0_113] : memref<12x32x8xf32, #tpu.memory_space<vmem>>, vector<1x32x8xf32>
    %158 = vector.shape_cast %157 : vector<1x32x8xf32> to vector<32x8xf32>
    %cst_114 = arith.constant dense<0.000000e+00> : vector<16x8xf32>
    %159 = tpu.matmul %156, %158, %cst_114 {dimension_numbers = #tpu.dot_dimension_numbers<[1], [0], [0], [1], [0, 0, 1, 1], [], []>} : vector<16x32xf32>, vector<32x8xf32>, vector<16x8xf32> -> vector<16x8xf32>
    %c0_115 = arith.constant 0 : index
    %c0_116 = arith.constant 0 : index
    %c0_117 = arith.constant 0 : index
    %160 = vector.load %arg4[%c0_115, %c0_116, %c0_117] : memref<12x1x8xf32, #tpu.memory_space<vmem>>, vector<1x1x8xf32>
    %161 = vector.shape_cast %160 : vector<1x1x8xf32> to vector<1x8xf32>
    %162 = vector.broadcast %161 : vector<1x8xf32> to vector<16x8xf32>
    %163 = arith.addf %159, %162 : vector<16x8xf32>
    %c1_118 = arith.constant 1 : index
    %c0_119 = arith.constant 0 : index
    %c0_120 = arith.constant 0 : index
    %164 = vector.load %arg3[%c1_118, %c0_119, %c0_120] : memref<12x32x8xf32, #tpu.memory_space<vmem>>, vector<1x32x8xf32>
    %165 = vector.shape_cast %164 : vector<1x32x8xf32> to vector<32x8xf32>
    %cst_121 = arith.constant dense<0.000000e+00> : vector<16x8xf32>
    %166 = tpu.matmul %156, %165, %cst_121 {dimension_numbers = #tpu.dot_dimension_numbers<[1], [0], [0], [1], [0, 0, 1, 1], [], []>} : vector<16x32xf32>, vector<32x8xf32>, vector<16x8xf32> -> vector<16x8xf32>
    %c1_122 = arith.constant 1 : index
    %c0_123 = arith.constant 0 : index
    %c0_124 = arith.constant 0 : index
    %167 = vector.load %arg4[%c1_122, %c0_123, %c0_124] : memref<12x1x8xf32, #tpu.memory_space<vmem>>, vector<1x1x8xf32>
    %168 = vector.shape_cast %167 : vector<1x1x8xf32> to vector<1x8xf32>
    %169 = vector.broadcast %168 : vector<1x8xf32> to vector<16x8xf32>
    %170 = arith.addf %166, %169 : vector<16x8xf32>
    %c2_125 = arith.constant 2 : index
    %c0_126 = arith.constant 0 : index
    %c0_127 = arith.constant 0 : index
    %171 = vector.load %arg3[%c2_125, %c0_126, %c0_127] : memref<12x32x8xf32, #tpu.memory_space<vmem>>, vector<1x32x8xf32>
    %172 = vector.shape_cast %171 : vector<1x32x8xf32> to vector<32x8xf32>
    %cst_128 = arith.constant dense<0.000000e+00> : vector<16x8xf32>
    %173 = tpu.matmul %156, %172, %cst_128 {dimension_numbers = #tpu.dot_dimension_numbers<[1], [0], [0], [1], [0, 0, 1, 1], [], []>} : vector<16x32xf32>, vector<32x8xf32>, vector<16x8xf32> -> vector<16x8xf32>
    %c2_129 = arith.constant 2 : index
    %c0_130 = arith.constant 0 : index
    %c0_131 = arith.constant 0 : index
    %174 = vector.load %arg4[%c2_129, %c0_130, %c0_131] : memref<12x1x8xf32, #tpu.memory_space<vmem>>, vector<1x1x8xf32>
    %175 = vector.shape_cast %174 : vector<1x1x8xf32> to vector<1x8xf32>
    %176 = vector.broadcast %175 : vector<1x8xf32> to vector<16x8xf32>
    %177 = arith.addf %173, %176 : vector<16x8xf32>
    %c3_132 = arith.constant 3 : index
    %c0_133 = arith.constant 0 : index
    %c0_134 = arith.constant 0 : index
    %178 = vector.load %arg3[%c3_132, %c0_133, %c0_134] : memref<12x32x8xf32, #tpu.memory_space<vmem>>, vector<1x32x8xf32>
    %179 = vector.shape_cast %178 : vector<1x32x8xf32> to vector<32x8xf32>
    %cst_135 = arith.constant dense<0.000000e+00> : vector<16x8xf32>
    %180 = tpu.matmul %156, %179, %cst_135 {dimension_numbers = #tpu.dot_dimension_numbers<[1], [0], [0], [1], [0, 0, 1, 1], [], []>} : vector<16x32xf32>, vector<32x8xf32>, vector<16x8xf32> -> vector<16x8xf32>
    %c3_136 = arith.constant 3 : index
    %c0_137 = arith.constant 0 : index
    %c0_138 = arith.constant 0 : index
    %181 = vector.load %arg4[%c3_136, %c0_137, %c0_138] : memref<12x1x8xf32, #tpu.memory_space<vmem>>, vector<1x1x8xf32>
    %182 = vector.shape_cast %181 : vector<1x1x8xf32> to vector<1x8xf32>
    %183 = vector.broadcast %182 : vector<1x8xf32> to vector<16x8xf32>
    %184 = arith.addf %180, %183 : vector<16x8xf32>
    %185 = tpu.concatenate %163, %170, %177, %184 in 0 : vector<16x8xf32>, vector<16x8xf32>, vector<16x8xf32>, vector<16x8xf32> -> vector<64x8xf32>
    %c4_139 = arith.constant 4 : index
    %c0_140 = arith.constant 0 : index
    %c0_141 = arith.constant 0 : index
    %186 = vector.load %arg3[%c4_139, %c0_140, %c0_141] : memref<12x32x8xf32, #tpu.memory_space<vmem>>, vector<1x32x8xf32>
    %187 = vector.shape_cast %186 : vector<1x32x8xf32> to vector<32x8xf32>
    %cst_142 = arith.constant dense<0.000000e+00> : vector<16x8xf32>
    %188 = tpu.matmul %156, %187, %cst_142 {dimension_numbers = #tpu.dot_dimension_numbers<[1], [0], [0], [1], [0, 0, 1, 1], [], []>} : vector<16x32xf32>, vector<32x8xf32>, vector<16x8xf32> -> vector<16x8xf32>
    %c4_143 = arith.constant 4 : index
    %c0_144 = arith.constant 0 : index
    %c0_145 = arith.constant 0 : index
    %189 = vector.load %arg4[%c4_143, %c0_144, %c0_145] : memref<12x1x8xf32, #tpu.memory_space<vmem>>, vector<1x1x8xf32>
    %190 = vector.shape_cast %189 : vector<1x1x8xf32> to vector<1x8xf32>
    %191 = vector.broadcast %190 : vector<1x8xf32> to vector<16x8xf32>
    %192 = arith.addf %188, %191 : vector<16x8xf32>
    %c5_146 = arith.constant 5 : index
    %c0_147 = arith.constant 0 : index
    %c0_148 = arith.constant 0 : index
    %193 = vector.load %arg3[%c5_146, %c0_147, %c0_148] : memref<12x32x8xf32, #tpu.memory_space<vmem>>, vector<1x32x8xf32>
    %194 = vector.shape_cast %193 : vector<1x32x8xf32> to vector<32x8xf32>
    %cst_149 = arith.constant dense<0.000000e+00> : vector<16x8xf32>
    %195 = tpu.matmul %156, %194, %cst_149 {dimension_numbers = #tpu.dot_dimension_numbers<[1], [0], [0], [1], [0, 0, 1, 1], [], []>} : vector<16x32xf32>, vector<32x8xf32>, vector<16x8xf32> -> vector<16x8xf32>
    %c5_150 = arith.constant 5 : index
    %c0_151 = arith.constant 0 : index
    %c0_152 = arith.constant 0 : index
    %196 = vector.load %arg4[%c5_150, %c0_151, %c0_152] : memref<12x1x8xf32, #tpu.memory_space<vmem>>, vector<1x1x8xf32>
    %197 = vector.shape_cast %196 : vector<1x1x8xf32> to vector<1x8xf32>
    %198 = vector.broadcast %197 : vector<1x8xf32> to vector<16x8xf32>
    %199 = arith.addf %195, %198 : vector<16x8xf32>
    %c6_153 = arith.constant 6 : index
    %c0_154 = arith.constant 0 : index
    %c0_155 = arith.constant 0 : index
    %200 = vector.load %arg3[%c6_153, %c0_154, %c0_155] : memref<12x32x8xf32, #tpu.memory_space<vmem>>, vector<1x32x8xf32>
    %201 = vector.shape_cast %200 : vector<1x32x8xf32> to vector<32x8xf32>
    %cst_156 = arith.constant dense<0.000000e+00> : vector<16x8xf32>
    %202 = tpu.matmul %156, %201, %cst_156 {dimension_numbers = #tpu.dot_dimension_numbers<[1], [0], [0], [1], [0, 0, 1, 1], [], []>} : vector<16x32xf32>, vector<32x8xf32>, vector<16x8xf32> -> vector<16x8xf32>
    %c6_157 = arith.constant 6 : index
    %c0_158 = arith.constant 0 : index
    %c0_159 = arith.constant 0 : index
    %203 = vector.load %arg4[%c6_157, %c0_158, %c0_159] : memref<12x1x8xf32, #tpu.memory_space<vmem>>, vector<1x1x8xf32>
    %204 = vector.shape_cast %203 : vector<1x1x8xf32> to vector<1x8xf32>
    %205 = vector.broadcast %204 : vector<1x8xf32> to vector<16x8xf32>
    %206 = arith.addf %202, %205 : vector<16x8xf32>
    %c7_160 = arith.constant 7 : index
    %c0_161 = arith.constant 0 : index
    %c0_162 = arith.constant 0 : index
    %207 = vector.load %arg3[%c7_160, %c0_161, %c0_162] : memref<12x32x8xf32, #tpu.memory_space<vmem>>, vector<1x32x8xf32>
    %208 = vector.shape_cast %207 : vector<1x32x8xf32> to vector<32x8xf32>
    %cst_163 = arith.constant dense<0.000000e+00> : vector<16x8xf32>
    %209 = tpu.matmul %156, %208, %cst_163 {dimension_numbers = #tpu.dot_dimension_numbers<[1], [0], [0], [1], [0, 0, 1, 1], [], []>} : vector<16x32xf32>, vector<32x8xf32>, vector<16x8xf32> -> vector<16x8xf32>
    %c7_164 = arith.constant 7 : index
    %c0_165 = arith.constant 0 : index
    %c0_166 = arith.constant 0 : index
    %210 = vector.load %arg4[%c7_164, %c0_165, %c0_166] : memref<12x1x8xf32, #tpu.memory_space<vmem>>, vector<1x1x8xf32>
    %211 = vector.shape_cast %210 : vector<1x1x8xf32> to vector<1x8xf32>
    %212 = vector.broadcast %211 : vector<1x8xf32> to vector<16x8xf32>
    %213 = arith.addf %209, %212 : vector<16x8xf32>
    %214 = tpu.concatenate %192, %199, %206, %213 in 0 : vector<16x8xf32>, vector<16x8xf32>, vector<16x8xf32>, vector<16x8xf32> -> vector<64x8xf32>
    %c8_167 = arith.constant 8 : index
    %c0_168 = arith.constant 0 : index
    %c0_169 = arith.constant 0 : index
    %215 = vector.load %arg3[%c8_167, %c0_168, %c0_169] : memref<12x32x8xf32, #tpu.memory_space<vmem>>, vector<1x32x8xf32>
    %216 = vector.shape_cast %215 : vector<1x32x8xf32> to vector<32x8xf32>
    %cst_170 = arith.constant dense<0.000000e+00> : vector<16x8xf32>
    %217 = tpu.matmul %156, %216, %cst_170 {dimension_numbers = #tpu.dot_dimension_numbers<[1], [0], [0], [1], [0, 0, 1, 1], [], []>} : vector<16x32xf32>, vector<32x8xf32>, vector<16x8xf32> -> vector<16x8xf32>
    %c8_171 = arith.constant 8 : index
    %c0_172 = arith.constant 0 : index
    %c0_173 = arith.constant 0 : index
    %218 = vector.load %arg4[%c8_171, %c0_172, %c0_173] : memref<12x1x8xf32, #tpu.memory_space<vmem>>, vector<1x1x8xf32>
    %219 = vector.shape_cast %218 : vector<1x1x8xf32> to vector<1x8xf32>
    %220 = vector.broadcast %219 : vector<1x8xf32> to vector<16x8xf32>
    %221 = arith.addf %217, %220 : vector<16x8xf32>
    %c9_174 = arith.constant 9 : index
    %c0_175 = arith.constant 0 : index
    %c0_176 = arith.constant 0 : index
    %222 = vector.load %arg3[%c9_174, %c0_175, %c0_176] : memref<12x32x8xf32, #tpu.memory_space<vmem>>, vector<1x32x8xf32>
    %223 = vector.shape_cast %222 : vector<1x32x8xf32> to vector<32x8xf32>
    %cst_177 = arith.constant dense<0.000000e+00> : vector<16x8xf32>
    %224 = tpu.matmul %156, %223, %cst_177 {dimension_numbers = #tpu.dot_dimension_numbers<[1], [0], [0], [1], [0, 0, 1, 1], [], []>} : vector<16x32xf32>, vector<32x8xf32>, vector<16x8xf32> -> vector<16x8xf32>
    %c9_178 = arith.constant 9 : index
    %c0_179 = arith.constant 0 : index
    %c0_180 = arith.constant 0 : index
    %225 = vector.load %arg4[%c9_178, %c0_179, %c0_180] : memref<12x1x8xf32, #tpu.memory_space<vmem>>, vector<1x1x8xf32>
    %226 = vector.shape_cast %225 : vector<1x1x8xf32> to vector<1x8xf32>
    %227 = vector.broadcast %226 : vector<1x8xf32> to vector<16x8xf32>
    %228 = arith.addf %224, %227 : vector<16x8xf32>
    %c10_181 = arith.constant 10 : index
    %c0_182 = arith.constant 0 : index
    %c0_183 = arith.constant 0 : index
    %229 = vector.load %arg3[%c10_181, %c0_182, %c0_183] : memref<12x32x8xf32, #tpu.memory_space<vmem>>, vector<1x32x8xf32>
    %230 = vector.shape_cast %229 : vector<1x32x8xf32> to vector<32x8xf32>
    %cst_184 = arith.constant dense<0.000000e+00> : vector<16x8xf32>
    %231 = tpu.matmul %156, %230, %cst_184 {dimension_numbers = #tpu.dot_dimension_numbers<[1], [0], [0], [1], [0, 0, 1, 1], [], []>} : vector<16x32xf32>, vector<32x8xf32>, vector<16x8xf32> -> vector<16x8xf32>
    %c10_185 = arith.constant 10 : index
    %c0_186 = arith.constant 0 : index
    %c0_187 = arith.constant 0 : index
    %232 = vector.load %arg4[%c10_185, %c0_186, %c0_187] : memref<12x1x8xf32, #tpu.memory_space<vmem>>, vector<1x1x8xf32>
    %233 = vector.shape_cast %232 : vector<1x1x8xf32> to vector<1x8xf32>
    %234 = vector.broadcast %233 : vector<1x8xf32> to vector<16x8xf32>
    %235 = arith.addf %231, %234 : vector<16x8xf32>
    %c11_188 = arith.constant 11 : index
    %c0_189 = arith.constant 0 : index
    %c0_190 = arith.constant 0 : index
    %236 = vector.load %arg3[%c11_188, %c0_189, %c0_190] : memref<12x32x8xf32, #tpu.memory_space<vmem>>, vector<1x32x8xf32>
    %237 = vector.shape_cast %236 : vector<1x32x8xf32> to vector<32x8xf32>
    %cst_191 = arith.constant dense<0.000000e+00> : vector<16x8xf32>
    %238 = tpu.matmul %156, %237, %cst_191 {dimension_numbers = #tpu.dot_dimension_numbers<[1], [0], [0], [1], [0, 0, 1, 1], [], []>} : vector<16x32xf32>, vector<32x8xf32>, vector<16x8xf32> -> vector<16x8xf32>
    %c11_192 = arith.constant 11 : index
    %c0_193 = arith.constant 0 : index
    %c0_194 = arith.constant 0 : index
    %239 = vector.load %arg4[%c11_192, %c0_193, %c0_194] : memref<12x1x8xf32, #tpu.memory_space<vmem>>, vector<1x1x8xf32>
    %240 = vector.shape_cast %239 : vector<1x1x8xf32> to vector<1x8xf32>
    %241 = vector.broadcast %240 : vector<1x8xf32> to vector<16x8xf32>
    %242 = arith.addf %238, %241 : vector<16x8xf32>
    %243 = tpu.concatenate %221, %228, %235, %242 in 0 : vector<16x8xf32>, vector<16x8xf32>, vector<16x8xf32>, vector<16x8xf32> -> vector<64x8xf32>
    "tpu.trace_start"() <{level = 10 : i32, message = "pd,qd->pq"}> : () -> ()
    %cst_195 = arith.constant dense<0.000000e+00> : vector<64x64xf32>
    %244 = tpu.matmul %185, %214, %cst_195 {dimension_numbers = #tpu.dot_dimension_numbers<[1], [1], [0], [0], [0, 0, 1, 0], [], []>} : vector<64x8xf32>, vector<64x8xf32>, vector<64x64xf32> -> vector<64x64xf32>
    "tpu.trace_stop"() : () -> ()
    %245 = arith.addf %244, %6 : vector<64x64xf32>
    %cst_196 = arith.constant dense<0xFF800000> : vector<64xf32>
    %246 = vector.multi_reduction <maximumf>, %245, %cst_196 [1] : vector<64x64xf32> to vector<64xf32>
    %247 = vector.shape_cast %246 : vector<64xf32> to vector<64x1xf32>
    %248 = vector.broadcast %247 : vector<64x1xf32> to vector<64x64xf32>
    %249 = arith.subf %245, %248 : vector<64x64xf32>
    %250 = math.exp %249 : vector<64x64xf32>
    %cst_197 = arith.constant dense<0.000000e+00> : vector<64xf32>
    %251 = vector.multi_reduction <add>, %250, %cst_197 [1] : vector<64x64xf32> to vector<64xf32>
    %252 = vector.shape_cast %251 : vector<64xf32> to vector<64x1xf32>
    %cst_198 = arith.constant dense<0.000000e+00> : vector<64x8xf32>
    %253 = tpu.matmul %250, %243, %cst_198 {dimension_numbers = #tpu.dot_dimension_numbers<[1], [0], [0], [1], [0, 0, 1, 1], [], []>} : vector<64x64xf32>, vector<64x8xf32>, vector<64x8xf32> -> vector<64x8xf32>
    %cst_199 = arith.constant 0.353553385 : f32
    %254 = vector.broadcast %cst_199 : f32 to vector<64x1xf32>
    %255 = arith.divf %254, %252 : vector<64x1xf32>
    %256 = vector.broadcast %255 : vector<64x1xf32> to vector<64x8xf32>
    %257 = arith.mulf %253, %256 : vector<64x8xf32>
    %258 = vector.extract_strided_slice %257 {offsets = [0, 0], sizes = [16, 8], strides = [1, 1]} : vector<64x8xf32> to vector<16x8xf32>
    %c0_200 = arith.constant 0 : index
    %c0_201 = arith.constant 0 : index
    %c0_202 = arith.constant 0 : index
    %259 = vector.load %arg5[%c0_200, %c0_201, %c0_202] : memref<4x8x32xf32, #tpu.memory_space<vmem>>, vector<1x8x32xf32>
    %260 = vector.shape_cast %259 : vector<1x8x32xf32> to vector<8x32xf32>
    %cst_203 = arith.constant dense<0.000000e+00> : vector<16x32xf32>
    %261 = tpu.matmul %258, %260, %cst_203 {dimension_numbers = #tpu.dot_dimension_numbers<[1], [0], [0], [1], [0, 0, 1, 1], [], []>} : vector<16x8xf32>, vector<8x32xf32>, vector<16x32xf32> -> vector<16x32xf32>
    %262 = vector.broadcast %7 : vector<1x32xf32> to vector<16x32xf32>
    %263 = arith.addf %262, %261 : vector<16x32xf32>
    %264 = vector.extract_strided_slice %257 {offsets = [16, 0], sizes = [16, 8], strides = [1, 1]} : vector<64x8xf32> to vector<16x8xf32>
    %c1_204 = arith.constant 1 : index
    %c0_205 = arith.constant 0 : index
    %c0_206 = arith.constant 0 : index
    %265 = vector.load %arg5[%c1_204, %c0_205, %c0_206] : memref<4x8x32xf32, #tpu.memory_space<vmem>>, vector<1x8x32xf32>
    %266 = vector.shape_cast %265 : vector<1x8x32xf32> to vector<8x32xf32>
    %cst_207 = arith.constant dense<0.000000e+00> : vector<16x32xf32>
    %267 = tpu.matmul %264, %266, %cst_207 {dimension_numbers = #tpu.dot_dimension_numbers<[1], [0], [0], [1], [0, 0, 1, 1], [], []>} : vector<16x8xf32>, vector<8x32xf32>, vector<16x32xf32> -> vector<16x32xf32>
    %268 = arith.addf %263, %267 : vector<16x32xf32>
    %269 = vector.extract_strided_slice %257 {offsets = [32, 0], sizes = [16, 8], strides = [1, 1]} : vector<64x8xf32> to vector<16x8xf32>
    %c2_208 = arith.constant 2 : index
    %c0_209 = arith.constant 0 : index
    %c0_210 = arith.constant 0 : index
    %270 = vector.load %arg5[%c2_208, %c0_209, %c0_210] : memref<4x8x32xf32, #tpu.memory_space<vmem>>, vector<1x8x32xf32>
    %271 = vector.shape_cast %270 : vector<1x8x32xf32> to vector<8x32xf32>
    %cst_211 = arith.constant dense<0.000000e+00> : vector<16x32xf32>
    %272 = tpu.matmul %269, %271, %cst_211 {dimension_numbers = #tpu.dot_dimension_numbers<[1], [0], [0], [1], [0, 0, 1, 1], [], []>} : vector<16x8xf32>, vector<8x32xf32>, vector<16x32xf32> -> vector<16x32xf32>
    %273 = arith.addf %268, %272 : vector<16x32xf32>
    %274 = vector.extract_strided_slice %257 {offsets = [48, 0], sizes = [16, 8], strides = [1, 1]} : vector<64x8xf32> to vector<16x8xf32>
    %c3_212 = arith.constant 3 : index
    %c0_213 = arith.constant 0 : index
    %c0_214 = arith.constant 0 : index
    %275 = vector.load %arg5[%c3_212, %c0_213, %c0_214] : memref<4x8x32xf32, #tpu.memory_space<vmem>>, vector<1x8x32xf32>
    %276 = vector.shape_cast %275 : vector<1x8x32xf32> to vector<8x32xf32>
    %cst_215 = arith.constant dense<0.000000e+00> : vector<16x32xf32>
    %277 = tpu.matmul %274, %276, %cst_215 {dimension_numbers = #tpu.dot_dimension_numbers<[1], [0], [0], [1], [0, 0, 1, 1], [], []>} : vector<16x8xf32>, vector<8x32xf32>, vector<16x32xf32> -> vector<16x32xf32>
    %278 = arith.addf %273, %277 : vector<16x32xf32>
    %cst_216 = arith.constant 0.000000e+00 : f32
    %279 = vector.broadcast %cst_216 : f32 to vector<16x32xf32>
    %280 = arith.maximumf %278, %279 : vector<16x32xf32>
    %281 = arith.addf %280, %156 : vector<16x32xf32>
    %cst_217 = arith.constant dense<0.000000e+00> : vector<16xf32>
    %282 = vector.multi_reduction <add>, %281, %cst_217 [1] : vector<16x32xf32> to vector<16xf32>
    %283 = vector.shape_cast %282 : vector<16xf32> to vector<16x1xf32>
    %cst_218 = arith.constant 3.200000e+01 : f32
    %284 = vector.broadcast %cst_218 : f32 to vector<16x1xf32>
    %285 = arith.divf %283, %284 : vector<16x1xf32>
    %286 = vector.broadcast %285 : vector<16x1xf32> to vector<16x32xf32>
    %287 = arith.subf %281, %286 : vector<16x32xf32>
    %288 = arith.mulf %287, %287 : vector<16x32xf32>
    %cst_219 = arith.constant dense<0.000000e+00> : vector<16xf32>
    %289 = vector.multi_reduction <add>, %288, %cst_219 [1] : vector<16x32xf32> to vector<16xf32>
    %290 = vector.shape_cast %289 : vector<16xf32> to vector<16x1xf32>
    %cst_220 = arith.constant 3.200000e+01 : f32
    %291 = vector.broadcast %cst_220 : f32 to vector<16x1xf32>
    %292 = arith.divf %290, %291 : vector<16x1xf32>
    %293 = vector.broadcast %285 : vector<16x1xf32> to vector<16x32xf32>
    %294 = arith.subf %281, %293 : vector<16x32xf32>
    %cst_221 = arith.constant 9.99999974E-6 : f32
    %295 = vector.broadcast %cst_221 : f32 to vector<16x1xf32>
    %296 = arith.addf %292, %295 : vector<16x1xf32>
    %297 = math.rsqrt %296 : vector<16x1xf32>
    %298 = vector.broadcast %297 : vector<16x1xf32> to vector<16x32xf32>
    %299 = arith.mulf %294, %298 : vector<16x32xf32>
    %300 = vector.broadcast %8 : vector<1x32xf32> to vector<16x32xf32>
    %301 = arith.mulf %299, %300 : vector<16x32xf32>
    %302 = vector.broadcast %9 : vector<1x32xf32> to vector<16x32xf32>
    %303 = arith.addf %301, %302 : vector<16x32xf32>
    %cst_222 = arith.constant 0.000000e+00 : f32
    %304 = vector.broadcast %cst_222 : f32 to vector<16x5xf32>
    %c0_223 = arith.constant 0 : index
    %c0_224 = arith.constant 0 : index
    %c0_225 = arith.constant 0 : index
    %305 = vector.load %arg12[%c0_223, %c0_224, %c0_225] : memref<8x16x1xf32, #tpu.memory_space<vmem>>, vector<1x16x1xf32>
    %306 = vector.shape_cast %305 : vector<1x16x1xf32> to vector<16x1xf32>
    %c0_226 = arith.constant 0 : index
    %c0_227 = arith.constant 0 : index
    %c0_228 = arith.constant 0 : index
    %307 = vector.load %arg10[%c0_226, %c0_227, %c0_228] : memref<8x32x5xf32, #tpu.memory_space<vmem>>, vector<1x32x5xf32>
    %308 = vector.shape_cast %307 : vector<1x32x5xf32> to vector<32x5xf32>
    %cst_229 = arith.constant dense<0.000000e+00> : vector<16x5xf32>
    %309 = tpu.matmul %303, %308, %cst_229 {dimension_numbers = #tpu.dot_dimension_numbers<[1], [0], [0], [1], [0, 0, 1, 1], [], []>} : vector<16x32xf32>, vector<32x5xf32>, vector<16x5xf32> -> vector<16x5xf32>
    %310 = vector.broadcast %306 : vector<16x1xf32> to vector<16x5xf32>
    %311 = arith.mulf %310, %309 : vector<16x5xf32>
    %312 = arith.addf %304, %311 : vector<16x5xf32>
    %c1_230 = arith.constant 1 : index
    %c0_231 = arith.constant 0 : index
    %c0_232 = arith.constant 0 : index
    %313 = vector.load %arg12[%c1_230, %c0_231, %c0_232] : memref<8x16x1xf32, #tpu.memory_space<vmem>>, vector<1x16x1xf32>
    %314 = vector.shape_cast %313 : vector<1x16x1xf32> to vector<16x1xf32>
    %c1_233 = arith.constant 1 : index
    %c0_234 = arith.constant 0 : index
    %c0_235 = arith.constant 0 : index
    %315 = vector.load %arg10[%c1_233, %c0_234, %c0_235] : memref<8x32x5xf32, #tpu.memory_space<vmem>>, vector<1x32x5xf32>
    %316 = vector.shape_cast %315 : vector<1x32x5xf32> to vector<32x5xf32>
    %cst_236 = arith.constant dense<0.000000e+00> : vector<16x5xf32>
    %317 = tpu.matmul %303, %316, %cst_236 {dimension_numbers = #tpu.dot_dimension_numbers<[1], [0], [0], [1], [0, 0, 1, 1], [], []>} : vector<16x32xf32>, vector<32x5xf32>, vector<16x5xf32> -> vector<16x5xf32>
    %318 = vector.broadcast %314 : vector<16x1xf32> to vector<16x5xf32>
    %319 = arith.mulf %318, %317 : vector<16x5xf32>
    %320 = arith.addf %312, %319 : vector<16x5xf32>
    %c2_237 = arith.constant 2 : index
    %c0_238 = arith.constant 0 : index
    %c0_239 = arith.constant 0 : index
    %321 = vector.load %arg12[%c2_237, %c0_238, %c0_239] : memref<8x16x1xf32, #tpu.memory_space<vmem>>, vector<1x16x1xf32>
    %322 = vector.shape_cast %321 : vector<1x16x1xf32> to vector<16x1xf32>
    %c2_240 = arith.constant 2 : index
    %c0_241 = arith.constant 0 : index
    %c0_242 = arith.constant 0 : index
    %323 = vector.load %arg10[%c2_240, %c0_241, %c0_242] : memref<8x32x5xf32, #tpu.memory_space<vmem>>, vector<1x32x5xf32>
    %324 = vector.shape_cast %323 : vector<1x32x5xf32> to vector<32x5xf32>
    %cst_243 = arith.constant dense<0.000000e+00> : vector<16x5xf32>
    %325 = tpu.matmul %303, %324, %cst_243 {dimension_numbers = #tpu.dot_dimension_numbers<[1], [0], [0], [1], [0, 0, 1, 1], [], []>} : vector<16x32xf32>, vector<32x5xf32>, vector<16x5xf32> -> vector<16x5xf32>
    %326 = vector.broadcast %322 : vector<16x1xf32> to vector<16x5xf32>
    %327 = arith.mulf %326, %325 : vector<16x5xf32>
    %328 = arith.addf %320, %327 : vector<16x5xf32>
    %c3_244 = arith.constant 3 : index
    %c0_245 = arith.constant 0 : index
    %c0_246 = arith.constant 0 : index
    %329 = vector.load %arg12[%c3_244, %c0_245, %c0_246] : memref<8x16x1xf32, #tpu.memory_space<vmem>>, vector<1x16x1xf32>
    %330 = vector.shape_cast %329 : vector<1x16x1xf32> to vector<16x1xf32>
    %c3_247 = arith.constant 3 : index
    %c0_248 = arith.constant 0 : index
    %c0_249 = arith.constant 0 : index
    %331 = vector.load %arg10[%c3_247, %c0_248, %c0_249] : memref<8x32x5xf32, #tpu.memory_space<vmem>>, vector<1x32x5xf32>
    %332 = vector.shape_cast %331 : vector<1x32x5xf32> to vector<32x5xf32>
    %cst_250 = arith.constant dense<0.000000e+00> : vector<16x5xf32>
    %333 = tpu.matmul %303, %332, %cst_250 {dimension_numbers = #tpu.dot_dimension_numbers<[1], [0], [0], [1], [0, 0, 1, 1], [], []>} : vector<16x32xf32>, vector<32x5xf32>, vector<16x5xf32> -> vector<16x5xf32>
    %334 = vector.broadcast %330 : vector<16x1xf32> to vector<16x5xf32>
    %335 = arith.mulf %334, %333 : vector<16x5xf32>
    %336 = arith.addf %328, %335 : vector<16x5xf32>
    %c4_251 = arith.constant 4 : index
    %c0_252 = arith.constant 0 : index
    %c0_253 = arith.constant 0 : index
    %337 = vector.load %arg12[%c4_251, %c0_252, %c0_253] : memref<8x16x1xf32, #tpu.memory_space<vmem>>, vector<1x16x1xf32>
    %338 = vector.shape_cast %337 : vector<1x16x1xf32> to vector<16x1xf32>
    %c4_254 = arith.constant 4 : index
    %c0_255 = arith.constant 0 : index
    %c0_256 = arith.constant 0 : index
    %339 = vector.load %arg10[%c4_254, %c0_255, %c0_256] : memref<8x32x5xf32, #tpu.memory_space<vmem>>, vector<1x32x5xf32>
    %340 = vector.shape_cast %339 : vector<1x32x5xf32> to vector<32x5xf32>
    %cst_257 = arith.constant dense<0.000000e+00> : vector<16x5xf32>
    %341 = tpu.matmul %303, %340, %cst_257 {dimension_numbers = #tpu.dot_dimension_numbers<[1], [0], [0], [1], [0, 0, 1, 1], [], []>} : vector<16x32xf32>, vector<32x5xf32>, vector<16x5xf32> -> vector<16x5xf32>
    %342 = vector.broadcast %338 : vector<16x1xf32> to vector<16x5xf32>
    %343 = arith.mulf %342, %341 : vector<16x5xf32>
    %344 = arith.addf %336, %343 : vector<16x5xf32>
    %c5_258 = arith.constant 5 : index
    %c0_259 = arith.constant 0 : index
    %c0_260 = arith.constant 0 : index
    %345 = vector.load %arg12[%c5_258, %c0_259, %c0_260] : memref<8x16x1xf32, #tpu.memory_space<vmem>>, vector<1x16x1xf32>
    %346 = vector.shape_cast %345 : vector<1x16x1xf32> to vector<16x1xf32>
    %c5_261 = arith.constant 5 : index
    %c0_262 = arith.constant 0 : index
    %c0_263 = arith.constant 0 : index
    %347 = vector.load %arg10[%c5_261, %c0_262, %c0_263] : memref<8x32x5xf32, #tpu.memory_space<vmem>>, vector<1x32x5xf32>
    %348 = vector.shape_cast %347 : vector<1x32x5xf32> to vector<32x5xf32>
    %cst_264 = arith.constant dense<0.000000e+00> : vector<16x5xf32>
    %349 = tpu.matmul %303, %348, %cst_264 {dimension_numbers = #tpu.dot_dimension_numbers<[1], [0], [0], [1], [0, 0, 1, 1], [], []>} : vector<16x32xf32>, vector<32x5xf32>, vector<16x5xf32> -> vector<16x5xf32>
    %350 = vector.broadcast %346 : vector<16x1xf32> to vector<16x5xf32>
    %351 = arith.mulf %350, %349 : vector<16x5xf32>
    %352 = arith.addf %344, %351 : vector<16x5xf32>
    %c6_265 = arith.constant 6 : index
    %c0_266 = arith.constant 0 : index
    %c0_267 = arith.constant 0 : index
    %353 = vector.load %arg12[%c6_265, %c0_266, %c0_267] : memref<8x16x1xf32, #tpu.memory_space<vmem>>, vector<1x16x1xf32>
    %354 = vector.shape_cast %353 : vector<1x16x1xf32> to vector<16x1xf32>
    %c6_268 = arith.constant 6 : index
    %c0_269 = arith.constant 0 : index
    %c0_270 = arith.constant 0 : index
    %355 = vector.load %arg10[%c6_268, %c0_269, %c0_270] : memref<8x32x5xf32, #tpu.memory_space<vmem>>, vector<1x32x5xf32>
    %356 = vector.shape_cast %355 : vector<1x32x5xf32> to vector<32x5xf32>
    %cst_271 = arith.constant dense<0.000000e+00> : vector<16x5xf32>
    %357 = tpu.matmul %303, %356, %cst_271 {dimension_numbers = #tpu.dot_dimension_numbers<[1], [0], [0], [1], [0, 0, 1, 1], [], []>} : vector<16x32xf32>, vector<32x5xf32>, vector<16x5xf32> -> vector<16x5xf32>
    %358 = vector.broadcast %354 : vector<16x1xf32> to vector<16x5xf32>
    %359 = arith.mulf %358, %357 : vector<16x5xf32>
    %360 = arith.addf %352, %359 : vector<16x5xf32>
    %c7_272 = arith.constant 7 : index
    %c0_273 = arith.constant 0 : index
    %c0_274 = arith.constant 0 : index
    %361 = vector.load %arg12[%c7_272, %c0_273, %c0_274] : memref<8x16x1xf32, #tpu.memory_space<vmem>>, vector<1x16x1xf32>
    %362 = vector.shape_cast %361 : vector<1x16x1xf32> to vector<16x1xf32>
    %c7_275 = arith.constant 7 : index
    %c0_276 = arith.constant 0 : index
    %c0_277 = arith.constant 0 : index
    %363 = vector.load %arg10[%c7_275, %c0_276, %c0_277] : memref<8x32x5xf32, #tpu.memory_space<vmem>>, vector<1x32x5xf32>
    %364 = vector.shape_cast %363 : vector<1x32x5xf32> to vector<32x5xf32>
    %cst_278 = arith.constant dense<0.000000e+00> : vector<16x5xf32>
    %365 = tpu.matmul %303, %364, %cst_278 {dimension_numbers = #tpu.dot_dimension_numbers<[1], [0], [0], [1], [0, 0, 1, 1], [], []>} : vector<16x32xf32>, vector<32x5xf32>, vector<16x5xf32> -> vector<16x5xf32>
    %366 = vector.broadcast %362 : vector<16x1xf32> to vector<16x5xf32>
    %367 = arith.mulf %366, %365 : vector<16x5xf32>
    %368 = arith.addf %360, %367 : vector<16x5xf32>
    %c0_279 = arith.constant 0 : index
    %c0_280 = arith.constant 0 : index
    %369 = vector.load %arg13[%c0_279, %c0_280] : memref<2x16xf32, #tpu.memory_space<vmem>>, vector<2x16xf32>
    %cst_281 = arith.constant dense<0.000000e+00> : vector<2x5xf32>
    %370 = tpu.matmul %369, %368, %cst_281 {dimension_numbers = #tpu.dot_dimension_numbers<[1], [0], [0], [1], [0, 0, 1, 1], [], []>} : vector<2x16xf32>, vector<16x5xf32>, vector<2x5xf32> -> vector<2x5xf32>
    %c0_282 = arith.constant 0 : index
    %c0_283 = arith.constant 0 : index
    %371 = vector.load %arg11[%c0_282, %c0_283] : memref<1x5xf32, #tpu.memory_space<vmem>>, vector<1x5xf32>
    %372 = vector.broadcast %371 : vector<1x5xf32> to vector<2x5xf32>
    %373 = arith.addf %370, %372 : vector<2x5xf32>
    %c0_284 = arith.constant 0 : index
    %c0_285 = arith.constant 0 : index
    %374 = vector.load %arg14[%c0_284, %c0_285] : memref<2x5xf32, #tpu.memory_space<vmem>>, vector<2x5xf32>
    tpu.vector_store %arg14[%c0_284, %c0_285], %373 {strides = array<i32>} : memref<2x5xf32, #tpu.memory_space<vmem>>, vector<2x5xf32>,
    return
  }
  func.func @transform_0(%arg0: i32) -> (i32, i32) {
    %c0_i32 = arith.constant 0 : i32
    %c0_i32_0 = arith.constant 0 : i32
    %c0_i32_1 = arith.constant 0 : i32
    return %c0_i32, %c0_i32_0 : i32, i32
  }
  func.func @transform_1(%arg0: i32) -> (i32, i32) {
    %c0_i32 = arith.constant 0 : i32
    %c0_i32_0 = arith.constant 0 : i32
    %c0_i32_1 = arith.constant 0 : i32
    return %c0_i32, %c0_i32_0 : i32, i32
  }
  func.func @transform_2(%arg0: i32) -> (i32, i32, i32) {
    %c0_i32 = arith.constant 0 : i32
    %c0_i32_0 = arith.constant 0 : i32
    %c0_i32_1 = arith.constant 0 : i32
    %c0_i32_2 = arith.constant 0 : i32
    return %c0_i32, %c0_i32_0, %c0_i32_1 : i32, i32, i32
  }
  func.func @transform_3(%arg0: i32) -> (i32, i32, i32) {
    %c0_i32 = arith.constant 0 : i32
    %c0_i32_0 = arith.constant 0 : i32
    %c0_i32_1 = arith.constant 0 : i32
    %c0_i32_2 = arith.constant 0 : i32
    return %c0_i32, %c0_i32_0, %c0_i32_1 : i32, i32, i32
  }
  func.func @transform_4(%arg0: i32) -> (i32, i32, i32) {
    %c0_i32 = arith.constant 0 : i32
    %c0_i32_0 = arith.constant 0 : i32
    %c0_i32_1 = arith.constant 0 : i32
    %c0_i32_2 = arith.constant 0 : i32
    return %c0_i32, %c0_i32_0, %c0_i32_1 : i32, i32, i32
  }
  func.func @transform_5(%arg0: i32) -> (i32, i32) {
    %c0_i32 = arith.constant 0 : i32
    %c0_i32_0 = arith.constant 0 : i32
    %c0_i32_1 = arith.constant 0 : i32
    return %c0_i32, %c0_i32_0 : i32, i32
  }
  func.func @transform_6(%arg0: i32) -> (i32, i32) {
    %c0_i32 = arith.constant 0 : i32
    %c0_i32_0 = arith.constant 0 : i32
    %c0_i32_1 = arith.constant 0 : i32
    return %c0_i32, %c0_i32_0 : i32, i32
  }
  func.func @transform_7(%arg0: i32) -> (i32, i32) {
    %c0_i32 = arith.constant 0 : i32
    %c0_i32_0 = arith.constant 0 : i32
    %c0_i32_1 = arith.constant 0 : i32
    return %c0_i32, %c0_i32_0 : i32, i32
  }
  func.func @transform_8(%arg0: i32) -> (i32, i32) {
    %c0_i32 = arith.constant 0 : i32
    %c0_i32_0 = arith.constant 0 : i32
    %c0_i32_1 = arith.constant 0 : i32
    return %c0_i32, %c0_i32_0 : i32, i32
  }
  func.func @transform_9(%arg0: i32) -> (i32, i32, i32) {
    %c0_i32 = arith.constant 0 : i32
    %c0_i32_0 = arith.constant 0 : i32
    %c0_i32_1 = arith.constant 0 : i32
    %c0_i32_2 = arith.constant 0 : i32
    return %c0_i32, %c0_i32_0, %c0_i32_1 : i32, i32, i32
  }
  func.func @transform_10(%arg0: i32) -> (i32, i32) {
    %c0_i32 = arith.constant 0 : i32
    %c0_i32_0 = arith.constant 0 : i32
    %c0_i32_1 = arith.constant 0 : i32
    return %c0_i32, %c0_i32_0 : i32, i32
  }
  func.func @transform_11(%arg0: i32) -> (i32, i32, i32) {
    %c0_i32 = arith.constant 0 : i32
    %c0_i32_0 = arith.constant 0 : i32
    %c0_i32_1 = arith.constant 0 : i32
    %c0_i32_2 = arith.constant 0 : i32
    return %c0_i32, %c0_i32_0, %c0_i32_1 : i32, i32, i32
  }
  func.func @transform_12(%arg0: i32) -> (i32, i32) {
    %c0_i32 = arith.constant 0 : i32
    %c0_i32_0 = arith.constant 0 : i32
    %c0_i32_1 = arith.constant 0 : i32
    return %c0_i32, %c0_i32_0 : i32, i32
  }
  func.func @transform_13(%arg0: i32) -> (i32, i32) {
    %c0_i32 = arith.constant 0 : i32
    %c0_i32_0 = arith.constant 0 : i32
    %c0_i32_1 = arith.constant 0 : i32
    return %c0_i32, %c0_i32_0 : i32, i32
  }
}

</mosaic_0001>

<llo_original>
// kernel: _lambda_.1
$region0: #{_lambda_.1}
  #allocation0 [shape = 'u32[]', space=smem, size = 0x4, offset = 0x4, fixed_abs, tag = 'smem constant byte address 0x4 - core index']
  #allocation1 [shape = 'u32[72,128]{1,0:T(1,128)}', space=vmem, size = 0x9000, scoped, tag = 'internal scratch']
  %s0 = inlined_call_operand.vmem [shape: f32[16,32], index: 0, kind: input, shape index: {}]
  %s1 = inlined_call_operand.vmem [shape: f32[8,32], index: 1, kind: input, shape index: {}]
  %s2 = inlined_call_operand.vmem [shape: f32[12,32,8], index: 2, kind: input, shape index: {}]
  %s3 = inlined_call_operand.vmem [shape: f32[12,1,8], index: 3, kind: input, shape index: {}]
  %s4 = inlined_call_operand.vmem [shape: f32[4,8,32], index: 4, kind: input, shape index: {}]
  %s5 = inlined_call_operand.vmem [shape: f32[1,32], index: 5, kind: input, shape index: {}]
  %s6 = inlined_call_operand.vmem [shape: f32[1,32], index: 6, kind: input, shape index: {}]
  %s7 = inlined_call_operand.vmem [shape: f32[1,32], index: 7, kind: input, shape index: {}]
  %s8 = inlined_call_operand.vmem [shape: f32[64,64], index: 8, kind: input, shape index: {}]
  %s9 = inlined_call_operand.vmem [shape: f32[8,32,5], index: 9, kind: input, shape index: {}]
  %s10 = inlined_call_operand.vmem [shape: f32[1,5], index: 10, kind: input, shape index: {}]
  %s11 = inlined_call_operand.vmem [shape: f32[8,16,1], index: 11, kind: input, shape index: {}]
  %s12 = inlined_call_operand.vmem [shape: f32[2,16], index: 12, kind: input, shape index: {}]
  %s13 = inlined_call_operand.hbm [shape: f32[2,5], index: 13, kind: output, shape index: {}]
  %s14 = sld [smem:[#allocation0]]
  $region62: #{_lambda_.1} parent=0
    _
  %s16 = ssub.s32 1, %s14
  %s17 = scalar_select 0, %s16, %s14
  $region1: #{_lambda_.1} parent=0
    #allocation2 [shape = 'u8[1024]{0}', space=vmem, size = 0x400, scoped, tag = 'output window, operand 0, single buffered']
    #allocation3 [shape = 's32[1]{0}', space=sflag, size = 0x4, scoped, tag = 'scoped memory for _lambda_.1']
    %18 = vsyncpa [#allocation3], 0
    // Predicated region
    $region2: #{_lambda_.1} parent=1 // pred_check
      _
    $region3: #{_lambda_.1} parent=1 // pred_check_branch
      %20 = sbr.rel (0) target = $region5
    $region4: #{_lambda_.1} parent=1 // pred_region
      _
    $region5: #{_lambda_.1} parent=1 // pred_fallthru
      _
    // Predicated region
    $region6: #{_lambda_.1} parent=1 // pred_check
      _
    $region7: #{_lambda_.1} parent=1 // pred_check_branch
      %22 = sbr.rel (0) target = $region9
    $region8: #{_lambda_.1} parent=1 // pred_region
      _
    $region9: #{_lambda_.1} parent=1 // pred_fallthru
      _
    // Predicated region
    $region10: #{_lambda_.1} parent=1 // pred_check
      _
    $region11: #{_lambda_.1} parent=1 // pred_check_branch
      %24 = sbr.rel (0) target = $region13
    $region12: #{_lambda_.1} parent=1 // pred_region
      _
    $region13: #{_lambda_.1} parent=1 // pred_fallthru
      _
    // Predicated region
    $region14: #{_lambda_.1} parent=1 // pred_check
      _
    $region15: #{_lambda_.1} parent=1 // pred_check_branch
      %26 = sbr.rel (0) target = $region17
    $region16: #{_lambda_.1} parent=1 // pred_region
      _
    $region17: #{_lambda_.1} parent=1 // pred_fallthru
      _
    // Predicated region
    $region18: #{_lambda_.1} parent=1 // pred_check
      _
    $region19: #{_lambda_.1} parent=1 // pred_check_branch
      %28 = sbr.rel (0) target = $region21
    $region20: #{_lambda_.1} parent=1 // pred_region
      _
    $region21: #{_lambda_.1} parent=1 // pred_fallthru
      _
    // Predicated region
    $region22: #{_lambda_.1} parent=1 // pred_check
      _
    $region23: #{_lambda_.1} parent=1 // pred_check_branch
      %30 = sbr.rel (0) target = $region25
    $region24: #{_lambda_.1} parent=1 // pred_region
      _
    $region25: #{_lambda_.1} parent=1 // pred_fallthru
      _
    // Predicated region
    $region26: #{_lambda_.1} parent=1 // pred_check
      _
    $region27: #{_lambda_.1} parent=1 // pred_check_branch
      %32 = sbr.rel (0) target = $region29
    $region28: #{_lambda_.1} parent=1 // pred_region
      _
    $region29: #{_lambda_.1} parent=1 // pred_fallthru
      _
    // Predicated region
    $region30: #{_lambda_.1} parent=1 // pred_check
      _
    $region31: #{_lambda_.1} parent=1 // pred_check_branch
      %34 = sbr.rel (0) target = $region33
    $region32: #{_lambda_.1} parent=1 // pred_region
      _
    $region33: #{_lambda_.1} parent=1 // pred_fallthru
      _
    // Predicated region
    $region34: #{_lambda_.1} parent=1 // pred_check
      _
    $region35: #{_lambda_.1} parent=1 // pred_check_branch
      %36 = sbr.rel (0) target = $region37
    $region36: #{_lambda_.1} parent=1 // pred_region
      _
    $region37: #{_lambda_.1} parent=1 // pred_fallthru
      _
    // Predicated region
    $region38: #{_lambda_.1} parent=1 // pred_check
      _
    $region39: #{_lambda_.1} parent=1 // pred_check_branch
      %38 = sbr.rel (0) target = $region41
    $region40: #{_lambda_.1} parent=1 // pred_region
      _
    $region41: #{_lambda_.1} parent=1 // pred_fallthru
      _
    // Predicated region
    $region42: #{_lambda_.1} parent=1 // pred_check
      _
    $region43: #{_lambda_.1} parent=1 // pred_check_branch
      %40 = sbr.rel (0) target = $region45
    $region44: #{_lambda_.1} parent=1 // pred_region
      _
    $region45: #{_lambda_.1} parent=1 // pred_fallthru
      _
    // Predicated region
    $region46: #{_lambda_.1} parent=1 // pred_check
      _
    $region47: #{_lambda_.1} parent=1 // pred_check_branch
      %42 = sbr.rel (0) target = $region49
    $region48: #{_lambda_.1} parent=1 // pred_region
      _
    $region49: #{_lambda_.1} parent=1 // pred_fallthru
      _
    // Predicated region
    $region50: #{_lambda_.1} parent=1 // pred_check
      _
    $region51: #{_lambda_.1} parent=1 // pred_check_branch
      %44 = sbr.rel (0) target = $region53
    $region52: #{_lambda_.1} parent=1 // pred_region
      _
    $region53: #{_lambda_.1} parent=1 // pred_fallthru
      _
    %v45 = vld [vmem:[%s1] sm:$0xff]
    %v46 = vld [vmem:[%s0] sm:$0xff]
    %v47 = vld [vmem:[%s0 + $0x8] sm:$0xff]
    %v48 = vmul.f32 %v46, 5.656854
    %v49 = vmul.f32 %v47, 5.656854
    %v50 = vadd.f32 %v48, %v45
    %v51 = vadd.f32 %v49, %v45
    %v52 = vld [vmem:[%s8] sm:$0xff]
    %v53 = vld [vmem:[%s8 + $0x8] sm:$0xff]
    %v54 = vld [vmem:[%s8 + $0x10] sm:$0xff]
    %v55 = vld [vmem:[%s8 + $0x18] sm:$0xff]
    %v56 = vld [vmem:[%s8 + $0x20] sm:$0xff]
    %v57 = vld [vmem:[%s8 + $0x28] sm:$0xff]
    %v58 = vld [vmem:[%s8 + $0x30] sm:$0xff]
    %v59 = vld [vmem:[%s8 + $0x38] sm:$0xff]
    %v60 = vld [vmem:[%s5] sm:$0x1]
    %v61 = vld [vmem:[%s6] sm:$0x1]
    %v62 = vld [vmem:[%s7] sm:$0x1]
    %v63 = vld [vmem:[%s2] sm:$0xff]
    %v64 = vld [vmem:[%s2 + $0x8] sm:$0xff]
    %v65 = vld [vmem:[%s2 + $0x10] sm:$0xff]
    %v66 = vld [vmem:[%s2 + $0x18] sm:$0xff]
    %v67 = vld [vmem:[%s3] sm:$0x1]
    %v69 = vperm.slane %v67, 0
    %vm71 = vcmask 261120
    %v73 = vsel %vm71, %v50, 0
    %v76 = vsel %vm71, %v51, 0
    %78 = vmatpush.msra.mxu0 0.0
    %79 = vmatpush.msra.mxu0 0.0
    %80 = vmatpush.msra.mxu0 0.0
    %81 = vmatpush.msra.mxu0 0.0
    %82 = vmatpush.msra.mxu0 0.0
    %83 = vmatpush.msra.mxu0 0.0
    %84 = vmatpush.msra.mxu0 0.0
    %85 = vmatpush.msra.mxu0 0.0
    %86 = vmatpush.msra.mxu0 0.0
    %87 = vmatpush.msra.mxu0 0.0
    %88 = vmatpush.msra.mxu0 0.0
    %89 = vmatpush.msra.mxu0 0.0
    %90 = vmatpush.msra.mxu0 %v66
    %91 = vmatpush.msra.mxu0 %v65
    %92 = vmatpush.msra.mxu0 %v64
    %93 = vmatpush.msra.mxu0 %v63
    %94 = vmatmul.f32.gmra.mxu0 %v73
    %v95 = vpop.f32.mrf.mxu0
    %v96 = vadd.f32 %v69, %v95
    %97 = vmatmul.f32.gmra.mxu0 %v76
    %v98 = vpop.f32.mrf.mxu0
    %v99 = vadd.f32 %v69, %v98
    %100 = vdwg.mxu0
    %s101 = scalar_lea.vmem %s2, 32
    %v102 = vld [vmem:[%s101] sm:$0xff]
    %v103 = vld [vmem:[%s101 + $0x8] sm:$0xff]
    %v104 = vld [vmem:[%s101 + $0x10] sm:$0xff]
    %v105 = vld [vmem:[%s101 + $0x18] sm:$0xff]
    %s106 = scalar_lea.vmem %s3, 1
    %v107 = vld [vmem:[%s106] sm:$0x1]
    %v109 = vperm.slane %v107, 0
    %111 = vmatpush.msra.mxu0 0.0
    %112 = vmatpush.msra.mxu0 0.0
    %113 = vmatpush.msra.mxu0 0.0
    %114 = vmatpush.msra.mxu0 0.0
    %115 = vmatpush.msra.mxu0 0.0
    %116 = vmatpush.msra.mxu0 0.0
    %117 = vmatpush.msra.mxu0 0.0
    %118 = vmatpush.msra.mxu0 0.0
    %119 = vmatpush.msra.mxu0 0.0
    %120 = vmatpush.msra.mxu0 0.0
    %121 = vmatpush.msra.mxu0 0.0
    %122 = vmatpush.msra.mxu0 0.0
    %123 = vmatpush.msra.mxu0 %v105
    %124 = vmatpush.msra.mxu0 %v104
    %125 = vmatpush.msra.mxu0 %v103
    %126 = vmatpush.msra.mxu0 %v102
    %127 = vmatmul.f32.gmra.mxu0 %v73
    %v128 = vpop.f32.mrf.mxu0
    %v129 = vadd.f32 %v109, %v128
    %130 = vmatmul.f32.gmra.mxu0 %v76
    %v131 = vpop.f32.mrf.mxu0
    %v132 = vadd.f32 %v109, %v131
    %133 = vdwg.mxu0
    %s134 = scalar_lea.vmem %s2, 64
    %v135 = vld [vmem:[%s134] sm:$0xff]
    %v136 = vld [vmem:[%s134 + $0x8] sm:$0xff]
    %v137 = vld [vmem:[%s134 + $0x10] sm:$0xff]
    %v138 = vld [vmem:[%s134 + $0x18] sm:$0xff]
    %s139 = scalar_lea.vmem %s3, 2
    %v140 = vld [vmem:[%s139] sm:$0x1]
    %v142 = vperm.slane %v140, 0
    %144 = vmatpush.msra.mxu0 0.0
    %145 = vmatpush.msra.mxu0 0.0
    %146 = vmatpush.msra.mxu0 0.0
    %147 = vmatpush.msra.mxu0 0.0
    %148 = vmatpush.msra.mxu0 0.0
    %149 = vmatpush.msra.mxu0 0.0
    %150 = vmatpush.msra.mxu0 0.0
    %151 = vmatpush.msra.mxu0 0.0
    %152 = vmatpush.msra.mxu0 0.0
    %153 = vmatpush.msra.mxu0 0.0
    %154 = vmatpush.msra.mxu0 0.0
    %155 = vmatpush.msra.mxu0 0.0
    %156 = vmatpush.msra.mxu0 %v138
    %157 = vmatpush.msra.mxu0 %v137
    %158 = vmatpush.msra.mxu0 %v136
    %159 = vmatpush.msra.mxu0 %v135
    %160 = vmatmul.f32.gmra.mxu0 %v73
    %v161 = vpop.f32.mrf.mxu0
    %v162 = vadd.f32 %v142, %v161
    %163 = vmatmul.f32.gmra.mxu0 %v76
    %v164 = vpop.f32.mrf.mxu0
    %v165 = vadd.f32 %v142, %v164
    %166 = vdwg.mxu0
    %s167 = scalar_lea.vmem %s2, 96
    %v168 = vld [vmem:[%s167] sm:$0xff]
    %v169 = vld [vmem:[%s167 + $0x8] sm:$0xff]
    %v170 = vld [vmem:[%s167 + $0x10] sm:$0xff]
    %v171 = vld [vmem:[%s167 + $0x18] sm:$0xff]
    %s172 = scalar_lea.vmem %s3, 3
    %v173 = vld [vmem:[%s172] sm:$0x1]
    %v175 = vperm.slane %v173, 0
    %177 = vmatpush.msra.mxu0 0.0
    %178 = vmatpush.msra.mxu0 0.0
    %179 = vmatpush.msra.mxu0 0.0
    %180 = vmatpush.msra.mxu0 0.0
    %181 = vmatpush.msra.mxu0 0.0
    %182 = vmatpush.msra.mxu0 0.0
    %183 = vmatpush.msra.mxu0 0.0
    %184 = vmatpush.msra.mxu0 0.0
    %185 = vmatpush.msra.mxu0 0.0
    %186 = vmatpush.msra.mxu0 0.0
    %187 = vmatpush.msra.mxu0 0.0
    %188 = vmatpush.msra.mxu0 0.0
    %189 = vmatpush.msra.mxu0 %v171
    %190 = vmatpush.msra.mxu0 %v170
    %191 = vmatpush.msra.mxu0 %v169
    %192 = vmatpush.msra.mxu0 %v168
    %193 = vmatmul.f32.gmra.mxu0 %v73
    %v194 = vpop.f32.mrf.mxu0
    %v195 = vadd.f32 %v175, %v194
    %196 = vmatmul.f32.gmra.mxu0 %v76
    %v197 = vpop.f32.mrf.mxu0
    %v198 = vadd.f32 %v175, %v197
    %199 = vdwg.mxu0
    %s200 = scalar_lea.vmem %s2, 128
    %v201 = vld [vmem:[%s200] sm:$0xff]
    %v202 = vld [vmem:[%s200 + $0x8] sm:$0xff]
    %v203 = vld [vmem:[%s200 + $0x10] sm:$0xff]
    %v204 = vld [vmem:[%s200 + $0x18] sm:$0xff]
    %s205 = scalar_lea.vmem %s3, 4
    %v206 = vld [vmem:[%s205] sm:$0x1]
    %v208 = vperm.slane %v206, 0
    %210 = vmatpush.msra.mxu0 0.0
    %211 = vmatpush.msra.mxu0 0.0
    %212 = vmatpush.msra.mxu0 0.0
    %213 = vmatpush.msra.mxu0 0.0
    %214 = vmatpush.msra.mxu0 0.0
    %215 = vmatpush.msra.mxu0 0.0
    %216 = vmatpush.msra.mxu0 0.0
    %217 = vmatpush.msra.mxu0 0.0
    %218 = vmatpush.msra.mxu0 0.0
    %219 = vmatpush.msra.mxu0 0.0
    %220 = vmatpush.msra.mxu0 0.0
    %221 = vmatpush.msra.mxu0 0.0
    %222 = vmatpush.msra.mxu0 %v204
    %223 = vmatpush.msra.mxu0 %v203
    %224 = vmatpush.msra.mxu0 %v202
    %225 = vmatpush.msra.mxu0 %v201
    %226 = vmatmul.f32.gmra.mxu0 %v73
    %v227 = vpop.f32.mrf.mxu0
    %v228 = vadd.f32 %v208, %v227
    %229 = vmatmul.f32.gmra.mxu0 %v76
    %v230 = vpop.f32.mrf.mxu0
    %v231 = vadd.f32 %v208, %v230
    %232 = vdwg.mxu0
    %s233 = scalar_lea.vmem %s2, 160
    %v234 = vld [vmem:[%s233] sm:$0xff]
    %v235 = vld [vmem:[%s233 + $0x8] sm:$0xff]
    %v236 = vld [vmem:[%s233 + $0x10] sm:$0xff]
    %v237 = vld [vmem:[%s233 + $0x18] sm:$0xff]
    %s238 = scalar_lea.vmem %s3, 5
    %v239 = vld [vmem:[%s238] sm:$0x1]
    %v241 = vperm.slane %v239, 0
    %243 = vmatpush.msra.mxu0 0.0
    %244 = vmatpush.msra.mxu0 0.0
    %245 = vmatpush.msra.mxu0 0.0
    %246 = vmatpush.msra.mxu0 0.0
    %247 = vmatpush.msra.mxu0 0.0
    %248 = vmatpush.msra.mxu0 0.0
    %249 = vmatpush.msra.mxu0 0.0
    %250 = vmatpush.msra.mxu0 0.0
    %251 = vmatpush.msra.mxu0 0.0
    %252 = vmatpush.msra.mxu0 0.0
    %253 = vmatpush.msra.mxu0 0.0
    %254 = vmatpush.msra.mxu0 0.0
    %255 = vmatpush.msra.mxu0 %v237
    %256 = vmatpush.msra.mxu0 %v236
    %257 = vmatpush.msra.mxu0 %v235
    %258 = vmatpush.msra.mxu0 %v234
    %259 = vmatmul.f32.gmra.mxu0 %v73
    %v260 = vpop.f32.mrf.mxu0
    %v261 = vadd.f32 %v241, %v260
    %262 = vmatmul.f32.gmra.mxu0 %v76
    %v263 = vpop.f32.mrf.mxu0
    %v264 = vadd.f32 %v241, %v263
    %265 = vdwg.mxu0
    %s266 = scalar_lea.vmem %s2, 192
    %v267 = vld [vmem:[%s266] sm:$0xff]
    %v268 = vld [vmem:[%s266 + $0x8] sm:$0xff]
    %v269 = vld [vmem:[%s266 + $0x10] sm:$0xff]
    %v270 = vld [vmem:[%s266 + $0x18] sm:$0xff]
    %s271 = scalar_lea.vmem %s3, 6
    %v272 = vld [vmem:[%s271] sm:$0x1]
    %v274 = vperm.slane %v272, 0
    %276 = vmatpush.msra.mxu0 0.0
    %277 = vmatpush.msra.mxu0 0.0
    %278 = vmatpush.msra.mxu0 0.0
    %279 = vmatpush.msra.mxu0 0.0
    %280 = vmatpush.msra.mxu0 0.0
    %281 = vmatpush.msra.mxu0 0.0
    %282 = vmatpush.msra.mxu0 0.0
    %283 = vmatpush.msra.mxu0 0.0
    %284 = vmatpush.msra.mxu0 0.0
    %285 = vmatpush.msra.mxu0 0.0
    %286 = vmatpush.msra.mxu0 0.0
    %287 = vmatpush.msra.mxu0 0.0
    %288 = vmatpush.msra.mxu0 %v270
    %289 = vmatpush.msra.mxu0 %v269
    %290 = vmatpush.msra.mxu0 %v268
    %291 = vmatpush.msra.mxu0 %v267
    %292 = vmatmul.f32.gmra.mxu0 %v73
    %v293 = vpop.f32.mrf.mxu0
    %v294 = vadd.f32 %v274, %v293
    %295 = vmatmul.f32.gmra.mxu0 %v76
    %v296 = vpop.f32.mrf.mxu0
    %v297 = vadd.f32 %v274, %v296
    %298 = vdwg.mxu0
    %s299 = scalar_lea.vmem %s2, 224
    %v300 = vld [vmem:[%s299] sm:$0xff]
    %v301 = vld [vmem:[%s299 + $0x8] sm:$0xff]
    %v302 = vld [vmem:[%s299 + $0x10] sm:$0xff]
    %v303 = vld [vmem:[%s299 + $0x18] sm:$0xff]
    %s304 = scalar_lea.vmem %s3, 7
    %v305 = vld [vmem:[%s304] sm:$0x1]
    %v307 = vperm.slane %v305, 0
    %309 = vmatpush.msra.mxu0 0.0
    %310 = vmatpush.msra.mxu0 0.0
    %311 = vmatpush.msra.mxu0 0.0
    %312 = vmatpush.msra.mxu0 0.0
    %313 = vmatpush.msra.mxu0 0.0
    %314 = vmatpush.msra.mxu0 0.0
    %315 = vmatpush.msra.mxu0 0.0
    %316 = vmatpush.msra.mxu0 0.0
    %317 = vmatpush.msra.mxu0 0.0
    %318 = vmatpush.msra.mxu0 0.0
    %319 = vmatpush.msra.mxu0 0.0
    %320 = vmatpush.msra.mxu0 0.0
    %321 = vmatpush.msra.mxu0 %v303
    %322 = vmatpush.msra.mxu0 %v302
    %323 = vmatpush.msra.mxu0 %v301
    %324 = vmatpush.msra.mxu0 %v300
    %325 = vmatmul.f32.gmra.mxu0 %v73
    %v326 = vpop.f32.mrf.mxu0
    %v327 = vadd.f32 %v307, %v326
    %328 = vmatmul.f32.gmra.mxu0 %v76
    %v329 = vpop.f32.mrf.mxu0
    %v330 = vadd.f32 %v307, %v329
    %331 = vdwg.mxu0
    %s332 = scalar_lea.vmem %s2, 256
    %v333 = vld [vmem:[%s332] sm:$0xff]
    %v334 = vld [vmem:[%s332 + $0x8] sm:$0xff]
    %v335 = vld [vmem:[%s332 + $0x10] sm:$0xff]
    %v336 = vld [vmem:[%s332 + $0x18] sm:$0xff]
    %s337 = scalar_lea.vmem %s3, 8
    %v338 = vld [vmem:[%s337] sm:$0x1]
    %v340 = vperm.slane %v338, 0
    %342 = vmatpush.msra.mxu0 0.0
    %343 = vmatpush.msra.mxu0 0.0
    %344 = vmatpush.msra.mxu0 0.0
    %345 = vmatpush.msra.mxu0 0.0
    %346 = vmatpush.msra.mxu0 0.0
    %347 = vmatpush.msra.mxu0 0.0
    %348 = vmatpush.msra.mxu0 0.0
    %349 = vmatpush.msra.mxu0 0.0
    %350 = vmatpush.msra.mxu0 0.0
    %351 = vmatpush.msra.mxu0 0.0
    %352 = vmatpush.msra.mxu0 0.0
    %353 = vmatpush.msra.mxu0 0.0
    %354 = vmatpush.msra.mxu0 %v336
    %355 = vmatpush.msra.mxu0 %v335
    %356 = vmatpush.msra.mxu0 %v334
    %357 = vmatpush.msra.mxu0 %v333
    %358 = vmatmul.f32.gmra.mxu0 %v73
    %v359 = vpop.f32.mrf.mxu0
    %v360 = vadd.f32 %v340, %v359
    %361 = vmatmul.f32.gmra.mxu0 %v76
    %v362 = vpop.f32.mrf.mxu0
    %v363 = vadd.f32 %v340, %v362
    %364 = vdwg.mxu0
    %s365 = scalar_lea.vmem %s2, 288
    %v366 = vld [vmem:[%s365] sm:$0xff]
    %v367 = vld [vmem:[%s365 + $0x8] sm:$0xff]
    %v368 = vld [vmem:[%s365 + $0x10] sm:$0xff]
    %v369 = vld [vmem:[%s365 + $0x18] sm:$0xff]
    %s370 = scalar_lea.vmem %s3, 9
    %v371 = vld [vmem:[%s370] sm:$0x1]
    %v373 = vperm.slane %v371, 0
    %375 = vmatpush.msra.mxu0 0.0
    %376 = vmatpush.msra.mxu0 0.0
    %377 = vmatpush.msra.mxu0 0.0
    %378 = vmatpush.msra.mxu0 0.0
    %379 = vmatpush.msra.mxu0 0.0
    %380 = vmatpush.msra.mxu0 0.0
    %381 = vmatpush.msra.mxu0 0.0
    %382 = vmatpush.msra.mxu0 0.0
    %383 = vmatpush.msra.mxu0 0.0
    %384 = vmatpush.msra.mxu0 0.0
    %385 = vmatpush.msra.mxu0 0.0
    %386 = vmatpush.msra.mxu0 0.0
    %387 = vmatpush.msra.mxu0 %v369
    %388 = vmatpush.msra.mxu0 %v368
    %389 = vmatpush.msra.mxu0 %v367
    %390 = vmatpush.msra.mxu0 %v366
    %391 = vmatmul.f32.gmra.mxu0 %v73
    %v392 = vpop.f32.mrf.mxu0
    %v393 = vadd.f32 %v373, %v392
    %394 = vmatmul.f32.gmra.mxu0 %v76
    %v395 = vpop.f32.mrf.mxu0
    %v396 = vadd.f32 %v373, %v395
    %397 = vdwg.mxu0
    %s398 = scalar_lea.vmem %s2, 320
    %v399 = vld [vmem:[%s398] sm:$0xff]
    %v400 = vld [vmem:[%s398 + $0x8] sm:$0xff]
    %v401 = vld [vmem:[%s398 + $0x10] sm:$0xff]
    %v402 = vld [vmem:[%s398 + $0x18] sm:$0xff]
    %s403 = scalar_lea.vmem %s3, 10
    %v404 = vld [vmem:[%s403] sm:$0x1]
    %v406 = vperm.slane %v404, 0
    %408 = vmatpush.msra.mxu0 0.0
    %409 = vmatpush.msra.mxu0 0.0
    %410 = vmatpush.msra.mxu0 0.0
    %411 = vmatpush.msra.mxu0 0.0
    %412 = vmatpush.msra.mxu0 0.0
    %413 = vmatpush.msra.mxu0 0.0
    %414 = vmatpush.msra.mxu0 0.0
    %415 = vmatpush.msra.mxu0 0.0
    %416 = vmatpush.msra.mxu0 0.0
    %417 = vmatpush.msra.mxu0 0.0
    %418 = vmatpush.msra.mxu0 0.0
    %419 = vmatpush.msra.mxu0 0.0
    %420 = vmatpush.msra.mxu0 %v402
    %421 = vmatpush.msra.mxu0 %v401
    %422 = vmatpush.msra.mxu0 %v400
    %423 = vmatpush.msra.mxu0 %v399
    %424 = vmatmul.f32.gmra.mxu0 %v73
    %v425 = vpop.f32.mrf.mxu0
    %v426 = vadd.f32 %v406, %v425
    %427 = vmatmul.f32.gmra.mxu0 %v76
    %v428 = vpop.f32.mrf.mxu0
    %v429 = vadd.f32 %v406, %v428
    %430 = vdwg.mxu0
    %s431 = scalar_lea.vmem %s2, 352
    %v432 = vld [vmem:[%s431] sm:$0xff]
    %v433 = vld [vmem:[%s431 + $0x8] sm:$0xff]
    %v434 = vld [vmem:[%s431 + $0x10] sm:$0xff]
    %v435 = vld [vmem:[%s431 + $0x18] sm:$0xff]
    %s436 = scalar_lea.vmem %s3, 11
    %v437 = vld [vmem:[%s436] sm:$0x1]
    %v439 = vperm.slane %v437, 0
    %441 = vmatpush.msra.mxu0 0.0
    %442 = vmatpush.msra.mxu0 0.0
    %443 = vmatpush.msra.mxu0 0.0
    %444 = vmatpush.msra.mxu0 0.0
    %445 = vmatpush.msra.mxu0 0.0
    %446 = vmatpush.msra.mxu0 0.0
    %447 = vmatpush.msra.mxu0 0.0
    %448 = vmatpush.msra.mxu0 0.0
    %449 = vmatpush.msra.mxu0 0.0
    %450 = vmatpush.msra.mxu0 0.0
    %451 = vmatpush.msra.mxu0 0.0
    %452 = vmatpush.msra.mxu0 0.0
    %453 = vmatpush.msra.mxu0 %v435
    %454 = vmatpush.msra.mxu0 %v434
    %455 = vmatpush.msra.mxu0 %v433
    %456 = vmatpush.msra.mxu0 %v432
    %457 = vmatmul.f32.gmra.mxu0 %v73
    %v458 = vpop.f32.mrf.mxu0
    %v459 = vadd.f32 %v439, %v458
    %460 = vmatmul.f32.gmra.mxu0 %v76
    %v461 = vpop.f32.mrf.mxu0
    %v462 = vadd.f32 %v439, %v461
    %463 = vdwg.mxu0
    %vm464 = vcmask 64512
    %v466 = vsel %vm464, %v96, 0
    %v469 = vsel %vm464, %v99, 0
    %v472 = vsel %vm464, %v129, 0
    %v475 = vsel %vm464, %v132, 0
    %v478 = vsel %vm464, %v162, 0
    %v481 = vsel %vm464, %v165, 0
    %v484 = vsel %vm464, %v195, 0
    %v487 = vsel %vm464, %v198, 0
    %v490 = vsel %vm464, %v228, 0
    %v493 = vsel %vm464, %v231, 0
    %v496 = vsel %vm464, %v261, 0
    %v499 = vsel %vm464, %v264, 0
    %v502 = vsel %vm464, %v294, 0
    %v505 = vsel %vm464, %v297, 0
    %v508 = vsel %vm464, %v327, 0
    %v511 = vsel %vm464, %v330, 0
    %513 = vmatpush.xpose.msra.mxu0 0.0
    %514 = vmatpush.xpose.msra.mxu0 0.0
    %515 = vmatpush.xpose.msra.mxu0 0.0
    %516 = vmatpush.xpose.msra.mxu0 0.0
    %517 = vmatpush.xpose.msra.mxu0 0.0
    %518 = vmatpush.xpose.msra.mxu0 0.0
    %519 = vmatpush.xpose.msra.mxu0 0.0
    %520 = vmatpush.xpose.msra.mxu0 0.0
    %521 = vmatpush.xpose.msra.mxu0 %v511
    %522 = vmatpush.xpose.msra.mxu0 %v508
    %523 = vmatpush.xpose.msra.mxu0 %v505
    %524 = vmatpush.xpose.msra.mxu0 %v502
    %525 = vmatpush.xpose.msra.mxu0 %v499
    %526 = vmatpush.xpose.msra.mxu0 %v496
    %527 = vmatpush.xpose.msra.mxu0 %v493
    %528 = vmatpush.xpose.msra.mxu0 %v490
    %529 = vmatmul.f32.gmra.mxu0 %v466
    %v530 = vpop.f32.mrf.mxu0
    %v531 = vadd.f32 %v52, %v530
    %532 = vmatmul.f32.gmra.mxu0 %v469
    %v533 = vpop.f32.mrf.mxu0
    %v534 = vadd.f32 %v53, %v533
    %535 = vmatmul.f32.gmra.mxu0 %v472
    %v536 = vpop.f32.mrf.mxu0
    %v537 = vadd.f32 %v54, %v536
    %538 = vmatmul.f32.gmra.mxu0 %v475
    %v539 = vpop.f32.mrf.mxu0
    %v540 = vadd.f32 %v55, %v539
    %541 = vmatmul.f32.gmra.mxu0 %v478
    %v542 = vpop.f32.mrf.mxu0
    %v543 = vadd.f32 %v56, %v542
    %544 = vmatmul.f32.gmra.mxu0 %v481
    %v545 = vpop.f32.mrf.mxu0
    %v546 = vadd.f32 %v57, %v545
    %547 = vmatmul.f32.gmra.mxu0 %v484
    %v548 = vpop.f32.mrf.mxu0
    %v549 = vadd.f32 %v58, %v548
    %550 = vmatmul.f32.gmra.mxu0 %v487
    %v551 = vpop.f32.mrf.mxu0
    %v552 = vadd.f32 %v59, %v551
    %553 = vdwg.mxu0
    %vm554 = vcmask 523264
    %v555 = vsel %vm554, %v531, -inf
    %556 = vmax.xlane.f32.xlu0 %v555
    %v557 = vpop.xlane.xlu0 %556
    %v558 = vsel %vm554, %v534, -inf
    %559 = vmax.xlane.f32.xlu0 %v558
    %v560 = vpop.xlane.xlu0 %559
    %v561 = vsel %vm554, %v537, -inf
    %562 = vmax.xlane.f32.xlu0 %v561
    %v563 = vpop.xlane.xlu0 %562
    %v564 = vsel %vm554, %v540, -inf
    %565 = vmax.xlane.f32.xlu0 %v564
    %v566 = vpop.xlane.xlu0 %565
    %v567 = vsel %vm554, %v543, -inf
    %568 = vmax.xlane.f32.xlu0 %v567
    %v569 = vpop.xlane.xlu0 %568
    %v570 = vsel %vm554, %v546, -inf
    %571 = vmax.xlane.f32.xlu0 %v570
    %v572 = vpop.xlane.xlu0 %571
    %v573 = vsel %vm554, %v549, -inf
    %574 = vmax.xlane.f32.xlu0 %v573
    %v575 = vpop.xlane.xlu0 %574
    %v576 = vsel %vm554, %v552, -inf
    %577 = vmax.xlane.f32.xlu0 %v576
    %v578 = vpop.xlane.xlu0 %577
    %v579 = vsub.f32 %v531, %v557
    %v580 = vsub.f32 %v534, %v560
    %v581 = vsub.f32 %v537, %v563
    %v582 = vsub.f32 %v540, %v566
    %v583 = vsub.f32 %v543, %v569
    %v584 = vsub.f32 %v546, %v572
    %v585 = vsub.f32 %v549, %v575
    %v586 = vsub.f32 %v552, %v578
    %v587 = vmul.f32 %v579, 1.442695
    %v588 = vpow.pop %v587
    %v589 = vmul.f32 %v580, 1.442695
    %v590 = vpow.pop %v589
    %v591 = vmul.f32 %v581, 1.442695
    %v592 = vpow.pop %v591
    %v593 = vmul.f32 %v582, 1.442695
    %v594 = vpow.pop %v593
    %v595 = vmul.f32 %v583, 1.442695
    %v596 = vpow.pop %v595
    %v597 = vmul.f32 %v584, 1.442695
    %v598 = vpow.pop %v597
    %v599 = vmul.f32 %v585, 1.442695
    %v600 = vpow.pop %v599
    %v601 = vmul.f32 %v586, 1.442695
    %v602 = vpow.pop %v601
    %v603 = vsel %vm554, %v588, 0.0
    %604 = vadd.xlane.f32.xlu0 %v603
    %v605 = vpop.xlane.xlu0 %604
    %v606 = vsel %vm554, %v590, 0.0
    %607 = vadd.xlane.f32.xlu0 %v606
    %v608 = vpop.xlane.xlu0 %607
    %v609 = vsel %vm554, %v592, 0.0
    %610 = vadd.xlane.f32.xlu0 %v609
    %v611 = vpop.xlane.xlu0 %610
    %v612 = vsel %vm554, %v594, 0.0
    %613 = vadd.xlane.f32.xlu0 %v612
    %v614 = vpop.xlane.xlu0 %613
    %v615 = vsel %vm554, %v596, 0.0
    %616 = vadd.xlane.f32.xlu0 %v615
    %v617 = vpop.xlane.xlu0 %616
    %v618 = vsel %vm554, %v598, 0.0
    %619 = vadd.xlane.f32.xlu0 %v618
    %v620 = vpop.xlane.xlu0 %619
    %v621 = vsel %vm554, %v600, 0.0
    %622 = vadd.xlane.f32.xlu0 %v621
    %v623 = vpop.xlane.xlu0 %622
    %v624 = vsel %vm554, %v602, 0.0
    %625 = vadd.xlane.f32.xlu0 %v624
    %v626 = vpop.xlane.xlu0 %625
    %v628 = vsel %vm554, %v588, 0
    %v631 = vsel %vm554, %v590, 0
    %v634 = vsel %vm554, %v592, 0
    %v637 = vsel %vm554, %v594, 0
    %v640 = vsel %vm554, %v596, 0
    %v643 = vsel %vm554, %v598, 0
    %v646 = vsel %vm554, %v600, 0
    %v649 = vsel %vm554, %v602, 0
    %651 = vmatpush.msra.mxu0 0.0
    %652 = vmatpush.msra.mxu0 0.0
    %653 = vmatpush.msra.mxu0 0.0
    %654 = vmatpush.msra.mxu0 0.0
    %655 = vmatpush.msra.mxu0 0.0
    %656 = vmatpush.msra.mxu0 0.0
    %657 = vmatpush.msra.mxu0 0.0
    %658 = vmatpush.msra.mxu0 0.0
    %659 = vmatpush.msra.mxu0 %v462
    %660 = vmatpush.msra.mxu0 %v459
    %661 = vmatpush.msra.mxu0 %v429
    %662 = vmatpush.msra.mxu0 %v426
    %663 = vmatpush.msra.mxu0 %v396
    %664 = vmatpush.msra.mxu0 %v393
    %665 = vmatpush.msra.mxu0 %v363
    %666 = vmatpush.msra.mxu0 %v360
    %667 = vmatmul.f32.gmra.mxu0 %v628
    %v668 = vpop.f32.mrf.mxu0
    %v669 = vadd.f32 0.0, %v668
    %670 = vmatmul.f32.gmra.mxu0 %v631
    %v671 = vpop.f32.mrf.mxu0
    %v672 = vadd.f32 0.0, %v671
    %673 = vmatmul.f32.gmra.mxu0 %v634
    %v674 = vpop.f32.mrf.mxu0
    %v675 = vadd.f32 0.0, %v674
    %676 = vmatmul.f32.gmra.mxu0 %v637
    %v677 = vpop.f32.mrf.mxu0
    %v678 = vadd.f32 0.0, %v677
    %679 = vmatmul.f32.gmra.mxu0 %v640
    %v680 = vpop.f32.mrf.mxu0
    %v681 = vadd.f32 0.0, %v680
    %682 = vmatmul.f32.gmra.mxu0 %v643
    %v683 = vpop.f32.mrf.mxu0
    %v684 = vadd.f32 0.0, %v683
    %685 = vmatmul.f32.gmra.mxu0 %v646
    %v686 = vpop.f32.mrf.mxu0
    %v687 = vadd.f32 0.0, %v686
    %688 = vmatmul.f32.gmra.mxu0 %v649
    %v689 = vpop.f32.mrf.mxu0
    %v690 = vadd.f32 0.0, %v689
    %691 = vdwg.mxu0
    %v692 = vrcp.pop %v605
    %v693 = vmul.f32 %v605, %v692
    %v694 = vsub.f32 1.0, %v693
    %v695 = vmul.f32 %v692, %v694
    %v696 = vadd.f32 %v692, %v695
    %vm697 = vweird.f32 %v605
    %vm698 = vweird.f32 %v692
    %vm699 = vmor %vm697, %vm698
    %v700 = vsel %vm699, %v692, %v696
    %v701 = vand.u32 2147483647, %v605
    %vm702 = vcmp.eq.f32.partialorder %v701, 8.507059e+37
    %v703 = vand.u32 %v605, 2147483648
    %v704 = vor.u32 1.1754944e-38, %v703
    %v705 = vsel %vm702, %v704, %v700
    %v706 = vmul.f32 0.35355338, %v705
    %v707 = vrcp.pop %v608
    %v708 = vmul.f32 %v608, %v707
    %v709 = vsub.f32 1.0, %v708
    %v710 = vmul.f32 %v707, %v709
    %v711 = vadd.f32 %v707, %v710
    %vm712 = vweird.f32 %v608
    %vm713 = vweird.f32 %v707
    %vm714 = vmor %vm712, %vm713
    %v715 = vsel %vm714, %v707, %v711
    %v716 = vand.u32 2147483647, %v608
    %vm717 = vcmp.eq.f32.partialorder %v716, 8.507059e+37
    %v718 = vand.u32 %v608, 2147483648
    %v719 = vor.u32 1.1754944e-38, %v718
    %v720 = vsel %vm717, %v719, %v715
    %v721 = vmul.f32 0.35355338, %v720
    %v722 = vrcp.pop %v611
    %v723 = vmul.f32 %v611, %v722
    %v724 = vsub.f32 1.0, %v723
    %v725 = vmul.f32 %v722, %v724
    %v726 = vadd.f32 %v722, %v725
    %vm727 = vweird.f32 %v611
    %vm728 = vweird.f32 %v722
    %vm729 = vmor %vm727, %vm728
    %v730 = vsel %vm729, %v722, %v726
    %v731 = vand.u32 2147483647, %v611
    %vm732 = vcmp.eq.f32.partialorder %v731, 8.507059e+37
    %v733 = vand.u32 %v611, 2147483648
    %v734 = vor.u32 1.1754944e-38, %v733
    %v735 = vsel %vm732, %v734, %v730
    %v736 = vmul.f32 0.35355338, %v735
    %v737 = vrcp.pop %v614
    %v738 = vmul.f32 %v614, %v737
    %v739 = vsub.f32 1.0, %v738
    %v740 = vmul.f32 %v737, %v739
    %v741 = vadd.f32 %v737, %v740
    %vm742 = vweird.f32 %v614
    %vm743 = vweird.f32 %v737
    %vm744 = vmor %vm742, %vm743
    %v745 = vsel %vm744, %v737, %v741
    %v746 = vand.u32 2147483647, %v614
    %vm747 = vcmp.eq.f32.partialorder %v746, 8.507059e+37
    %v748 = vand.u32 %v614, 2147483648
    %v749 = vor.u32 1.1754944e-38, %v748
    %v750 = vsel %vm747, %v749, %v745
    %v751 = vmul.f32 0.35355338, %v750
    %v752 = vrcp.pop %v617
    %v753 = vmul.f32 %v617, %v752
    %v754 = vsub.f32 1.0, %v753
    %v755 = vmul.f32 %v752, %v754
    %v756 = vadd.f32 %v752, %v755
    %vm757 = vweird.f32 %v617
    %vm758 = vweird.f32 %v752
    %vm759 = vmor %vm757, %vm758
    %v760 = vsel %vm759, %v752, %v756
    %v761 = vand.u32 2147483647, %v617
    %vm762 = vcmp.eq.f32.partialorder %v761, 8.507059e+37
    %v763 = vand.u32 %v617, 2147483648
    %v764 = vor.u32 1.1754944e-38, %v763
    %v765 = vsel %vm762, %v764, %v760
    %v766 = vmul.f32 0.35355338, %v765
    %v767 = vrcp.pop %v620
    %v768 = vmul.f32 %v620, %v767
    %v769 = vsub.f32 1.0, %v768
    %v770 = vmul.f32 %v767, %v769
    %v771 = vadd.f32 %v767, %v770
    %vm772 = vweird.f32 %v620
    %vm773 = vweird.f32 %v767
    %vm774 = vmor %vm772, %vm773
    %v775 = vsel %vm774, %v767, %v771
    %v776 = vand.u32 2147483647, %v620
    %vm777 = vcmp.eq.f32.partialorder %v776, 8.507059e+37
    %v778 = vand.u32 %v620, 2147483648
    %v779 = vor.u32 1.1754944e-38, %v778
    %v780 = vsel %vm777, %v779, %v775
    %v781 = vmul.f32 0.35355338, %v780
    %v782 = vrcp.pop %v623
    %v783 = vmul.f32 %v623, %v782
    %v784 = vsub.f32 1.0, %v783
    %v785 = vmul.f32 %v782, %v784
    %v786 = vadd.f32 %v782, %v785
    %vm787 = vweird.f32 %v623
    %vm788 = vweird.f32 %v782
    %vm789 = vmor %vm787, %vm788
    %v790 = vsel %vm789, %v782, %v786
    %v791 = vand.u32 2147483647, %v623
    %vm792 = vcmp.eq.f32.partialorder %v791, 8.507059e+37
    %v793 = vand.u32 %v623, 2147483648
    %v794 = vor.u32 1.1754944e-38, %v793
    %v795 = vsel %vm792, %v794, %v790
    %v796 = vmul.f32 0.35355338, %v795
    %v797 = vrcp.pop %v626
    %v798 = vmul.f32 %v626, %v797
    %v799 = vsub.f32 1.0, %v798
    %v800 = vmul.f32 %v797, %v799
    %v801 = vadd.f32 %v797, %v800
    %vm802 = vweird.f32 %v626
    %vm803 = vweird.f32 %v797
    %vm804 = vmor %vm802, %vm803
    %v805 = vsel %vm804, %v797, %v801
    %v806 = vand.u32 2147483647, %v626
    %vm807 = vcmp.eq.f32.partialorder %v806, 8.507059e+37
    %v808 = vand.u32 %v626, 2147483648
    %v809 = vor.u32 1.1754944e-38, %v808
    %v810 = vsel %vm807, %v809, %v805
    %v811 = vmul.f32 0.35355338, %v810
    %v812 = vmul.f32 %v669, %v706
    %v813 = vmul.f32 %v672, %v721
    %v814 = vmul.f32 %v675, %v736
    %v815 = vmul.f32 %v678, %v751
    %v816 = vmul.f32 %v681, %v766
    %v817 = vmul.f32 %v684, %v781
    %v818 = vmul.f32 %v687, %v796
    %v819 = vmul.f32 %v690, %v811
    %v820 = vld [vmem:[%s4] sm:$0xff]
    %v822 = vsel %vm464, %v812, 0
    %v825 = vsel %vm464, %v813, 0
    %827 = vmatpush.msra.mxu0 0.0
    %828 = vmatpush.msra.mxu0 0.0
    %829 = vmatpush.msra.mxu0 0.0
    %830 = vmatpush.msra.mxu0 0.0
    %831 = vmatpush.msra.mxu0 0.0
    %832 = vmatpush.msra.mxu0 0.0
    %833 = vmatpush.msra.mxu0 0.0
    %834 = vmatpush.msra.mxu0 0.0
    %835 = vmatpush.msra.mxu0 0.0
    %836 = vmatpush.msra.mxu0 0.0
    %837 = vmatpush.msra.mxu0 0.0
    %838 = vmatpush.msra.mxu0 0.0
    %839 = vmatpush.msra.mxu0 0.0
    %840 = vmatpush.msra.mxu0 0.0
    %841 = vmatpush.msra.mxu0 0.0
    %842 = vmatpush.msra.mxu0 %v820
    %843 = vmatmul.f32.gmra.mxu0 %v822
    %v844 = vpop.f32.mrf.mxu0
    %v845 = vadd.f32 0.0, %v844
    %846 = vmatmul.f32.gmra.mxu0 %v825
    %v847 = vpop.f32.mrf.mxu0
    %v848 = vadd.f32 0.0, %v847
    %849 = vdwg.mxu0
    %v851 = vperm.slane %v60, 0
    %v853 = vadd.f32 %v851, %v845
    %v854 = vadd.f32 %v851, %v848
    %s855 = scalar_lea.vmem %s4, 8
    %v856 = vld [vmem:[%s855] sm:$0xff]
    %v858 = vsel %vm464, %v814, 0
    %v861 = vsel %vm464, %v815, 0
    %863 = vmatpush.msra.mxu0 0.0
    %864 = vmatpush.msra.mxu0 0.0
    %865 = vmatpush.msra.mxu0 0.0
    %866 = vmatpush.msra.mxu0 0.0
    %867 = vmatpush.msra.mxu0 0.0
    %868 = vmatpush.msra.mxu0 0.0
    %869 = vmatpush.msra.mxu0 0.0
    %870 = vmatpush.msra.mxu0 0.0
    %871 = vmatpush.msra.mxu0 0.0
    %872 = vmatpush.msra.mxu0 0.0
    %873 = vmatpush.msra.mxu0 0.0
    %874 = vmatpush.msra.mxu0 0.0
    %875 = vmatpush.msra.mxu0 0.0
    %876 = vmatpush.msra.mxu0 0.0
    %877 = vmatpush.msra.mxu0 0.0
    %878 = vmatpush.msra.mxu0 %v856
    %879 = vmatmul.f32.gmra.mxu0 %v858
    %v880 = vpop.f32.mrf.mxu0
    %v881 = vadd.f32 0.0, %v880
    %882 = vmatmul.f32.gmra.mxu0 %v861
    %v883 = vpop.f32.mrf.mxu0
    %v884 = vadd.f32 0.0, %v883
    %885 = vdwg.mxu0
    %v886 = vadd.f32 %v853, %v881
    %v887 = vadd.f32 %v854, %v884
    %s888 = scalar_lea.vmem %s4, 16
    %v889 = vld [vmem:[%s888] sm:$0xff]
    %v891 = vsel %vm464, %v816, 0
    %v894 = vsel %vm464, %v817, 0
    %896 = vmatpush.msra.mxu0 0.0
    %897 = vmatpush.msra.mxu0 0.0
    %898 = vmatpush.msra.mxu0 0.0
    %899 = vmatpush.msra.mxu0 0.0
    %900 = vmatpush.msra.mxu0 0.0
    %901 = vmatpush.msra.mxu0 0.0
    %902 = vmatpush.msra.mxu0 0.0
    %903 = vmatpush.msra.mxu0 0.0
    %904 = vmatpush.msra.mxu0 0.0
    %905 = vmatpush.msra.mxu0 0.0
    %906 = vmatpush.msra.mxu0 0.0
    %907 = vmatpush.msra.mxu0 0.0
    %908 = vmatpush.msra.mxu0 0.0
    %909 = vmatpush.msra.mxu0 0.0
    %910 = vmatpush.msra.mxu0 0.0
    %911 = vmatpush.msra.mxu0 %v889
    %912 = vmatmul.f32.gmra.mxu0 %v891
    %v913 = vpop.f32.mrf.mxu0
    %v914 = vadd.f32 0.0, %v913
    %915 = vmatmul.f32.gmra.mxu0 %v894
    %v916 = vpop.f32.mrf.mxu0
    %v917 = vadd.f32 0.0, %v916
    %918 = vdwg.mxu0
    %v919 = vadd.f32 %v886, %v914
    %v920 = vadd.f32 %v887, %v917
    %s921 = scalar_lea.vmem %s4, 24
    %v922 = vld [vmem:[%s921] sm:$0xff]
    %v924 = vsel %vm464, %v818, 0
    %v927 = vsel %vm464, %v819, 0
    %929 = vmatpush.msra.mxu0 0.0
    %930 = vmatpush.msra.mxu0 0.0
    %931 = vmatpush.msra.mxu0 0.0
    %932 = vmatpush.msra.mxu0 0.0
    %933 = vmatpush.msra.mxu0 0.0
    %934 = vmatpush.msra.mxu0 0.0
    %935 = vmatpush.msra.mxu0 0.0
    %936 = vmatpush.msra.mxu0 0.0
    %937 = vmatpush.msra.mxu0 0.0
    %938 = vmatpush.msra.mxu0 0.0
    %939 = vmatpush.msra.mxu0 0.0
    %940 = vmatpush.msra.mxu0 0.0
    %941 = vmatpush.msra.mxu0 0.0
    %942 = vmatpush.msra.mxu0 0.0
    %943 = vmatpush.msra.mxu0 0.0
    %944 = vmatpush.msra.mxu0 %v922
    %945 = vmatmul.f32.gmra.mxu0 %v924
    %v946 = vpop.f32.mrf.mxu0
    %v947 = vadd.f32 0.0, %v946
    %948 = vmatmul.f32.gmra.mxu0 %v927
    %v949 = vpop.f32.mrf.mxu0
    %v950 = vadd.f32 0.0, %v949
    %951 = vdwg.mxu0
    %v952 = vadd.f32 %v919, %v947
    %v953 = vadd.f32 %v920, %v950
    %v954 = vmax.f32 %v952, 0.0
    %v955 = vmax.f32 %v953, 0.0
    %v956 = vadd.f32 %v954, %v50
    %v957 = vadd.f32 %v955, %v51
    %v958 = vsel %vm71, %v956, 0.0
    %959 = vadd.xlane.f32.xlu0 %v958
    %v960 = vpop.xlane.xlu0 %959
    %v961 = vsel %vm71, %v957, 0.0
    %962 = vadd.xlane.f32.xlu0 %v961
    %v963 = vpop.xlane.xlu0 %962
    %v964 = vrcp.pop 32.0
    %v965 = vmul.f32 32.0, %v964
    %v966 = vsub.f32 1.0, %v965
    %v967 = vmul.f32 %v964, %v966
    %v968 = vadd.f32 %v964, %v967
    %vm969 = vweird.f32 %v964
    %v970 = vsel %vm969, %v964, %v968
    %v971 = vmul.f32 %v960, %v970
    %v972 = vmul.f32 %v963, %v970
    %v973 = vsub.f32 %v956, %v971
    %v974 = vsub.f32 %v957, %v972
    %v975 = vmul.f32 %v973, %v973
    %v976 = vmul.f32 %v974, %v974
    %v977 = vsel %vm71, %v975, 0.0
    %978 = vadd.xlane.f32.xlu0 %v977
    %v979 = vpop.xlane.xlu0 %978
    %v980 = vsel %vm71, %v976, 0.0
    %981 = vadd.xlane.f32.xlu0 %v980
    %v982 = vpop.xlane.xlu0 %981
    %v983 = vmul.f32 %v979, %v970
    %v984 = vmul.f32 %v982, %v970
    %v985 = vadd.f32 %v983, 1e-05
    %v986 = vadd.f32 %v984, 1e-05
    %v987 = vrsqrt.pop %v985
    %v988 = vmul.f32 %v987, %v985
    %v989 = vmul.f32 %v988, %v987
    %v990 = vmul.f32 0.5, %v989
    %v991 = vsub.f32 1.5, %v990
    %v992 = vmul.f32 %v987, %v991
    %vm993 = vweird.f32 %v985
    %vm994 = vweird.f32 %v987
    %vm995 = vmor %vm993, %vm994
    %v996 = vsel %vm995, %v987, %v992
    %v997 = vrsqrt.pop %v986
    %v998 = vmul.f32 %v997, %v986
    %v999 = vmul.f32 %v998, %v997
    %v1000 = vmul.f32 0.5, %v999
    %v1001 = vsub.f32 1.5, %v1000
    %v1002 = vmul.f32 %v997, %v1001
    %vm1003 = vweird.f32 %v986
    %vm1004 = vweird.f32 %v997
    %vm1005 = vmor %vm1003, %vm1004
    %v1006 = vsel %vm1005, %v997, %v1002
    %v1007 = vmul.f32 %v973, %v996
    %v1008 = vmul.f32 %v974, %v1006
    %v1010 = vperm.slane %v61, 0
    %v1012 = vmul.f32 %v1007, %v1010
    %v1013 = vmul.f32 %v1008, %v1010
    %v1015 = vperm.slane %v62, 0
    %v1017 = vadd.f32 %v1012, %v1015
    %v1018 = vadd.f32 %v1013, %v1015
    %v1019 = vld [vmem:[%s2] sm:$0xff]
    %v1020 = vld [vmem:[%s2 + $0x8] sm:$0xff]
    %v1021 = vld [vmem:[%s2 + $0x10] sm:$0xff]
    %v1022 = vld [vmem:[%s2 + $0x18] sm:$0xff]
    %v1023 = vld [vmem:[%s3] sm:$0x1]
    %v1025 = vperm.slane %v1023, 0
    %v1028 = vsel %vm71, %v1017, 0
    %v1031 = vsel %vm71, %v1018, 0
    %1033 = vmatpush.msra.mxu0 0.0
    %1034 = vmatpush.msra.mxu0 0.0
    %1035 = vmatpush.msra.mxu0 0.0
    %1036 = vmatpush.msra.mxu0 0.0
    %1037 = vmatpush.msra.mxu0 0.0
    %1038 = vmatpush.msra.mxu0 0.0
    %1039 = vmatpush.msra.mxu0 0.0
    %1040 = vmatpush.msra.mxu0 0.0
    %1041 = vmatpush.msra.mxu0 0.0
    %1042 = vmatpush.msra.mxu0 0.0
    %1043 = vmatpush.msra.mxu0 0.0
    %1044 = vmatpush.msra.mxu0 0.0
    %1045 = vmatpush.msra.mxu0 %v1022
    %1046 = vmatpush.msra.mxu0 %v1021
    %1047 = vmatpush.msra.mxu0 %v1020
    %1048 = vmatpush.msra.mxu0 %v1019
    %1049 = vmatmul.f32.gmra.mxu0 %v1028
    %v1050 = vpop.f32.mrf.mxu0
    %v1051 = vadd.f32 %v1025, %v1050
    %1052 = vmatmul.f32.gmra.mxu0 %v1031
    %v1053 = vpop.f32.mrf.mxu0
    %v1054 = vadd.f32 %v1025, %v1053
    %1055 = vdwg.mxu0
    %v1056 = vld [vmem:[%s101] sm:$0xff]
    %v1057 = vld [vmem:[%s101 + $0x8] sm:$0xff]
    %v1058 = vld [vmem:[%s101 + $0x10] sm:$0xff]
    %v1059 = vld [vmem:[%s101 + $0x18] sm:$0xff]
    %v1060 = vld [vmem:[%s106] sm:$0x1]
    %v1062 = vperm.slane %v1060, 0
    %1064 = vmatpush.msra.mxu0 0.0
    %1065 = vmatpush.msra.mxu0 0.0
    %1066 = vmatpush.msra.mxu0 0.0
    %1067 = vmatpush.msra.mxu0 0.0
    %1068 = vmatpush.msra.mxu0 0.0
    %1069 = vmatpush.msra.mxu0 0.0
    %1070 = vmatpush.msra.mxu0 0.0
    %1071 = vmatpush.msra.mxu0 0.0
    %1072 = vmatpush.msra.mxu0 0.0
    %1073 = vmatpush.msra.mxu0 0.0
    %1074 = vmatpush.msra.mxu0 0.0
    %1075 = vmatpush.msra.mxu0 0.0
    %1076 = vmatpush.msra.mxu0 %v1059
    %1077 = vmatpush.msra.mxu0 %v1058
    %1078 = vmatpush.msra.mxu0 %v1057
    %1079 = vmatpush.msra.mxu0 %v1056
    %1080 = vmatmul.f32.gmra.mxu0 %v1028
    %v1081 = vpop.f32.mrf.mxu0
    %v1082 = vadd.f32 %v1062, %v1081
    %1083 = vmatmul.f32.gmra.mxu0 %v1031
    %v1084 = vpop.f32.mrf.mxu0
    %v1085 = vadd.f32 %v1062, %v1084
    %1086 = vdwg.mxu0
    %v1087 = vld [vmem:[%s134] sm:$0xff]
    %v1088 = vld [vmem:[%s134 + $0x8] sm:$0xff]
    %v1089 = vld [vmem:[%s134 + $0x10] sm:$0xff]
    %v1090 = vld [vmem:[%s134 + $0x18] sm:$0xff]
    %v1091 = vld [vmem:[%s139] sm:$0x1]
    %v1093 = vperm.slane %v1091, 0
    %1095 = vmatpush.msra.mxu0 0.0
    %1096 = vmatpush.msra.mxu0 0.0
    %1097 = vmatpush.msra.mxu0 0.0
    %1098 = vmatpush.msra.mxu0 0.0
    %1099 = vmatpush.msra.mxu0 0.0
    %1100 = vmatpush.msra.mxu0 0.0
    %1101 = vmatpush.msra.mxu0 0.0
    %1102 = vmatpush.msra.mxu0 0.0
    %1103 = vmatpush.msra.mxu0 0.0
    %1104 = vmatpush.msra.mxu0 0.0
    %1105 = vmatpush.msra.mxu0 0.0
    %1106 = vmatpush.msra.mxu0 0.0
    %1107 = vmatpush.msra.mxu0 %v1090
    %1108 = vmatpush.msra.mxu0 %v1089
    %1109 = vmatpush.msra.mxu0 %v1088
    %1110 = vmatpush.msra.mxu0 %v1087
    %1111 = vmatmul.f32.gmra.mxu0 %v1028
    %v1112 = vpop.f32.mrf.mxu0
    %v1113 = vadd.f32 %v1093, %v1112
    %1114 = vmatmul.f32.gmra.mxu0 %v1031
    %v1115 = vpop.f32.mrf.mxu0
    %v1116 = vadd.f32 %v1093, %v1115
    %1117 = vdwg.mxu0
    %v1118 = vld [vmem:[%s167] sm:$0xff]
    %v1119 = vld [vmem:[%s167 + $0x8] sm:$0xff]
    %v1120 = vld [vmem:[%s167 + $0x10] sm:$0xff]
    %v1121 = vld [vmem:[%s167 + $0x18] sm:$0xff]
    %v1122 = vld [vmem:[%s172] sm:$0x1]
    %v1124 = vperm.slane %v1122, 0
    %1126 = vmatpush.msra.mxu0 0.0
    %1127 = vmatpush.msra.mxu0 0.0
    %1128 = vmatpush.msra.mxu0 0.0
    %1129 = vmatpush.msra.mxu0 0.0
    %1130 = vmatpush.msra.mxu0 0.0
    %1131 = vmatpush.msra.mxu0 0.0
    %1132 = vmatpush.msra.mxu0 0.0
    %1133 = vmatpush.msra.mxu0 0.0
    %1134 = vmatpush.msra.mxu0 0.0
    %1135 = vmatpush.msra.mxu0 0.0
    %1136 = vmatpush.msra.mxu0 0.0
    %1137 = vmatpush.msra.mxu0 0.0
    %1138 = vmatpush.msra.mxu0 %v1121
    %1139 = vmatpush.msra.mxu0 %v1120
    %1140 = vmatpush.msra.mxu0 %v1119
    %1141 = vmatpush.msra.mxu0 %v1118
    %1142 = vmatmul.f32.gmra.mxu0 %v1028
    %v1143 = vpop.f32.mrf.mxu0
    %v1144 = vadd.f32 %v1124, %v1143
    %1145 = vmatmul.f32.gmra.mxu0 %v1031
    %v1146 = vpop.f32.mrf.mxu0
    %v1147 = vadd.f32 %v1124, %v1146
    %1148 = vdwg.mxu0
    %v1149 = vld [vmem:[%s200] sm:$0xff]
    %v1150 = vld [vmem:[%s200 + $0x8] sm:$0xff]
    %v1151 = vld [vmem:[%s200 + $0x10] sm:$0xff]
    %v1152 = vld [vmem:[%s200 + $0x18] sm:$0xff]
    %v1153 = vld [vmem:[%s205] sm:$0x1]
    %v1155 = vperm.slane %v1153, 0
    %1157 = vmatpush.msra.mxu0 0.0
    %1158 = vmatpush.msra.mxu0 0.0
    %1159 = vmatpush.msra.mxu0 0.0
    %1160 = vmatpush.msra.mxu0 0.0
    %1161 = vmatpush.msra.mxu0 0.0
    %1162 = vmatpush.msra.mxu0 0.0
    %1163 = vmatpush.msra.mxu0 0.0
    %1164 = vmatpush.msra.mxu0 0.0
    %1165 = vmatpush.msra.mxu0 0.0
    %1166 = vmatpush.msra.mxu0 0.0
    %1167 = vmatpush.msra.mxu0 0.0
    %1168 = vmatpush.msra.mxu0 0.0
    %1169 = vmatpush.msra.mxu0 %v1152
    %1170 = vmatpush.msra.mxu0 %v1151
    %1171 = vmatpush.msra.mxu0 %v1150
    %1172 = vmatpush.msra.mxu0 %v1149
    %1173 = vmatmul.f32.gmra.mxu0 %v1028
    %v1174 = vpop.f32.mrf.mxu0
    %v1175 = vadd.f32 %v1155, %v1174
    %1176 = vmatmul.f32.gmra.mxu0 %v1031
    %v1177 = vpop.f32.mrf.mxu0
    %v1178 = vadd.f32 %v1155, %v1177
    %1179 = vdwg.mxu0
    %v1180 = vld [vmem:[%s233] sm:$0xff]
    %v1181 = vld [vmem:[%s233 + $0x8] sm:$0xff]
    %v1182 = vld [vmem:[%s233 + $0x10] sm:$0xff]
    %v1183 = vld [vmem:[%s233 + $0x18] sm:$0xff]
    %v1184 = vld [vmem:[%s238] sm:$0x1]
    %v1186 = vperm.slane %v1184, 0
    %1188 = vmatpush.msra.mxu0 0.0
    %1189 = vmatpush.msra.mxu0 0.0
    %1190 = vmatpush.msra.mxu0 0.0
    %1191 = vmatpush.msra.mxu0 0.0
    %1192 = vmatpush.msra.mxu0 0.0
    %1193 = vmatpush.msra.mxu0 0.0
    %1194 = vmatpush.msra.mxu0 0.0
    %1195 = vmatpush.msra.mxu0 0.0
    %1196 = vmatpush.msra.mxu0 0.0
    %1197 = vmatpush.msra.mxu0 0.0
    %1198 = vmatpush.msra.mxu0 0.0
    %1199 = vmatpush.msra.mxu0 0.0
    %1200 = vmatpush.msra.mxu0 %v1183
    %1201 = vmatpush.msra.mxu0 %v1182
    %1202 = vmatpush.msra.mxu0 %v1181
    %1203 = vmatpush.msra.mxu0 %v1180
    %1204 = vmatmul.f32.gmra.mxu0 %v1028
    %v1205 = vpop.f32.mrf.mxu0
    %v1206 = vadd.f32 %v1186, %v1205
    %1207 = vmatmul.f32.gmra.mxu0 %v1031
    %v1208 = vpop.f32.mrf.mxu0
    %v1209 = vadd.f32 %v1186, %v1208
    %1210 = vdwg.mxu0
    %v1211 = vld [vmem:[%s266] sm:$0xff]
    %v1212 = vld [vmem:[%s266 + $0x8] sm:$0xff]
    %v1213 = vld [vmem:[%s266 + $0x10] sm:$0xff]
    %v1214 = vld [vmem:[%s266 + $0x18] sm:$0xff]
    %v1215 = vld [vmem:[%s271] sm:$0x1]
    %v1217 = vperm.slane %v1215, 0
    %1219 = vmatpush.msra.mxu0 0.0
    %1220 = vmatpush.msra.mxu0 0.0
    %1221 = vmatpush.msra.mxu0 0.0
    %1222 = vmatpush.msra.mxu0 0.0
    %1223 = vmatpush.msra.mxu0 0.0
    %1224 = vmatpush.msra.mxu0 0.0
    %1225 = vmatpush.msra.mxu0 0.0
    %1226 = vmatpush.msra.mxu0 0.0
    %1227 = vmatpush.msra.mxu0 0.0
    %1228 = vmatpush.msra.mxu0 0.0
    %1229 = vmatpush.msra.mxu0 0.0
    %1230 = vmatpush.msra.mxu0 0.0
    %1231 = vmatpush.msra.mxu0 %v1214
    %1232 = vmatpush.msra.mxu0 %v1213
    %1233 = vmatpush.msra.mxu0 %v1212
    %1234 = vmatpush.msra.mxu0 %v1211
    %1235 = vmatmul.f32.gmra.mxu0 %v1028
    %v1236 = vpop.f32.mrf.mxu0
    %v1237 = vadd.f32 %v1217, %v1236
    %1238 = vmatmul.f32.gmra.mxu0 %v1031
    %v1239 = vpop.f32.mrf.mxu0
    %v1240 = vadd.f32 %v1217, %v1239
    %1241 = vdwg.mxu0
    %v1242 = vld [vmem:[%s299] sm:$0xff]
    %v1243 = vld [vmem:[%s299 + $0x8] sm:$0xff]
    %v1244 = vld [vmem:[%s299 + $0x10] sm:$0xff]
    %v1245 = vld [vmem:[%s299 + $0x18] sm:$0xff]
    %v1246 = vld [vmem:[%s304] sm:$0x1]
    %v1248 = vperm.slane %v1246, 0
    %1250 = vmatpush.msra.mxu0 0.0
    %1251 = vmatpush.msra.mxu0 0.0
    %1252 = vmatpush.msra.mxu0 0.0
    %1253 = vmatpush.msra.mxu0 0.0
    %1254 = vmatpush.msra.mxu0 0.0
    %1255 = vmatpush.msra.mxu0 0.0
    %1256 = vmatpush.msra.mxu0 0.0
    %1257 = vmatpush.msra.mxu0 0.0
    %1258 = vmatpush.msra.mxu0 0.0
    %1259 = vmatpush.msra.mxu0 0.0
    %1260 = vmatpush.msra.mxu0 0.0
    %1261 = vmatpush.msra.mxu0 0.0
    %1262 = vmatpush.msra.mxu0 %v1245
    %1263 = vmatpush.msra.mxu0 %v1244
    %1264 = vmatpush.msra.mxu0 %v1243
    %1265 = vmatpush.msra.mxu0 %v1242
    %1266 = vmatmul.f32.gmra.mxu0 %v1028
    %v1267 = vpop.f32.mrf.mxu0
    %v1268 = vadd.f32 %v1248, %v1267
    %1269 = vmatmul.f32.gmra.mxu0 %v1031
    %v1270 = vpop.f32.mrf.mxu0
    %v1271 = vadd.f32 %v1248, %v1270
    %1272 = vdwg.mxu0
    %v1273 = vld [vmem:[%s332] sm:$0xff]
    %v1274 = vld [vmem:[%s332 + $0x8] sm:$0xff]
    %v1275 = vld [vmem:[%s332 + $0x10] sm:$0xff]
    %v1276 = vld [vmem:[%s332 + $0x18] sm:$0xff]
    %v1277 = vld [vmem:[%s337] sm:$0x1]
    %v1279 = vperm.slane %v1277, 0
    %1281 = vmatpush.msra.mxu0 0.0
    %1282 = vmatpush.msra.mxu0 0.0
    %1283 = vmatpush.msra.mxu0 0.0
    %1284 = vmatpush.msra.mxu0 0.0
    %1285 = vmatpush.msra.mxu0 0.0
    %1286 = vmatpush.msra.mxu0 0.0
    %1287 = vmatpush.msra.mxu0 0.0
    %1288 = vmatpush.msra.mxu0 0.0
    %1289 = vmatpush.msra.mxu0 0.0
    %1290 = vmatpush.msra.mxu0 0.0
    %1291 = vmatpush.msra.mxu0 0.0
    %1292 = vmatpush.msra.mxu0 0.0
    %1293 = vmatpush.msra.mxu0 %v1276
    %1294 = vmatpush.msra.mxu0 %v1275
    %1295 = vmatpush.msra.mxu0 %v1274
    %1296 = vmatpush.msra.mxu0 %v1273
    %1297 = vmatmul.f32.gmra.mxu0 %v1028
    %v1298 = vpop.f32.mrf.mxu0
    %v1299 = vadd.f32 %v1279, %v1298
    %1300 = vmatmul.f32.gmra.mxu0 %v1031
    %v1301 = vpop.f32.mrf.mxu0
    %v1302 = vadd.f32 %v1279, %v1301
    %1303 = vdwg.mxu0
    %v1304 = vld [vmem:[%s365] sm:$0xff]
    %v1305 = vld [vmem:[%s365 + $0x8] sm:$0xff]
    %v1306 = vld [vmem:[%s365 + $0x10] sm:$0xff]
    %v1307 = vld [vmem:[%s365 + $0x18] sm:$0xff]
    %v1308 = vld [vmem:[%s370] sm:$0x1]
    %v1310 = vperm.slane %v1308, 0
    %1312 = vmatpush.msra.mxu0 0.0
    %1313 = vmatpush.msra.mxu0 0.0
    %1314 = vmatpush.msra.mxu0 0.0
    %1315 = vmatpush.msra.mxu0 0.0
    %1316 = vmatpush.msra.mxu0 0.0
    %1317 = vmatpush.msra.mxu0 0.0
    %1318 = vmatpush.msra.mxu0 0.0
    %1319 = vmatpush.msra.mxu0 0.0
    %1320 = vmatpush.msra.mxu0 0.0
    %1321 = vmatpush.msra.mxu0 0.0
    %1322 = vmatpush.msra.mxu0 0.0
    %1323 = vmatpush.msra.mxu0 0.0
    %1324 = vmatpush.msra.mxu0 %v1307
    %1325 = vmatpush.msra.mxu0 %v1306
    %1326 = vmatpush.msra.mxu0 %v1305
    %1327 = vmatpush.msra.mxu0 %v1304
    %1328 = vmatmul.f32.gmra.mxu0 %v1028
    %v1329 = vpop.f32.mrf.mxu0
    %v1330 = vadd.f32 %v1310, %v1329
    %1331 = vmatmul.f32.gmra.mxu0 %v1031
    %v1332 = vpop.f32.mrf.mxu0
    %v1333 = vadd.f32 %v1310, %v1332
    %1334 = vdwg.mxu0
    %v1335 = vld [vmem:[%s398] sm:$0xff]
    %v1336 = vld [vmem:[%s398 + $0x8] sm:$0xff]
    %v1337 = vld [vmem:[%s398 + $0x10] sm:$0xff]
    %v1338 = vld [vmem:[%s398 + $0x18] sm:$0xff]
    %v1339 = vld [vmem:[%s403] sm:$0x1]
    %v1341 = vperm.slane %v1339, 0
    %1343 = vmatpush.msra.mxu0 0.0
    %1344 = vmatpush.msra.mxu0 0.0
    %1345 = vmatpush.msra.mxu0 0.0
    %1346 = vmatpush.msra.mxu0 0.0
    %1347 = vmatpush.msra.mxu0 0.0
    %1348 = vmatpush.msra.mxu0 0.0
    %1349 = vmatpush.msra.mxu0 0.0
    %1350 = vmatpush.msra.mxu0 0.0
    %1351 = vmatpush.msra.mxu0 0.0
    %1352 = vmatpush.msra.mxu0 0.0
    %1353 = vmatpush.msra.mxu0 0.0
    %1354 = vmatpush.msra.mxu0 0.0
    %1355 = vmatpush.msra.mxu0 %v1338
    %1356 = vmatpush.msra.mxu0 %v1337
    %1357 = vmatpush.msra.mxu0 %v1336
    %1358 = vmatpush.msra.mxu0 %v1335
    %1359 = vmatmul.f32.gmra.mxu0 %v1028
    %v1360 = vpop.f32.mrf.mxu0
    %v1361 = vadd.f32 %v1341, %v1360
    %1362 = vmatmul.f32.gmra.mxu0 %v1031
    %v1363 = vpop.f32.mrf.mxu0
    %v1364 = vadd.f32 %v1341, %v1363
    %1365 = vdwg.mxu0
    %v1366 = vld [vmem:[%s431] sm:$0xff]
    %v1367 = vld [vmem:[%s431 + $0x8] sm:$0xff]
    %v1368 = vld [vmem:[%s431 + $0x10] sm:$0xff]
    %v1369 = vld [vmem:[%s431 + $0x18] sm:$0xff]
    %v1370 = vld [vmem:[%s436] sm:$0x1]
    %v1372 = vperm.slane %v1370, 0
    %1374 = vmatpush.msra.mxu0 0.0
    %1375 = vmatpush.msra.mxu0 0.0
    %1376 = vmatpush.msra.mxu0 0.0
    %1377 = vmatpush.msra.mxu0 0.0
    %1378 = vmatpush.msra.mxu0 0.0
    %1379 = vmatpush.msra.mxu0 0.0
    %1380 = vmatpush.msra.mxu0 0.0
    %1381 = vmatpush.msra.mxu0 0.0
    %1382 = vmatpush.msra.mxu0 0.0
    %1383 = vmatpush.msra.mxu0 0.0
    %1384 = vmatpush.msra.mxu0 0.0
    %1385 = vmatpush.msra.mxu0 0.0
    %1386 = vmatpush.msra.mxu0 %v1369
    %1387 = vmatpush.msra.mxu0 %v1368
    %1388 = vmatpush.msra.mxu0 %v1367
    %1389 = vmatpush.msra.mxu0 %v1366
    %1390 = vmatmul.f32.gmra.mxu0 %v1028
    %v1391 = vpop.f32.mrf.mxu0
    %v1392 = vadd.f32 %v1372, %v1391
    %1393 = vmatmul.f32.gmra.mxu0 %v1031
    %v1394 = vpop.f32.mrf.mxu0
    %v1395 = vadd.f32 %v1372, %v1394
    %1396 = vdwg.mxu0
    %v1398 = vsel %vm464, %v1051, 0
    %v1401 = vsel %vm464, %v1054, 0
    %v1404 = vsel %vm464, %v1082, 0
    %v1407 = vsel %vm464, %v1085, 0
    %v1410 = vsel %vm464, %v1113, 0
    %v1413 = vsel %vm464, %v1116, 0
    %v1416 = vsel %vm464, %v1144, 0
    %v1419 = vsel %vm464, %v1147, 0
    %v1422 = vsel %vm464, %v1175, 0
    %v1425 = vsel %vm464, %v1178, 0
    %v1428 = vsel %vm464, %v1206, 0
    %v1431 = vsel %vm464, %v1209, 0
    %v1434 = vsel %vm464, %v1237, 0
    %v1437 = vsel %vm464, %v1240, 0
    %v1440 = vsel %vm464, %v1268, 0
    %v1443 = vsel %vm464, %v1271, 0
    %1445 = vmatpush.xpose.msra.mxu0 0.0
    %1446 = vmatpush.xpose.msra.mxu0 0.0
    %1447 = vmatpush.xpose.msra.mxu0 0.0
    %1448 = vmatpush.xpose.msra.mxu0 0.0
    %1449 = vmatpush.xpose.msra.mxu0 0.0
    %1450 = vmatpush.xpose.msra.mxu0 0.0
    %1451 = vmatpush.xpose.msra.mxu0 0.0
    %1452 = vmatpush.xpose.msra.mxu0 0.0
    %1453 = vmatpush.xpose.msra.mxu0 %v1443
    %1454 = vmatpush.xpose.msra.mxu0 %v1440
    %1455 = vmatpush.xpose.msra.mxu0 %v1437
    %1456 = vmatpush.xpose.msra.mxu0 %v1434
    %1457 = vmatpush.xpose.msra.mxu0 %v1431
    %1458 = vmatpush.xpose.msra.mxu0 %v1428
    %1459 = vmatpush.xpose.msra.mxu0 %v1425
    %1460 = vmatpush.xpose.msra.mxu0 %v1422
    %1461 = vmatmul.f32.gmra.mxu0 %v1398
    %v1462 = vpop.f32.mrf.mxu0
    %v1463 = vadd.f32 %v52, %v1462
    %1464 = vmatmul.f32.gmra.mxu0 %v1401
    %v1465 = vpop.f32.mrf.mxu0
    %v1466 = vadd.f32 %v53, %v1465
    %1467 = vmatmul.f32.gmra.mxu0 %v1404
    %v1468 = vpop.f32.mrf.mxu0
    %v1469 = vadd.f32 %v54, %v1468
    %1470 = vmatmul.f32.gmra.mxu0 %v1407
    %v1471 = vpop.f32.mrf.mxu0
    %v1472 = vadd.f32 %v55, %v1471
    %1473 = vmatmul.f32.gmra.mxu0 %v1410
    %v1474 = vpop.f32.mrf.mxu0
    %v1475 = vadd.f32 %v56, %v1474
    %1476 = vmatmul.f32.gmra.mxu0 %v1413
    %v1477 = vpop.f32.mrf.mxu0
    %v1478 = vadd.f32 %v57, %v1477
    %1479 = vmatmul.f32.gmra.mxu0 %v1416
    %v1480 = vpop.f32.mrf.mxu0
    %v1481 = vadd.f32 %v58, %v1480
    %1482 = vmatmul.f32.gmra.mxu0 %v1419
    %v1483 = vpop.f32.mrf.mxu0
    %v1484 = vadd.f32 %v59, %v1483
    %1485 = vdwg.mxu0
    %v1486 = vsel %vm554, %v1463, -inf
    %1487 = vmax.xlane.f32.xlu0 %v1486
    %v1488 = vpop.xlane.xlu0 %1487
    %v1489 = vsel %vm554, %v1466, -inf
    %1490 = vmax.xlane.f32.xlu0 %v1489
    %v1491 = vpop.xlane.xlu0 %1490
    %v1492 = vsel %vm554, %v1469, -inf
    %1493 = vmax.xlane.f32.xlu0 %v1492
    %v1494 = vpop.xlane.xlu0 %1493
    %v1495 = vsel %vm554, %v1472, -inf
    %1496 = vmax.xlane.f32.xlu0 %v1495
    %v1497 = vpop.xlane.xlu0 %1496
    %v1498 = vsel %vm554, %v1475, -inf
    %1499 = vmax.xlane.f32.xlu0 %v1498
    %v1500 = vpop.xlane.xlu0 %1499
    %v1501 = vsel %vm554, %v1478, -inf
    %1502 = vmax.xlane.f32.xlu0 %v1501
    %v1503 = vpop.xlane.xlu0 %1502
    %v1504 = vsel %vm554, %v1481, -inf
    %1505 = vmax.xlane.f32.xlu0 %v1504
    %v1506 = vpop.xlane.xlu0 %1505
    %v1507 = vsel %vm554, %v1484, -inf
    %1508 = vmax.xlane.f32.xlu0 %v1507
    %v1509 = vpop.xlane.xlu0 %1508
    %v1510 = vsub.f32 %v1463, %v1488
    %v1511 = vsub.f32 %v1466, %v1491
    %v1512 = vsub.f32 %v1469, %v1494
    %v1513 = vsub.f32 %v1472, %v1497
    %v1514 = vsub.f32 %v1475, %v1500
    %v1515 = vsub.f32 %v1478, %v1503
    %v1516 = vsub.f32 %v1481, %v1506
    %v1517 = vsub.f32 %v1484, %v1509
    %v1518 = vmul.f32 %v1510, 1.442695
    %v1519 = vpow.pop %v1518
    %v1520 = vmul.f32 %v1511, 1.442695
    %v1521 = vpow.pop %v1520
    %v1522 = vmul.f32 %v1512, 1.442695
    %v1523 = vpow.pop %v1522
    %v1524 = vmul.f32 %v1513, 1.442695
    %v1525 = vpow.pop %v1524
    %v1526 = vmul.f32 %v1514, 1.442695
    %v1527 = vpow.pop %v1526
    %v1528 = vmul.f32 %v1515, 1.442695
    %v1529 = vpow.pop %v1528
    %v1530 = vmul.f32 %v1516, 1.442695
    %v1531 = vpow.pop %v1530
    %v1532 = vmul.f32 %v1517, 1.442695
    %v1533 = vpow.pop %v1532
    %v1534 = vsel %vm554, %v1519, 0.0
    %1535 = vadd.xlane.f32.xlu0 %v1534
    %v1536 = vpop.xlane.xlu0 %1535
    %v1537 = vsel %vm554, %v1521, 0.0
    %1538 = vadd.xlane.f32.xlu0 %v1537
    %v1539 = vpop.xlane.xlu0 %1538
    %v1540 = vsel %vm554, %v1523, 0.0
    %1541 = vadd.xlane.f32.xlu0 %v1540
    %v1542 = vpop.xlane.xlu0 %1541
    %v1543 = vsel %vm554, %v1525, 0.0
    %1544 = vadd.xlane.f32.xlu0 %v1543
    %v1545 = vpop.xlane.xlu0 %1544
    %v1546 = vsel %vm554, %v1527, 0.0
    %1547 = vadd.xlane.f32.xlu0 %v1546
    %v1548 = vpop.xlane.xlu0 %1547
    %v1549 = vsel %vm554, %v1529, 0.0
    %1550 = vadd.xlane.f32.xlu0 %v1549
    %v1551 = vpop.xlane.xlu0 %1550
    %v1552 = vsel %vm554, %v1531, 0.0
    %1553 = vadd.xlane.f32.xlu0 %v1552
    %v1554 = vpop.xlane.xlu0 %1553
    %v1555 = vsel %vm554, %v1533, 0.0
    %1556 = vadd.xlane.f32.xlu0 %v1555
    %v1557 = vpop.xlane.xlu0 %1556
    %v1559 = vsel %vm554, %v1519, 0
    %v1562 = vsel %vm554, %v1521, 0
    %v1565 = vsel %vm554, %v1523, 0
    %v1568 = vsel %vm554, %v1525, 0
    %v1571 = vsel %vm554, %v1527, 0
    %v1574 = vsel %vm554, %v1529, 0
    %v1577 = vsel %vm554, %v1531, 0
    %v1580 = vsel %vm554, %v1533, 0
    %1582 = vmatpush.msra.mxu0 0.0
    %1583 = vmatpush.msra.mxu0 0.0
    %1584 = vmatpush.msra.mxu0 0.0
    %1585 = vmatpush.msra.mxu0 0.0
    %1586 = vmatpush.msra.mxu0 0.0
    %1587 = vmatpush.msra.mxu0 0.0
    %1588 = vmatpush.msra.mxu0 0.0
    %1589 = vmatpush.msra.mxu0 0.0
    %1590 = vmatpush.msra.mxu0 %v1395
    %1591 = vmatpush.msra.mxu0 %v1392
    %1592 = vmatpush.msra.mxu0 %v1364
    %1593 = vmatpush.msra.mxu0 %v1361
    %1594 = vmatpush.msra.mxu0 %v1333
    %1595 = vmatpush.msra.mxu0 %v1330
    %1596 = vmatpush.msra.mxu0 %v1302
    %1597 = vmatpush.msra.mxu0 %v1299
    %1598 = vmatmul.f32.gmra.mxu0 %v1559
    %v1599 = vpop.f32.mrf.mxu0
    %v1600 = vadd.f32 0.0, %v1599
    %1601 = vmatmul.f32.gmra.mxu0 %v1562
    %v1602 = vpop.f32.mrf.mxu0
    %v1603 = vadd.f32 0.0, %v1602
    %1604 = vmatmul.f32.gmra.mxu0 %v1565
    %v1605 = vpop.f32.mrf.mxu0
    %v1606 = vadd.f32 0.0, %v1605
    %1607 = vmatmul.f32.gmra.mxu0 %v1568
    %v1608 = vpop.f32.mrf.mxu0
    %v1609 = vadd.f32 0.0, %v1608
    %1610 = vmatmul.f32.gmra.mxu0 %v1571
    %v1611 = vpop.f32.mrf.mxu0
    %v1612 = vadd.f32 0.0, %v1611
    %1613 = vmatmul.f32.gmra.mxu0 %v1574
    %v1614 = vpop.f32.mrf.mxu0
    %v1615 = vadd.f32 0.0, %v1614
    %1616 = vmatmul.f32.gmra.mxu0 %v1577
    %v1617 = vpop.f32.mrf.mxu0
    %v1618 = vadd.f32 0.0, %v1617
    %1619 = vmatmul.f32.gmra.mxu0 %v1580
    %v1620 = vpop.f32.mrf.mxu0
    %v1621 = vadd.f32 0.0, %v1620
    %1622 = vdwg.mxu0
    %v1623 = vrcp.pop %v1536
    %v1624 = vmul.f32 %v1536, %v1623
    %v1625 = vsub.f32 1.0, %v1624
    %v1626 = vmul.f32 %v1623, %v1625
    %v1627 = vadd.f32 %v1623, %v1626
    %vm1628 = vweird.f32 %v1536
    %vm1629 = vweird.f32 %v1623
    %vm1630 = vmor %vm1628, %vm1629
    %v1631 = vsel %vm1630, %v1623, %v1627
    %v1632 = vand.u32 2147483647, %v1536
    %vm1633 = vcmp.eq.f32.partialorder %v1632, 8.507059e+37
    %v1634 = vand.u32 %v1536, 2147483648
    %v1635 = vor.u32 1.1754944e-38, %v1634
    %v1636 = vsel %vm1633, %v1635, %v1631
    %v1637 = vmul.f32 0.35355338, %v1636
    %v1638 = vrcp.pop %v1539
    %v1639 = vmul.f32 %v1539, %v1638
    %v1640 = vsub.f32 1.0, %v1639
    %v1641 = vmul.f32 %v1638, %v1640
    %v1642 = vadd.f32 %v1638, %v1641
    %vm1643 = vweird.f32 %v1539
    %vm1644 = vweird.f32 %v1638
    %vm1645 = vmor %vm1643, %vm1644
    %v1646 = vsel %vm1645, %v1638, %v1642
    %v1647 = vand.u32 2147483647, %v1539
    %vm1648 = vcmp.eq.f32.partialorder %v1647, 8.507059e+37
    %v1649 = vand.u32 %v1539, 2147483648
    %v1650 = vor.u32 1.1754944e-38, %v1649
    %v1651 = vsel %vm1648, %v1650, %v1646
    %v1652 = vmul.f32 0.35355338, %v1651
    %v1653 = vrcp.pop %v1542
    %v1654 = vmul.f32 %v1542, %v1653
    %v1655 = vsub.f32 1.0, %v1654
    %v1656 = vmul.f32 %v1653, %v1655
    %v1657 = vadd.f32 %v1653, %v1656
    %vm1658 = vweird.f32 %v1542
    %vm1659 = vweird.f32 %v1653
    %vm1660 = vmor %vm1658, %vm1659
    %v1661 = vsel %vm1660, %v1653, %v1657
    %v1662 = vand.u32 2147483647, %v1542
    %vm1663 = vcmp.eq.f32.partialorder %v1662, 8.507059e+37
    %v1664 = vand.u32 %v1542, 2147483648
    %v1665 = vor.u32 1.1754944e-38, %v1664
    %v1666 = vsel %vm1663, %v1665, %v1661
    %v1667 = vmul.f32 0.35355338, %v1666
    %v1668 = vrcp.pop %v1545
    %v1669 = vmul.f32 %v1545, %v1668
    %v1670 = vsub.f32 1.0, %v1669
    %v1671 = vmul.f32 %v1668, %v1670
    %v1672 = vadd.f32 %v1668, %v1671
    %vm1673 = vweird.f32 %v1545
    %vm1674 = vweird.f32 %v1668
    %vm1675 = vmor %vm1673, %vm1674
    %v1676 = vsel %vm1675, %v1668, %v1672
    %v1677 = vand.u32 2147483647, %v1545
    %vm1678 = vcmp.eq.f32.partialorder %v1677, 8.507059e+37
    %v1679 = vand.u32 %v1545, 2147483648
    %v1680 = vor.u32 1.1754944e-38, %v1679
    %v1681 = vsel %vm1678, %v1680, %v1676
    %v1682 = vmul.f32 0.35355338, %v1681
    %v1683 = vrcp.pop %v1548
    %v1684 = vmul.f32 %v1548, %v1683
    %v1685 = vsub.f32 1.0, %v1684
    %v1686 = vmul.f32 %v1683, %v1685
    %v1687 = vadd.f32 %v1683, %v1686
    %vm1688 = vweird.f32 %v1548
    %vm1689 = vweird.f32 %v1683
    %vm1690 = vmor %vm1688, %vm1689
    %v1691 = vsel %vm1690, %v1683, %v1687
    %v1692 = vand.u32 2147483647, %v1548
    %vm1693 = vcmp.eq.f32.partialorder %v1692, 8.507059e+37
    %v1694 = vand.u32 %v1548, 2147483648
    %v1695 = vor.u32 1.1754944e-38, %v1694
    %v1696 = vsel %vm1693, %v1695, %v1691
    %v1697 = vmul.f32 0.35355338, %v1696
    %v1698 = vrcp.pop %v1551
    %v1699 = vmul.f32 %v1551, %v1698
    %v1700 = vsub.f32 1.0, %v1699
    %v1701 = vmul.f32 %v1698, %v1700
    %v1702 = vadd.f32 %v1698, %v1701
    %vm1703 = vweird.f32 %v1551
    %vm1704 = vweird.f32 %v1698
    %vm1705 = vmor %vm1703, %vm1704
    %v1706 = vsel %vm1705, %v1698, %v1702
    %v1707 = vand.u32 2147483647, %v1551
    %vm1708 = vcmp.eq.f32.partialorder %v1707, 8.507059e+37
    %v1709 = vand.u32 %v1551, 2147483648
    %v1710 = vor.u32 1.1754944e-38, %v1709
    %v1711 = vsel %vm1708, %v1710, %v1706
    %v1712 = vmul.f32 0.35355338, %v1711
    %v1713 = vrcp.pop %v1554
    %v1714 = vmul.f32 %v1554, %v1713
    %v1715 = vsub.f32 1.0, %v1714
    %v1716 = vmul.f32 %v1713, %v1715
    %v1717 = vadd.f32 %v1713, %v1716
    %vm1718 = vweird.f32 %v1554
    %vm1719 = vweird.f32 %v1713
    %vm1720 = vmor %vm1718, %vm1719
    %v1721 = vsel %vm1720, %v1713, %v1717
    %v1722 = vand.u32 2147483647, %v1554
    %vm1723 = vcmp.eq.f32.partialorder %v1722, 8.507059e+37
    %v1724 = vand.u32 %v1554, 2147483648
    %v1725 = vor.u32 1.1754944e-38, %v1724
    %v1726 = vsel %vm1723, %v1725, %v1721
    %v1727 = vmul.f32 0.35355338, %v1726
    %v1728 = vrcp.pop %v1557
    %v1729 = vmul.f32 %v1557, %v1728
    %v1730 = vsub.f32 1.0, %v1729
    %v1731 = vmul.f32 %v1728, %v1730
    %v1732 = vadd.f32 %v1728, %v1731
    %vm1733 = vweird.f32 %v1557
    %vm1734 = vweird.f32 %v1728
    %vm1735 = vmor %vm1733, %vm1734
    %v1736 = vsel %vm1735, %v1728, %v1732
    %v1737 = vand.u32 2147483647, %v1557
    %vm1738 = vcmp.eq.f32.partialorder %v1737, 8.507059e+37
    %v1739 = vand.u32 %v1557, 2147483648
    %v1740 = vor.u32 1.1754944e-38, %v1739
    %v1741 = vsel %vm1738, %v1740, %v1736
    %v1742 = vmul.f32 0.35355338, %v1741
    %v1743 = vmul.f32 %v1600, %v1637
    %v1744 = vmul.f32 %v1603, %v1652
    %v1745 = vmul.f32 %v1606, %v1667
    %v1746 = vmul.f32 %v1609, %v1682
    %v1747 = vmul.f32 %v1612, %v1697
    %v1748 = vmul.f32 %v1615, %v1712
    %v1749 = vmul.f32 %v1618, %v1727
    %v1750 = vmul.f32 %v1621, %v1742
    %v1751 = vld [vmem:[%s4] sm:$0xff]
    %v1753 = vsel %vm464, %v1743, 0
    %v1756 = vsel %vm464, %v1744, 0
    %1758 = vmatpush.msra.mxu0 0.0
    %1759 = vmatpush.msra.mxu0 0.0
    %1760 = vmatpush.msra.mxu0 0.0
    %1761 = vmatpush.msra.mxu0 0.0
    %1762 = vmatpush.msra.mxu0 0.0
    %1763 = vmatpush.msra.mxu0 0.0
    %1764 = vmatpush.msra.mxu0 0.0
    %1765 = vmatpush.msra.mxu0 0.0
    %1766 = vmatpush.msra.mxu0 0.0
    %1767 = vmatpush.msra.mxu0 0.0
    %1768 = vmatpush.msra.mxu0 0.0
    %1769 = vmatpush.msra.mxu0 0.0
    %1770 = vmatpush.msra.mxu0 0.0
    %1771 = vmatpush.msra.mxu0 0.0
    %1772 = vmatpush.msra.mxu0 0.0
    %1773 = vmatpush.msra.mxu0 %v1751
    %1774 = vmatmul.f32.gmra.mxu0 %v1753
    %v1775 = vpop.f32.mrf.mxu0
    %v1776 = vadd.f32 0.0, %v1775
    %1777 = vmatmul.f32.gmra.mxu0 %v1756
    %v1778 = vpop.f32.mrf.mxu0
    %v1779 = vadd.f32 0.0, %v1778
    %1780 = vdwg.mxu0
    %v1781 = vadd.f32 %v851, %v1776
    %v1782 = vadd.f32 %v851, %v1779
    %v1783 = vld [vmem:[%s855] sm:$0xff]
    %v1785 = vsel %vm464, %v1745, 0
    %v1788 = vsel %vm464, %v1746, 0
    %1790 = vmatpush.msra.mxu0 0.0
    %1791 = vmatpush.msra.mxu0 0.0
    %1792 = vmatpush.msra.mxu0 0.0
    %1793 = vmatpush.msra.mxu0 0.0
    %1794 = vmatpush.msra.mxu0 0.0
    %1795 = vmatpush.msra.mxu0 0.0
    %1796 = vmatpush.msra.mxu0 0.0
    %1797 = vmatpush.msra.mxu0 0.0
    %1798 = vmatpush.msra.mxu0 0.0
    %1799 = vmatpush.msra.mxu0 0.0
    %1800 = vmatpush.msra.mxu0 0.0
    %1801 = vmatpush.msra.mxu0 0.0
    %1802 = vmatpush.msra.mxu0 0.0
    %1803 = vmatpush.msra.mxu0 0.0
    %1804 = vmatpush.msra.mxu0 0.0
    %1805 = vmatpush.msra.mxu0 %v1783
    %1806 = vmatmul.f32.gmra.mxu0 %v1785
    %v1807 = vpop.f32.mrf.mxu0
    %v1808 = vadd.f32 0.0, %v1807
    %1809 = vmatmul.f32.gmra.mxu0 %v1788
    %v1810 = vpop.f32.mrf.mxu0
    %v1811 = vadd.f32 0.0, %v1810
    %1812 = vdwg.mxu0
    %v1813 = vadd.f32 %v1781, %v1808
    %v1814 = vadd.f32 %v1782, %v1811
    %v1815 = vld [vmem:[%s888] sm:$0xff]
    %v1817 = vsel %vm464, %v1747, 0
    %v1820 = vsel %vm464, %v1748, 0
    %1822 = vmatpush.msra.mxu0 0.0
    %1823 = vmatpush.msra.mxu0 0.0
    %1824 = vmatpush.msra.mxu0 0.0
    %1825 = vmatpush.msra.mxu0 0.0
    %1826 = vmatpush.msra.mxu0 0.0
    %1827 = vmatpush.msra.mxu0 0.0
    %1828 = vmatpush.msra.mxu0 0.0
    %1829 = vmatpush.msra.mxu0 0.0
    %1830 = vmatpush.msra.mxu0 0.0
    %1831 = vmatpush.msra.mxu0 0.0
    %1832 = vmatpush.msra.mxu0 0.0
    %1833 = vmatpush.msra.mxu0 0.0
    %1834 = vmatpush.msra.mxu0 0.0
    %1835 = vmatpush.msra.mxu0 0.0
    %1836 = vmatpush.msra.mxu0 0.0
    %1837 = vmatpush.msra.mxu0 %v1815
    %1838 = vmatmul.f32.gmra.mxu0 %v1817
    %v1839 = vpop.f32.mrf.mxu0
    %v1840 = vadd.f32 0.0, %v1839
    %1841 = vmatmul.f32.gmra.mxu0 %v1820
    %v1842 = vpop.f32.mrf.mxu0
    %v1843 = vadd.f32 0.0, %v1842
    %1844 = vdwg.mxu0
    %v1845 = vadd.f32 %v1813, %v1840
    %v1846 = vadd.f32 %v1814, %v1843
    %v1847 = vld [vmem:[%s921] sm:$0xff]
    %v1849 = vsel %vm464, %v1749, 0
    %v1852 = vsel %vm464, %v1750, 0
    %1854 = vmatpush.msra.mxu0 0.0
    %1855 = vmatpush.msra.mxu0 0.0
    %1856 = vmatpush.msra.mxu0 0.0
    %1857 = vmatpush.msra.mxu0 0.0
    %1858 = vmatpush.msra.mxu0 0.0
    %1859 = vmatpush.msra.mxu0 0.0
    %1860 = vmatpush.msra.mxu0 0.0
    %1861 = vmatpush.msra.mxu0 0.0
    %1862 = vmatpush.msra.mxu0 0.0
    %1863 = vmatpush.msra.mxu0 0.0
    %1864 = vmatpush.msra.mxu0 0.0
    %1865 = vmatpush.msra.mxu0 0.0
    %1866 = vmatpush.msra.mxu0 0.0
    %1867 = vmatpush.msra.mxu0 0.0
    %1868 = vmatpush.msra.mxu0 0.0
    %1869 = vmatpush.msra.mxu0 %v1847
    %1870 = vmatmul.f32.gmra.mxu0 %v1849
    %v1871 = vpop.f32.mrf.mxu0
    %v1872 = vadd.f32 0.0, %v1871
    %1873 = vmatmul.f32.gmra.mxu0 %v1852
    %v1874 = vpop.f32.mrf.mxu0
    %v1875 = vadd.f32 0.0, %v1874
    %1876 = vdwg.mxu0
    %v1877 = vadd.f32 %v1845, %v1872
    %v1878 = vadd.f32 %v1846, %v1875
    %v1879 = vmax.f32 %v1877, 0.0
    %v1880 = vmax.f32 %v1878, 0.0
    %v1881 = vadd.f32 %v1879, %v1017
    %v1882 = vadd.f32 %v1880, %v1018
    %v1883 = vsel %vm71, %v1881, 0.0
    %1884 = vadd.xlane.f32.xlu0 %v1883
    %v1885 = vpop.xlane.xlu0 %1884
    %v1886 = vsel %vm71, %v1882, 0.0
    %1887 = vadd.xlane.f32.xlu0 %v1886
    %v1888 = vpop.xlane.xlu0 %1887
    %v1889 = vmul.f32 %v1885, %v970
    %v1890 = vmul.f32 %v1888, %v970
    %v1891 = vsub.f32 %v1881, %v1889
    %v1892 = vsub.f32 %v1882, %v1890
    %v1893 = vmul.f32 %v1891, %v1891
    %v1894 = vmul.f32 %v1892, %v1892
    %v1895 = vsel %vm71, %v1893, 0.0
    %1896 = vadd.xlane.f32.xlu0 %v1895
    %v1897 = vpop.xlane.xlu0 %1896
    %v1898 = vsel %vm71, %v1894, 0.0
    %1899 = vadd.xlane.f32.xlu0 %v1898
    %v1900 = vpop.xlane.xlu0 %1899
    %v1901 = vmul.f32 %v1897, %v970
    %v1902 = vmul.f32 %v1900, %v970
    %v1903 = vadd.f32 %v1901, 1e-05
    %v1904 = vadd.f32 %v1902, 1e-05
    %v1905 = vrsqrt.pop %v1903
    %v1906 = vmul.f32 %v1905, %v1903
    %v1907 = vmul.f32 %v1906, %v1905
    %v1908 = vmul.f32 0.5, %v1907
    %v1909 = vsub.f32 1.5, %v1908
    %v1910 = vmul.f32 %v1905, %v1909
    %vm1911 = vweird.f32 %v1903
    %vm1912 = vweird.f32 %v1905
    %vm1913 = vmor %vm1911, %vm1912
    %v1914 = vsel %vm1913, %v1905, %v1910
    %v1915 = vrsqrt.pop %v1904
    %v1916 = vmul.f32 %v1915, %v1904
    %v1917 = vmul.f32 %v1916, %v1915
    %v1918 = vmul.f32 0.5, %v1917
    %v1919 = vsub.f32 1.5, %v1918
    %v1920 = vmul.f32 %v1915, %v1919
    %vm1921 = vweird.f32 %v1904
    %vm1922 = vweird.f32 %v1915
    %vm1923 = vmor %vm1921, %vm1922
    %v1924 = vsel %vm1923, %v1915, %v1920
    %v1925 = vmul.f32 %v1891, %v1914
    %v1926 = vmul.f32 %v1892, %v1924
    %v1927 = vmul.f32 %v1925, %v1010
    %v1928 = vmul.f32 %v1926, %v1010
    %v1929 = vadd.f32 %v1927, %v1015
    %v1930 = vadd.f32 %v1928, %v1015
    %v1931 = vld [vmem:[%s11] sm:$0xff]
    %v1932 = vld [vmem:[%s11 + $0x8] sm:$0xff]
    %v1933 = vld [vmem:[%s9] sm:$0xff]
    %v1934 = vld [vmem:[%s9 + $0x8] sm:$0xff]
    %v1935 = vld [vmem:[%s9 + $0x10] sm:$0xff]
    %v1936 = vld [vmem:[%s9 + $0x18] sm:$0xff]
    %v1938 = vsel %vm71, %v1929, 0
    %v1941 = vsel %vm71, %v1930, 0
    %1943 = vmatpush.msra.mxu0 0.0
    %1944 = vmatpush.msra.mxu0 0.0
    %1945 = vmatpush.msra.mxu0 0.0
    %1946 = vmatpush.msra.mxu0 0.0
    %1947 = vmatpush.msra.mxu0 0.0
    %1948 = vmatpush.msra.mxu0 0.0
    %1949 = vmatpush.msra.mxu0 0.0
    %1950 = vmatpush.msra.mxu0 0.0
    %1951 = vmatpush.msra.mxu0 0.0
    %1952 = vmatpush.msra.mxu0 0.0
    %1953 = vmatpush.msra.mxu0 0.0
    %1954 = vmatpush.msra.mxu0 0.0
    %1955 = vmatpush.msra.mxu0 %v1936
    %1956 = vmatpush.msra.mxu0 %v1935
    %1957 = vmatpush.msra.mxu0 %v1934
    %1958 = vmatpush.msra.mxu0 %v1933
    %1959 = vmatmul.f32.gmra.mxu0 %v1938
    %v1960 = vpop.f32.mrf.mxu0
    %v1961 = vadd.f32 0.0, %v1960
    %1962 = vmatmul.f32.gmra.mxu0 %v1941
    %v1963 = vpop.f32.mrf.mxu0
    %v1964 = vadd.f32 0.0, %v1963
    %1965 = vdwg.mxu0
    %1967 = vset.pattern.permute.xlu0 0
    %1968 = vperm.xlu0 %1967, %v1931
    %v1969 = vpop.permute.xlu0 %1968
    %1972 = vset.pattern.permute.xlu0 0
    %1973 = vperm.xlu0 %1972, %v1932
    %v1974 = vpop.permute.xlu0 %1973
    %v1976 = vmul.f32 %v1969, %v1961
    %v1977 = vmul.f32 %v1974, %v1964
    %v1978 = vadd.f32 %v1976, 0.0
    %v1979 = vadd.f32 %v1977, 0.0
    %s1980 = scalar_lea.vmem %s11, 16
    %v1981 = vld [vmem:[%s1980] sm:$0xff]
    %v1982 = vld [vmem:[%s1980 + $0x8] sm:$0xff]
    %s1983 = scalar_lea.vmem %s9, 32
    %v1984 = vld [vmem:[%s1983] sm:$0xff]
    %v1985 = vld [vmem:[%s1983 + $0x8] sm:$0xff]
    %v1986 = vld [vmem:[%s1983 + $0x10] sm:$0xff]
    %v1987 = vld [vmem:[%s1983 + $0x18] sm:$0xff]
    %1988 = vmatpush.msra.mxu0 0.0
    %1989 = vmatpush.msra.mxu0 0.0
    %1990 = vmatpush.msra.mxu0 0.0
    %1991 = vmatpush.msra.mxu0 0.0
    %1992 = vmatpush.msra.mxu0 0.0
    %1993 = vmatpush.msra.mxu0 0.0
    %1994 = vmatpush.msra.mxu0 0.0
    %1995 = vmatpush.msra.mxu0 0.0
    %1996 = vmatpush.msra.mxu0 0.0
    %1997 = vmatpush.msra.mxu0 0.0
    %1998 = vmatpush.msra.mxu0 0.0
    %1999 = vmatpush.msra.mxu0 0.0
    %2000 = vmatpush.msra.mxu0 %v1987
    %2001 = vmatpush.msra.mxu0 %v1986
    %2002 = vmatpush.msra.mxu0 %v1985
    %2003 = vmatpush.msra.mxu0 %v1984
    %2004 = vmatmul.f32.gmra.mxu0 %v1938
    %v2005 = vpop.f32.mrf.mxu0
    %v2006 = vadd.f32 0.0, %v2005
    %2007 = vmatmul.f32.gmra.mxu0 %v1941
    %v2008 = vpop.f32.mrf.mxu0
    %v2009 = vadd.f32 0.0, %v2008
    %2010 = vdwg.mxu0
    %2012 = vset.pattern.permute.xlu0 0
    %2013 = vperm.xlu0 %2012, %v1981
    %v2014 = vpop.permute.xlu0 %2013
    %2017 = vset.pattern.permute.xlu0 0
    %2018 = vperm.xlu0 %2017, %v1982
    %v2019 = vpop.permute.xlu0 %2018
    %v2021 = vmul.f32 %v2014, %v2006
    %v2022 = vmul.f32 %v2019, %v2009
    %v2023 = vadd.f32 %v1978, %v2021
    %v2024 = vadd.f32 %v1979, %v2022
    %s2025 = scalar_lea.vmem %s11, 32
    %v2026 = vld [vmem:[%s2025] sm:$0xff]
    %v2027 = vld [vmem:[%s2025 + $0x8] sm:$0xff]
    %s2028 = scalar_lea.vmem %s9, 64
    %v2029 = vld [vmem:[%s2028] sm:$0xff]
    %v2030 = vld [vmem:[%s2028 + $0x8] sm:$0xff]
    %v2031 = vld [vmem:[%s2028 + $0x10] sm:$0xff]
    %v2032 = vld [vmem:[%s2028 + $0x18] sm:$0xff]
    %2033 = vmatpush.msra.mxu0 0.0
    %2034 = vmatpush.msra.mxu0 0.0
    %2035 = vmatpush.msra.mxu0 0.0
    %2036 = vmatpush.msra.mxu0 0.0
    %2037 = vmatpush.msra.mxu0 0.0
    %2038 = vmatpush.msra.mxu0 0.0
    %2039 = vmatpush.msra.mxu0 0.0
    %2040 = vmatpush.msra.mxu0 0.0
    %2041 = vmatpush.msra.mxu0 0.0
    %2042 = vmatpush.msra.mxu0 0.0
    %2043 = vmatpush.msra.mxu0 0.0
    %2044 = vmatpush.msra.mxu0 0.0
    %2045 = vmatpush.msra.mxu0 %v2032
    %2046 = vmatpush.msra.mxu0 %v2031
    %2047 = vmatpush.msra.mxu0 %v2030
    %2048 = vmatpush.msra.mxu0 %v2029
    %2049 = vmatmul.f32.gmra.mxu0 %v1938
    %v2050 = vpop.f32.mrf.mxu0
    %v2051 = vadd.f32 0.0, %v2050
    %2052 = vmatmul.f32.gmra.mxu0 %v1941
    %v2053 = vpop.f32.mrf.mxu0
    %v2054 = vadd.f32 0.0, %v2053
    %2055 = vdwg.mxu0
    %2057 = vset.pattern.permute.xlu0 0
    %2058 = vperm.xlu0 %2057, %v2026
    %v2059 = vpop.permute.xlu0 %2058
    %2062 = vset.pattern.permute.xlu0 0
    %2063 = vperm.xlu0 %2062, %v2027
    %v2064 = vpop.permute.xlu0 %2063
    %v2066 = vmul.f32 %v2059, %v2051
    %v2067 = vmul.f32 %v2064, %v2054
    %v2068 = vadd.f32 %v2023, %v2066
    %v2069 = vadd.f32 %v2024, %v2067
    %s2070 = scalar_lea.vmem %s11, 48
    %v2071 = vld [vmem:[%s2070] sm:$0xff]
    %v2072 = vld [vmem:[%s2070 + $0x8] sm:$0xff]
    %s2073 = scalar_lea.vmem %s9, 96
    %v2074 = vld [vmem:[%s2073] sm:$0xff]
    %v2075 = vld [vmem:[%s2073 + $0x8] sm:$0xff]
    %v2076 = vld [vmem:[%s2073 + $0x10] sm:$0xff]
    %v2077 = vld [vmem:[%s2073 + $0x18] sm:$0xff]
    %2078 = vmatpush.msra.mxu0 0.0
    %2079 = vmatpush.msra.mxu0 0.0
    %2080 = vmatpush.msra.mxu0 0.0
    %2081 = vmatpush.msra.mxu0 0.0
    %2082 = vmatpush.msra.mxu0 0.0
    %2083 = vmatpush.msra.mxu0 0.0
    %2084 = vmatpush.msra.mxu0 0.0
    %2085 = vmatpush.msra.mxu0 0.0
    %2086 = vmatpush.msra.mxu0 0.0
    %2087 = vmatpush.msra.mxu0 0.0
    %2088 = vmatpush.msra.mxu0 0.0
    %2089 = vmatpush.msra.mxu0 0.0
    %2090 = vmatpush.msra.mxu0 %v2077
    %2091 = vmatpush.msra.mxu0 %v2076
    %2092 = vmatpush.msra.mxu0 %v2075
    %2093 = vmatpush.msra.mxu0 %v2074
    %2094 = vmatmul.f32.gmra.mxu0 %v1938
    %v2095 = vpop.f32.mrf.mxu0
    %v2096 = vadd.f32 0.0, %v2095
    %2097 = vmatmul.f32.gmra.mxu0 %v1941
    %v2098 = vpop.f32.mrf.mxu0
    %v2099 = vadd.f32 0.0, %v2098
    %2100 = vdwg.mxu0
    %2102 = vset.pattern.permute.xlu0 0
    %2103 = vperm.xlu0 %2102, %v2071
    %v2104 = vpop.permute.xlu0 %2103
    %2107 = vset.pattern.permute.xlu0 0
    %2108 = vperm.xlu0 %2107, %v2072
    %v2109 = vpop.permute.xlu0 %2108
    %v2111 = vmul.f32 %v2104, %v2096
    %v2112 = vmul.f32 %v2109, %v2099
    %v2113 = vadd.f32 %v2068, %v2111
    %v2114 = vadd.f32 %v2069, %v2112
    %s2115 = scalar_lea.vmem %s11, 64
    %v2116 = vld [vmem:[%s2115] sm:$0xff]
    %v2117 = vld [vmem:[%s2115 + $0x8] sm:$0xff]
    %s2118 = scalar_lea.vmem %s9, 128
    %v2119 = vld [vmem:[%s2118] sm:$0xff]
    %v2120 = vld [vmem:[%s2118 + $0x8] sm:$0xff]
    %v2121 = vld [vmem:[%s2118 + $0x10] sm:$0xff]
    %v2122 = vld [vmem:[%s2118 + $0x18] sm:$0xff]
    %2123 = vmatpush.msra.mxu0 0.0
    %2124 = vmatpush.msra.mxu0 0.0
    %2125 = vmatpush.msra.mxu0 0.0
    %2126 = vmatpush.msra.mxu0 0.0
    %2127 = vmatpush.msra.mxu0 0.0
    %2128 = vmatpush.msra.mxu0 0.0
    %2129 = vmatpush.msra.mxu0 0.0
    %2130 = vmatpush.msra.mxu0 0.0
    %2131 = vmatpush.msra.mxu0 0.0
    %2132 = vmatpush.msra.mxu0 0.0
    %2133 = vmatpush.msra.mxu0 0.0
    %2134 = vmatpush.msra.mxu0 0.0
    %2135 = vmatpush.msra.mxu0 %v2122
    %2136 = vmatpush.msra.mxu0 %v2121
    %2137 = vmatpush.msra.mxu0 %v2120
    %2138 = vmatpush.msra.mxu0 %v2119
    %2139 = vmatmul.f32.gmra.mxu0 %v1938
    %v2140 = vpop.f32.mrf.mxu0
    %v2141 = vadd.f32 0.0, %v2140
    %2142 = vmatmul.f32.gmra.mxu0 %v1941
    %v2143 = vpop.f32.mrf.mxu0
    %v2144 = vadd.f32 0.0, %v2143
    %2145 = vdwg.mxu0
    %2147 = vset.pattern.permute.xlu0 0
    %2148 = vperm.xlu0 %2147, %v2116
    %v2149 = vpop.permute.xlu0 %2148
    %2152 = vset.pattern.permute.xlu0 0
    %2153 = vperm.xlu0 %2152, %v2117
    %v2154 = vpop.permute.xlu0 %2153
    %v2156 = vmul.f32 %v2149, %v2141
    %v2157 = vmul.f32 %v2154, %v2144
    %v2158 = vadd.f32 %v2113, %v2156
    %v2159 = vadd.f32 %v2114, %v2157
    %s2160 = scalar_lea.vmem %s11, 80
    %v2161 = vld [vmem:[%s2160] sm:$0xff]
    %v2162 = vld [vmem:[%s2160 + $0x8] sm:$0xff]
    %s2163 = scalar_lea.vmem %s9, 160
    %v2164 = vld [vmem:[%s2163] sm:$0xff]
    %v2165 = vld [vmem:[%s2163 + $0x8] sm:$0xff]
    %v2166 = vld [vmem:[%s2163 + $0x10] sm:$0xff]
    %v2167 = vld [vmem:[%s2163 + $0x18] sm:$0xff]
    %2168 = vmatpush.msra.mxu0 0.0
    %2169 = vmatpush.msra.mxu0 0.0
    %2170 = vmatpush.msra.mxu0 0.0
    %2171 = vmatpush.msra.mxu0 0.0
    %2172 = vmatpush.msra.mxu0 0.0
    %2173 = vmatpush.msra.mxu0 0.0
    %2174 = vmatpush.msra.mxu0 0.0
    %2175 = vmatpush.msra.mxu0 0.0
    %2176 = vmatpush.msra.mxu0 0.0
    %2177 = vmatpush.msra.mxu0 0.0
    %2178 = vmatpush.msra.mxu0 0.0
    %2179 = vmatpush.msra.mxu0 0.0
    %2180 = vmatpush.msra.mxu0 %v2167
    %2181 = vmatpush.msra.mxu0 %v2166
    %2182 = vmatpush.msra.mxu0 %v2165
    %2183 = vmatpush.msra.mxu0 %v2164
    %2184 = vmatmul.f32.gmra.mxu0 %v1938
    %v2185 = vpop.f32.mrf.mxu0
    %v2186 = vadd.f32 0.0, %v2185
    %2187 = vmatmul.f32.gmra.mxu0 %v1941
    %v2188 = vpop.f32.mrf.mxu0
    %v2189 = vadd.f32 0.0, %v2188
    %2190 = vdwg.mxu0
    %2192 = vset.pattern.permute.xlu0 0
    %2193 = vperm.xlu0 %2192, %v2161
    %v2194 = vpop.permute.xlu0 %2193
    %2197 = vset.pattern.permute.xlu0 0
    %2198 = vperm.xlu0 %2197, %v2162
    %v2199 = vpop.permute.xlu0 %2198
    %v2201 = vmul.f32 %v2194, %v2186
    %v2202 = vmul.f32 %v2199, %v2189
    %v2203 = vadd.f32 %v2158, %v2201
    %v2204 = vadd.f32 %v2159, %v2202
    %s2205 = scalar_lea.vmem %s11, 96
    %v2206 = vld [vmem:[%s2205] sm:$0xff]
    %v2207 = vld [vmem:[%s2205 + $0x8] sm:$0xff]
    %s2208 = scalar_lea.vmem %s9, 192
    %v2209 = vld [vmem:[%s2208] sm:$0xff]
    %v2210 = vld [vmem:[%s2208 + $0x8] sm:$0xff]
    %v2211 = vld [vmem:[%s2208 + $0x10] sm:$0xff]
    %v2212 = vld [vmem:[%s2208 + $0x18] sm:$0xff]
    %2213 = vmatpush.msra.mxu0 0.0
    %2214 = vmatpush.msra.mxu0 0.0
    %2215 = vmatpush.msra.mxu0 0.0
    %2216 = vmatpush.msra.mxu0 0.0
    %2217 = vmatpush.msra.mxu0 0.0
    %2218 = vmatpush.msra.mxu0 0.0
    %2219 = vmatpush.msra.mxu0 0.0
    %2220 = vmatpush.msra.mxu0 0.0
    %2221 = vmatpush.msra.mxu0 0.0
    %2222 = vmatpush.msra.mxu0 0.0
    %2223 = vmatpush.msra.mxu0 0.0
    %2224 = vmatpush.msra.mxu0 0.0
    %2225 = vmatpush.msra.mxu0 %v2212
    %2226 = vmatpush.msra.mxu0 %v2211
    %2227 = vmatpush.msra.mxu0 %v2210
    %2228 = vmatpush.msra.mxu0 %v2209
    %2229 = vmatmul.f32.gmra.mxu0 %v1938
    %v2230 = vpop.f32.mrf.mxu0
    %v2231 = vadd.f32 0.0, %v2230
    %2232 = vmatmul.f32.gmra.mxu0 %v1941
    %v2233 = vpop.f32.mrf.mxu0
    %v2234 = vadd.f32 0.0, %v2233
    %2235 = vdwg.mxu0
    %2237 = vset.pattern.permute.xlu0 0
    %2238 = vperm.xlu0 %2237, %v2206
    %v2239 = vpop.permute.xlu0 %2238
    %2242 = vset.pattern.permute.xlu0 0
    %2243 = vperm.xlu0 %2242, %v2207
    %v2244 = vpop.permute.xlu0 %2243
    %v2246 = vmul.f32 %v2239, %v2231
    %v2247 = vmul.f32 %v2244, %v2234
    %v2248 = vadd.f32 %v2203, %v2246
    %v2249 = vadd.f32 %v2204, %v2247
    %s2250 = scalar_lea.vmem %s11, 112
    %v2251 = vld [vmem:[%s2250] sm:$0xff]
    %v2252 = vld [vmem:[%s2250 + $0x8] sm:$0xff]
    %s2253 = scalar_lea.vmem %s9, 224
    %v2254 = vld [vmem:[%s2253] sm:$0xff]
    %v2255 = vld [vmem:[%s2253 + $0x8] sm:$0xff]
    %v2256 = vld [vmem:[%s2253 + $0x10] sm:$0xff]
    %v2257 = vld [vmem:[%s2253 + $0x18] sm:$0xff]
    %2258 = vmatpush.msra.mxu0 0.0
    %2259 = vmatpush.msra.mxu0 0.0
    %2260 = vmatpush.msra.mxu0 0.0
    %2261 = vmatpush.msra.mxu0 0.0
    %2262 = vmatpush.msra.mxu0 0.0
    %2263 = vmatpush.msra.mxu0 0.0
    %2264 = vmatpush.msra.mxu0 0.0
    %2265 = vmatpush.msra.mxu0 0.0
    %2266 = vmatpush.msra.mxu0 0.0
    %2267 = vmatpush.msra.mxu0 0.0
    %2268 = vmatpush.msra.mxu0 0.0
    %2269 = vmatpush.msra.mxu0 0.0
    %2270 = vmatpush.msra.mxu0 %v2257
    %2271 = vmatpush.msra.mxu0 %v2256
    %2272 = vmatpush.msra.mxu0 %v2255
    %2273 = vmatpush.msra.mxu0 %v2254
    %2274 = vmatmul.f32.gmra.mxu0 %v1938
    %v2275 = vpop.f32.mrf.mxu0
    %v2276 = vadd.f32 0.0, %v2275
    %2277 = vmatmul.f32.gmra.mxu0 %v1941
    %v2278 = vpop.f32.mrf.mxu0
    %v2279 = vadd.f32 0.0, %v2278
    %2280 = vdwg.mxu0
    %2282 = vset.pattern.permute.xlu0 0
    %2283 = vperm.xlu0 %2282, %v2251
    %v2284 = vpop.permute.xlu0 %2283
    %2287 = vset.pattern.permute.xlu0 0
    %2288 = vperm.xlu0 %2287, %v2252
    %v2289 = vpop.permute.xlu0 %2288
    %v2291 = vmul.f32 %v2284, %v2276
    %v2292 = vmul.f32 %v2289, %v2279
    %v2293 = vadd.f32 %v2248, %v2291
    %v2294 = vadd.f32 %v2249, %v2292
    %v2295 = vld [vmem:[%s12] sm:$0x3]
    %v2296 = vld [vmem:[%s10] sm:$0x1]
    %v2298 = vperm.slane %v2296, 0
    %vm2300 = vcmask 130048
    %v2302 = vsel %vm2300, %v2295, 0
    %2304 = vmatpush.msra.mxu0 0.0
    %2305 = vmatpush.msra.mxu0 0.0
    %2306 = vmatpush.msra.mxu0 0.0
    %2307 = vmatpush.msra.mxu0 0.0
    %2308 = vmatpush.msra.mxu0 0.0
    %2309 = vmatpush.msra.mxu0 0.0
    %2310 = vmatpush.msra.mxu0 0.0
    %2311 = vmatpush.msra.mxu0 0.0
    %2312 = vmatpush.msra.mxu0 0.0
    %2313 = vmatpush.msra.mxu0 0.0
    %2314 = vmatpush.msra.mxu0 0.0
    %2315 = vmatpush.msra.mxu0 0.0
    %2316 = vmatpush.msra.mxu0 0.0
    %2317 = vmatpush.msra.mxu0 0.0
    %2318 = vmatpush.msra.mxu0 %v2294
    %2319 = vmatpush.msra.mxu0 %v2293
    %2320 = vmatmul.f32.gmra.mxu0 %v2302
    %v2321 = vpop.f32.mrf.mxu0
    %v2322 = vadd.f32 %v2298, %v2321
    %2323 = vdwg.mxu0
    %vm2324 = vcmask 33792
    %2325 = vst.msk [vmem:[#allocation2] sm:$0x3] %vm2324, %v2322
    // Predicated region
    $region54: #{_lambda_.1} parent=1 // pred_check
      _
    $region55: #{_lambda_.1} parent=1 // pred_check_branch
      %2327 = sbr.rel (0) target = $region57
    $region56: #{_lambda_.1} parent=1 // pred_region
      %2329 = vsyncadd [#allocation3], 0
      %s2331 = sshll.u32 [#allocation2], 4
      %s2332 = int_to_ptr.vmem [resolvable:$true] %s2331
      %s2333 = sshll.u32 %s13, 4
      %s2334 = int_to_ptr.hbm [resolvable:$true] %s2333
      %2336 = dma.vmem_to_hbm [thread:$0]  %s2332, 32, %s2334, [#allocation3]
    $region57: #{_lambda_.1} parent=1 // pred_fallthru
      _
    // Predicated region
    $region58: #{_lambda_.1} parent=1 // pred_check
      _
    $region59: #{_lambda_.1} parent=1 // pred_check_branch
      %2338 = sbr.rel (0) target = $region61
    $region60: #{_lambda_.1} parent=1 // pred_region
      %2340 = dma.done [#allocation3], 32
    $region61: #{_lambda_.1} parent=1 // pred_fallthru
      _
    %2341 = vsyncpa [#allocation3], 1

</llo_original>
